<compile_context>
chip_gen: v7x
topology: tpu7x:2x2x1
jax: 0.10.0
libtpu: 0.0.40
codegen_flags: <defaults>
</compile_context>

<pallas_src>
import functools

import jax
import jax.numpy as jnp
from jax.experimental import pallas as pl
from jax.experimental.pallas import tpu as pltpu


def _attention_block_kernel(x_ref,
                            ln1_w_ref, ln1_b_ref,
                            wqkv_ref, bqkv_ref,
                            wproj_ref, bproj_ref,
                            ln2_w_ref, ln2_b_ref,
                            w1_ref, b1_ref,
                            w2_ref, b2_ref,
                            o_ref,
                            attn_scratch,
                            *, block_batch, seq_len, num_heads, head_dim):
    """One block of Bb batch elements (Bb*T rows) per grid step."""
    f32 = jnp.float32
    bf16 = jnp.bfloat16
    eps = f32(1e-5)
    C = num_heads * head_dim

    x = x_ref[...].astype(f32)                                  # (rows, C)

    # ---------------- LayerNorm 1 (one-pass stats) ----------------
    mean = jnp.mean(x, axis=-1, keepdims=True)
    meansq = jnp.mean(x * x, axis=-1, keepdims=True)
    var = meansq - mean * mean
    h = (x - mean) * jax.lax.rsqrt(var + eps)
    h = h * ln1_w_ref[...] + ln1_b_ref[...]
    h_bf = h.astype(bf16)

    # ---------------- fused QKV (single weight push) ----------------
    # Column layout: [q heads | k heads | v heads]; softmax scale is already
    # folded into the q columns of wqkv / bqkv by the wrapper.
    qkv = jnp.dot(h_bf, wqkv_ref[...], preferred_element_type=f32) + bqkv_ref[...]
    qkv_bf = qkv.astype(bf16)                                   # (rows, 3C)

    # ---------------- per (batch-in-block, head) attention ----------------
    for b in range(block_batch):                                # small static loops
        r0 = b * seq_len
        for hd in range(num_heads):
            c0 = hd * head_dim
            q = qkv_bf[r0:r0 + seq_len, c0:c0 + head_dim]               # (T, Dh)
            k = qkv_bf[r0:r0 + seq_len, C + c0:C + c0 + head_dim]
            v = qkv_bf[r0:r0 + seq_len, 2 * C + c0:2 * C + c0 + head_dim]

            # scores: contract the Dh axis of both operands (no explicit k.T)
            s = jax.lax.dot_general(q, k, (((1,), (1,)), ((), ())),
                                    preferred_element_type=f32)         # (T, T)
            s = s - jnp.max(s, axis=-1, keepdims=True)
            p = jnp.exp(s)
            denom = jnp.sum(p, axis=-1, keepdims=True)
            o_h = jnp.dot(p.astype(bf16), v, preferred_element_type=f32)  # (T, Dh)
            # deferred softmax normalization (T*Dh multiplies, EUP reciprocal)
            o_h = o_h * pl.reciprocal(denom, approx=True)
            attn_scratch[r0:r0 + seq_len, c0:c0 + head_dim] = o_h.astype(bf16)

    # ---------------- output projection + residual 1 ----------------
    x1 = x + jnp.dot(attn_scratch[...], wproj_ref[...],
                     preferred_element_type=f32) + bproj_ref[...]

    # ---------------- LayerNorm 2 (one-pass stats) ----------------
    mean2 = jnp.mean(x1, axis=-1, keepdims=True)
    meansq2 = jnp.mean(x1 * x1, axis=-1, keepdims=True)
    var2 = meansq2 - mean2 * mean2
    h2 = (x1 - mean2) * jax.lax.rsqrt(var2 + eps)
    h2 = h2 * ln2_w_ref[...] + ln2_b_ref[...]

    # ---------------- MLP ----------------
    z = jnp.dot(h2.astype(bf16), w1_ref[...], preferred_element_type=f32) + b1_ref[...]
    inv_sqrt2 = f32(0.7071067811865476)
    z = 0.5 * z * (1.0 + jax.lax.erf(z * inv_sqrt2))            # exact GELU (PyTorch default)
    z = jnp.dot(z.astype(bf16), w2_ref[...], preferred_element_type=f32) + b2_ref[...]

    o_ref[...] = (x1 + z).astype(o_ref.dtype)                   # residual 2


def _choose_block_batch(B, T, rows_target=256, min_grid=2):
    """Largest divisor Bb of B with Bb*T <= rows_target, keeping >= min_grid steps."""
    divisors = [d for d in range(1, B + 1) if B % d == 0]
    candidates = sorted(d for d in divisors if d * T <= rows_target) or [1]
    bb = candidates[-1]
    while B // bb < min_grid and len(candidates) > 1:
        candidates.pop()
        bb = candidates[-1]
    return bb


def _prep_kernel_weights(params, C, scale):
    """Cast matmul weights to bf16, keep LN params / biases f32 (1, N), and fold
    the softmax scale into the q columns of the fused QKV weight & bias."""
    f32, bf16 = jnp.float32, jnp.bfloat16
    wqkv = params["wqkv"].astype(f32)                           # (C, 3C)
    bqkv = params["bqkv"].reshape(1, -1).astype(f32)            # (1, 3C)
    q_scale = jnp.concatenate(
        [jnp.full((1, C), scale, f32), jnp.ones((1, 2 * C), f32)], axis=1)
    wqkv = (wqkv * q_scale).astype(bf16)
    bqkv = bqkv * q_scale
    hidden = params["w1"].shape[1]
    return [
        params["ln1_w"].reshape(1, C).astype(f32),
        params["ln1_b"].reshape(1, C).astype(f32),
        wqkv, bqkv,
        params["wproj"].astype(bf16),
        params["bproj"].reshape(1, C).astype(f32),
        params["ln2_w"].reshape(1, C).astype(f32),
        params["ln2_b"].reshape(1, C).astype(f32),
        params["w1"].astype(bf16),
        params["b1"].reshape(1, hidden).astype(f32),
        params["w2"].astype(bf16),
        params["b2"].reshape(1, C).astype(f32),
    ]


def attention_block(x, params, *, head_channels, temp=1.0):
    B, T, C = x.shape
    assert C % head_channels == 0, "channels must be divisible by head_channels"
    assert T % 8 == 0, "demo assumes seq len multiple of 8 (sublane tiling)"
    num_heads = C // head_channels
    scale = (head_channels ** -0.5) / temp      # == sqrt_scale**2 / temp in the module
    hidden = params["w1"].shape[1]

    bb = _choose_block_batch(B, T)
    rows = bb * T

    weight_args = _prep_kernel_weights(params, C, scale)

    # Batch rows are flattened outside the kernel so every matmul sees M = rows.
    x_flat = x.reshape(B * T, C)

    # Grid-invariant weights: whole-array, resident in VMEM once (single-buffered).
    weight_specs = [pl.BlockSpec(memory_space=pltpu.MemorySpace.VMEM)
                    for _ in weight_args]
    in_specs = [pl.BlockSpec((rows, C), lambda i: (i, 0))] + weight_specs
    out_specs = pl.BlockSpec((rows, C), lambda i: (i, 0))

    # VMEM budget from the actual buffers, clamped per generation with headroom.
    weight_bytes = sum(int(a.size) * a.dtype.itemsize for a in weight_args)  # single-buffered
    io_bytes = 2 * 2 * rows * C * x.dtype.itemsize        # double-buffered x & out blocks
    scratch_bytes = rows * C * 2                          # bf16 attention scratch
    interm_bytes = 4 * rows * (3 * C + hidden + 6 * C) + 4 * num_heads * T * T
    est = weight_bytes + io_bytes + scratch_bytes + interm_bytes
    try:
        vmem_cap = int(pltpu.get_tpu_info().vmem_capacity_bytes)
    except Exception:  # pragma: no cover - fall back to the most conservative cap
        vmem_cap = 64 * 1024 * 1024
    ceiling = int(vmem_cap * 0.85)                        # leave Mosaic scratch headroom
    vmem_limit = int(min(max(2 * est, 32 * 1024 * 1024), ceiling))

    kernel = functools.partial(_attention_block_kernel,
                               block_batch=bb, seq_len=T,
                               num_heads=num_heads, head_dim=head_channels)

    out_flat = pl.pallas_call(
        kernel,
        out_shape=jax.ShapeDtypeStruct((B * T, C), x.dtype),
        grid=(B // bb,),
        in_specs=in_specs,
        out_specs=out_specs,
        scratch_shapes=[pltpu.VMEM((rows, C), jnp.bfloat16)],
        compiler_params=pltpu.CompilerParams(
            dimension_semantics=("parallel",),
            vmem_limit_bytes=vmem_limit),
    )(x_flat, *weight_args)
    return out_flat.reshape(B, T, C)


def init_params(key, channels, expansion=4):
    """Deterministic synthetic parameters matching the module's shapes.
    Linear weights stored pre-transposed as (in, out); 1-D vectors as (1, N)."""
    hidden = channels * expansion
    ks = jax.random.split(key, 6)
    s = 0.02
    return {
        "ln1_w": jnp.ones((1, channels), jnp.float32),
        "ln1_b": jnp.zeros((1, channels), jnp.float32),
        "wqkv": s * jax.random.normal(ks[0], (channels, 3 * channels), jnp.float32),
        "bqkv": s * jax.random.normal(ks[1], (1, 3 * channels), jnp.float32),
        "wproj": s * jax.random.normal(ks[2], (channels, channels), jnp.float32),
        "bproj": s * jax.random.normal(ks[3], (1, channels), jnp.float32),
        "ln2_w": jnp.ones((1, channels), jnp.float32),
        "ln2_b": jnp.zeros((1, channels), jnp.float32),
        "w1": s * jax.random.normal(ks[4], (channels, hidden), jnp.float32),
        "b1": jnp.zeros((1, hidden), jnp.float32),
        "w2": s * jax.random.normal(ks[5], (hidden, channels), jnp.float32),
        "b2": jnp.zeros((1, channels), jnp.float32),
    }


def reference(x, params, head_channels, temp=1.0):
    """Pure-JAX f32 reference mirroring AttentionBlock.forward (GSJmode='J', no mask)."""
    B, T, C = x.shape
    H = C // head_channels

    def ln(v, w, b):
        mu = v.mean(-1, keepdims=True)
        var = ((v - mu) ** 2).mean(-1, keepdims=True)
        return (v - mu) / jnp.sqrt(var + 1e-5) * w + b

    h = ln(x, params["ln1_w"][0], params["ln1_b"][0])
    qkv = h @ params["wqkv"] + params["bqkv"][0]
    q, k, v = jnp.split(qkv, 3, axis=-1)
    q = q.reshape(B, T, H, head_channels).transpose(0, 2, 1, 3)
    k = k.reshape(B, T, H, head_channels).transpose(0, 2, 1, 3)
    v = v.reshape(B, T, H, head_channels).transpose(0, 2, 1, 3)
    s = jnp.einsum("bhmd,bhnd->bhmn", q, k) * ((head_channels ** -0.5) / temp)
    p = jax.nn.softmax(s, axis=-1)
    o = jnp.einsum("bhmn,bhnd->bhmd", p, v).transpose(0, 2, 1, 3).reshape(B, T, C)
    x1 = x + o @ params["wproj"] + params["bproj"][0]
    h2 = ln(x1, params["ln2_w"][0], params["ln2_b"][0])
    z = jax.nn.gelu(h2 @ params["w1"] + params["b1"][0], approximate=False)
    return x1 + z @ params["w2"] + params["b2"][0]


if __name__ == "__main__":
    # Small but lane-dense / tile-aligned shapes: C = 128 (one lane tile),
    # head_channels = 64 -> 2 heads, expansion = 4 -> hidden = 512.
    # B = 16, T = 16 so the kernel batches Bb = 8 elements per step
    # (128 MXU rows) across 2 grid steps (keeps both v7x TensorCores busy).
    B, T, C = 16, 16, 128
    head_channels = 64

    key = jax.random.PRNGKey(0)
    kx, kp = jax.random.split(key)
    x = jax.random.normal(kx, (B, T, C), jnp.float32)
    params = init_params(kp, C, expansion=4)

    out = attention_block(x, params, head_channels=head_channels)
    out = jax.block_until_ready(out)

    ref = reference(x, params, head_channels)
    assert out.shape == (B, T, C)
    # bf16 matmul operands + approximate reciprocal -> relaxed (but still tight) tolerance
    assert jnp.allclose(out, ref, rtol=2e-2, atol=2e-2), "mismatch vs JAX reference"

    print("KERNEL_OK")
</pallas_src>

<mosaic_0001>
module attributes {stable_mosaic.version = 11 : i64} {
  func.func @_attention_block_kernel(%arg0: i32, %arg1: memref<128x128xf32, #tpu.memory_space<vmem>>, %arg2: memref<1x128xf32, #tpu.memory_space<vmem>>, %arg3: memref<1x128xf32, #tpu.memory_space<vmem>>, %arg4: memref<128x384xbf16, #tpu.memory_space<vmem>>, %arg5: memref<1x384xf32, #tpu.memory_space<vmem>>, %arg6: memref<128x128xbf16, #tpu.memory_space<vmem>>, %arg7: memref<1x128xf32, #tpu.memory_space<vmem>>, %arg8: memref<1x128xf32, #tpu.memory_space<vmem>>, %arg9: memref<1x128xf32, #tpu.memory_space<vmem>>, %arg10: memref<128x512xbf16, #tpu.memory_space<vmem>>, %arg11: memref<1x512xf32, #tpu.memory_space<vmem>>, %arg12: memref<512x128xbf16, #tpu.memory_space<vmem>>, %arg13: memref<1x128xf32, #tpu.memory_space<vmem>>, %arg14: memref<128x128xf32, #tpu.memory_space<vmem>>, %arg15: memref<128x128xbf16, #tpu.memory_space<vmem>>) attributes {dimension_semantics = [#tpu.dimension_semantics<parallel>], iteration_bounds = array<i64: 2>, scalar_prefetch = 0 : i64, scratch_operands = 1 : i64, tpu.core_type = #tpu.core_type<tc>, window_params = [{transform_indices = @transform_0, window_bounds = array<i64: 128, 128>}, {pipeline_mode = #tpu.pipeline_mode<synchronous>, transform_indices = @transform_1, window_bounds = array<i64: 1, 128>}, {pipeline_mode = #tpu.pipeline_mode<synchronous>, transform_indices = @transform_2, window_bounds = array<i64: 1, 128>}, {pipeline_mode = #tpu.pipeline_mode<synchronous>, transform_indices = @transform_3, window_bounds = array<i64: 128, 384>}, {pipeline_mode = #tpu.pipeline_mode<synchronous>, transform_indices = @transform_4, window_bounds = array<i64: 1, 384>}, {pipeline_mode = #tpu.pipeline_mode<synchronous>, transform_indices = @transform_5, window_bounds = array<i64: 128, 128>}, {pipeline_mode = #tpu.pipeline_mode<synchronous>, transform_indices = @transform_6, window_bounds = array<i64: 1, 128>}, {pipeline_mode = #tpu.pipeline_mode<synchronous>, transform_indices = @transform_7, window_bounds = array<i64: 1, 128>}, {pipeline_mode = #tpu.pipeline_mode<synchronous>, transform_indices = @transform_8, window_bounds = array<i64: 1, 128>}, {pipeline_mode = #tpu.pipeline_mode<synchronous>, transform_indices = @transform_9, window_bounds = array<i64: 128, 512>}, {pipeline_mode = #tpu.pipeline_mode<synchronous>, transform_indices = @transform_10, window_bounds = array<i64: 1, 512>}, {pipeline_mode = #tpu.pipeline_mode<synchronous>, transform_indices = @transform_11, window_bounds = array<i64: 512, 128>}, {pipeline_mode = #tpu.pipeline_mode<synchronous>, transform_indices = @transform_12, window_bounds = array<i64: 1, 128>}, {transform_indices = @transform_13, window_bounds = array<i64: 128, 128>}]} {
    %c0 = arith.constant 0 : index
    %c0_0 = arith.constant 0 : index
    %0 = vector.load %arg1[%c0, %c0_0] : memref<128x128xf32, #tpu.memory_space<vmem>>, vector<128x128xf32>
    %cst = arith.constant dense<0.000000e+00> : vector<128xf32>
    %1 = vector.multi_reduction <add>, %0, %cst [1] : vector<128x128xf32> to vector<128xf32>
    %2 = vector.shape_cast %1 : vector<128xf32> to vector<128x1xf32>
    %cst_1 = arith.constant 1.280000e+02 : f32
    %3 = vector.broadcast %cst_1 : f32 to vector<128x1xf32>
    %4 = arith.divf %2, %3 : vector<128x1xf32>
    %5 = arith.mulf %0, %0 : vector<128x128xf32>
    %cst_2 = arith.constant dense<0.000000e+00> : vector<128xf32>
    %6 = vector.multi_reduction <add>, %5, %cst_2 [1] : vector<128x128xf32> to vector<128xf32>
    %7 = vector.shape_cast %6 : vector<128xf32> to vector<128x1xf32>
    %cst_3 = arith.constant 1.280000e+02 : f32
    %8 = vector.broadcast %cst_3 : f32 to vector<128x1xf32>
    %9 = arith.divf %7, %8 : vector<128x1xf32>
    %10 = arith.mulf %4, %4 : vector<128x1xf32>
    %11 = arith.subf %9, %10 : vector<128x1xf32>
    %12 = vector.broadcast %4 : vector<128x1xf32> to vector<128x128xf32>
    %13 = arith.subf %0, %12 : vector<128x128xf32>
    %cst_4 = arith.constant 9.99999974E-6 : f32
    %14 = vector.broadcast %cst_4 : f32 to vector<128x1xf32>
    %15 = arith.addf %11, %14 : vector<128x1xf32>
    %16 = math.rsqrt %15 : vector<128x1xf32>
    %17 = vector.broadcast %16 : vector<128x1xf32> to vector<128x128xf32>
    %18 = arith.mulf %13, %17 : vector<128x128xf32>
    %c0_5 = arith.constant 0 : index
    %c0_6 = arith.constant 0 : index
    %19 = vector.load %arg2[%c0_5, %c0_6] : memref<1x128xf32, #tpu.memory_space<vmem>>, vector<1x128xf32>
    %20 = vector.broadcast %19 : vector<1x128xf32> to vector<128x128xf32>
    %21 = arith.mulf %18, %20 : vector<128x128xf32>
    %c0_7 = arith.constant 0 : index
    %c0_8 = arith.constant 0 : index
    %22 = vector.load %arg3[%c0_7, %c0_8] : memref<1x128xf32, #tpu.memory_space<vmem>>, vector<1x128xf32>
    %23 = vector.broadcast %22 : vector<1x128xf32> to vector<128x128xf32>
    %24 = arith.addf %21, %23 : vector<128x128xf32>
    %25 = arith.truncf %24 : vector<128x128xf32> to vector<128x128xbf16>
    %c0_9 = arith.constant 0 : index
    %c0_10 = arith.constant 0 : index
    %26 = vector.load %arg4[%c0_9, %c0_10] : memref<128x384xbf16, #tpu.memory_space<vmem>>, vector<128x384xbf16>
    %cst_11 = arith.constant dense<0.000000e+00> : vector<128x384xf32>
    %27 = tpu.matmul %25, %26, %cst_11 {dimension_numbers = #tpu.dot_dimension_numbers<[1], [0], [0], [1], [0, 0, 1, 1], [], []>} : vector<128x128xbf16>, vector<128x384xbf16>, vector<128x384xf32> -> vector<128x384xf32>
    %c0_12 = arith.constant 0 : index
    %c0_13 = arith.constant 0 : index
    %28 = vector.load %arg5[%c0_12, %c0_13] : memref<1x384xf32, #tpu.memory_space<vmem>>, vector<1x384xf32>
    %29 = vector.broadcast %28 : vector<1x384xf32> to vector<128x384xf32>
    %30 = arith.addf %27, %29 : vector<128x384xf32>
    %31 = arith.truncf %30 : vector<128x384xf32> to vector<128x384xbf16>
    %32 = vector.extract_strided_slice %31 {offsets = [0, 0], sizes = [16, 64], strides = [1, 1]} : vector<128x384xbf16> to vector<16x64xbf16>
    %33 = vector.extract_strided_slice %31 {offsets = [0, 128], sizes = [16, 64], strides = [1, 1]} : vector<128x384xbf16> to vector<16x64xbf16>
    %34 = vector.extract_strided_slice %31 {offsets = [0, 256], sizes = [16, 64], strides = [1, 1]} : vector<128x384xbf16> to vector<16x64xbf16>
    %cst_14 = arith.constant dense<0.000000e+00> : vector<16x16xf32>
    %35 = tpu.matmul %32, %33, %cst_14 {dimension_numbers = #tpu.dot_dimension_numbers<[1], [1], [0], [0], [0, 0, 1, 0], [], []>} : vector<16x64xbf16>, vector<16x64xbf16>, vector<16x16xf32> -> vector<16x16xf32>
    %cst_15 = arith.constant dense<0xFF800000> : vector<16xf32>
    %36 = vector.multi_reduction <maximumf>, %35, %cst_15 [1] : vector<16x16xf32> to vector<16xf32>
    %37 = vector.shape_cast %36 : vector<16xf32> to vector<16x1xf32>
    %38 = vector.broadcast %37 : vector<16x1xf32> to vector<16x16xf32>
    %39 = arith.subf %35, %38 : vector<16x16xf32>
    %40 = math.exp %39 : vector<16x16xf32>
    %cst_16 = arith.constant dense<0.000000e+00> : vector<16xf32>
    %41 = vector.multi_reduction <add>, %40, %cst_16 [1] : vector<16x16xf32> to vector<16xf32>
    %42 = vector.shape_cast %41 : vector<16xf32> to vector<16x1xf32>
    %43 = arith.truncf %40 : vector<16x16xf32> to vector<16x16xbf16>
    %cst_17 = arith.constant dense<0.000000e+00> : vector<16x64xf32>
    %44 = tpu.matmul %43, %34, %cst_17 {dimension_numbers = #tpu.dot_dimension_numbers<[1], [0], [0], [1], [0, 0, 1, 1], [], []>} : vector<16x16xbf16>, vector<16x64xbf16>, vector<16x64xf32> -> vector<16x64xf32>
    %45 = tpu.reciprocal %42 {approx = true} : vector<16x1xf32> -> vector<16x1xf32>
    %46 = vector.broadcast %45 : vector<16x1xf32> to vector<16x64xf32>
    %47 = arith.mulf %44, %46 : vector<16x64xf32>
    %48 = arith.truncf %47 : vector<16x64xf32> to vector<16x64xbf16>
    %c0_18 = arith.constant 0 : index
    %c0_19 = arith.constant 0 : index
    %49 = vector.load %arg15[%c0_18, %c0_19] : memref<128x128xbf16, #tpu.memory_space<vmem>>, vector<16x64xbf16>
    tpu.vector_store %arg15[%c0_18, %c0_19], %48 {strides = array<i32>} : memref<128x128xbf16, #tpu.memory_space<vmem>>, vector<16x64xbf16>,
    %50 = vector.extract_strided_slice %31 {offsets = [0, 64], sizes = [16, 64], strides = [1, 1]} : vector<128x384xbf16> to vector<16x64xbf16>
    %51 = vector.extract_strided_slice %31 {offsets = [0, 192], sizes = [16, 64], strides = [1, 1]} : vector<128x384xbf16> to vector<16x64xbf16>
    %52 = vector.extract_strided_slice %31 {offsets = [0, 320], sizes = [16, 64], strides = [1, 1]} : vector<128x384xbf16> to vector<16x64xbf16>
    %cst_20 = arith.constant dense<0.000000e+00> : vector<16x16xf32>
    %53 = tpu.matmul %50, %51, %cst_20 {dimension_numbers = #tpu.dot_dimension_numbers<[1], [1], [0], [0], [0, 0, 1, 0], [], []>} : vector<16x64xbf16>, vector<16x64xbf16>, vector<16x16xf32> -> vector<16x16xf32>
    %cst_21 = arith.constant dense<0xFF800000> : vector<16xf32>
    %54 = vector.multi_reduction <maximumf>, %53, %cst_21 [1] : vector<16x16xf32> to vector<16xf32>
    %55 = vector.shape_cast %54 : vector<16xf32> to vector<16x1xf32>
    %56 = vector.broadcast %55 : vector<16x1xf32> to vector<16x16xf32>
    %57 = arith.subf %53, %56 : vector<16x16xf32>
    %58 = math.exp %57 : vector<16x16xf32>
    %cst_22 = arith.constant dense<0.000000e+00> : vector<16xf32>
    %59 = vector.multi_reduction <add>, %58, %cst_22 [1] : vector<16x16xf32> to vector<16xf32>
    %60 = vector.shape_cast %59 : vector<16xf32> to vector<16x1xf32>
    %61 = arith.truncf %58 : vector<16x16xf32> to vector<16x16xbf16>
    %cst_23 = arith.constant dense<0.000000e+00> : vector<16x64xf32>
    %62 = tpu.matmul %61, %52, %cst_23 {dimension_numbers = #tpu.dot_dimension_numbers<[1], [0], [0], [1], [0, 0, 1, 1], [], []>} : vector<16x16xbf16>, vector<16x64xbf16>, vector<16x64xf32> -> vector<16x64xf32>
    %63 = tpu.reciprocal %60 {approx = true} : vector<16x1xf32> -> vector<16x1xf32>
    %64 = vector.broadcast %63 : vector<16x1xf32> to vector<16x64xf32>
    %65 = arith.mulf %62, %64 : vector<16x64xf32>
    %66 = arith.truncf %65 : vector<16x64xf32> to vector<16x64xbf16>
    %c0_24 = arith.constant 0 : index
    %c64 = arith.constant 64 : index
    %67 = vector.load %arg15[%c0_24, %c64] : memref<128x128xbf16, #tpu.memory_space<vmem>>, vector<16x64xbf16>
    tpu.vector_store %arg15[%c0_24, %c64], %66 {strides = array<i32>} : memref<128x128xbf16, #tpu.memory_space<vmem>>, vector<16x64xbf16>,
    %68 = vector.extract_strided_slice %31 {offsets = [16, 0], sizes = [16, 64], strides = [1, 1]} : vector<128x384xbf16> to vector<16x64xbf16>
    %69 = vector.extract_strided_slice %31 {offsets = [16, 128], sizes = [16, 64], strides = [1, 1]} : vector<128x384xbf16> to vector<16x64xbf16>
    %70 = vector.extract_strided_slice %31 {offsets = [16, 256], sizes = [16, 64], strides = [1, 1]} : vector<128x384xbf16> to vector<16x64xbf16>
    %cst_25 = arith.constant dense<0.000000e+00> : vector<16x16xf32>
    %71 = tpu.matmul %68, %69, %cst_25 {dimension_numbers = #tpu.dot_dimension_numbers<[1], [1], [0], [0], [0, 0, 1, 0], [], []>} : vector<16x64xbf16>, vector<16x64xbf16>, vector<16x16xf32> -> vector<16x16xf32>
    %cst_26 = arith.constant dense<0xFF800000> : vector<16xf32>
    %72 = vector.multi_reduction <maximumf>, %71, %cst_26 [1] : vector<16x16xf32> to vector<16xf32>
    %73 = vector.shape_cast %72 : vector<16xf32> to vector<16x1xf32>
    %74 = vector.broadcast %73 : vector<16x1xf32> to vector<16x16xf32>
    %75 = arith.subf %71, %74 : vector<16x16xf32>
    %76 = math.exp %75 : vector<16x16xf32>
    %cst_27 = arith.constant dense<0.000000e+00> : vector<16xf32>
    %77 = vector.multi_reduction <add>, %76, %cst_27 [1] : vector<16x16xf32> to vector<16xf32>
    %78 = vector.shape_cast %77 : vector<16xf32> to vector<16x1xf32>
    %79 = arith.truncf %76 : vector<16x16xf32> to vector<16x16xbf16>
    %cst_28 = arith.constant dense<0.000000e+00> : vector<16x64xf32>
    %80 = tpu.matmul %79, %70, %cst_28 {dimension_numbers = #tpu.dot_dimension_numbers<[1], [0], [0], [1], [0, 0, 1, 1], [], []>} : vector<16x16xbf16>, vector<16x64xbf16>, vector<16x64xf32> -> vector<16x64xf32>
    %81 = tpu.reciprocal %78 {approx = true} : vector<16x1xf32> -> vector<16x1xf32>
    %82 = vector.broadcast %81 : vector<16x1xf32> to vector<16x64xf32>
    %83 = arith.mulf %80, %82 : vector<16x64xf32>
    %84 = arith.truncf %83 : vector<16x64xf32> to vector<16x64xbf16>
    %c16 = arith.constant 16 : index
    %c0_29 = arith.constant 0 : index
    %85 = vector.load %arg15[%c16, %c0_29] : memref<128x128xbf16, #tpu.memory_space<vmem>>, vector<16x64xbf16>
    tpu.vector_store %arg15[%c16, %c0_29], %84 {strides = array<i32>} : memref<128x128xbf16, #tpu.memory_space<vmem>>, vector<16x64xbf16>,
    %86 = vector.extract_strided_slice %31 {offsets = [16, 64], sizes = [16, 64], strides = [1, 1]} : vector<128x384xbf16> to vector<16x64xbf16>
    %87 = vector.extract_strided_slice %31 {offsets = [16, 192], sizes = [16, 64], strides = [1, 1]} : vector<128x384xbf16> to vector<16x64xbf16>
    %88 = vector.extract_strided_slice %31 {offsets = [16, 320], sizes = [16, 64], strides = [1, 1]} : vector<128x384xbf16> to vector<16x64xbf16>
    %cst_30 = arith.constant dense<0.000000e+00> : vector<16x16xf32>
    %89 = tpu.matmul %86, %87, %cst_30 {dimension_numbers = #tpu.dot_dimension_numbers<[1], [1], [0], [0], [0, 0, 1, 0], [], []>} : vector<16x64xbf16>, vector<16x64xbf16>, vector<16x16xf32> -> vector<16x16xf32>
    %cst_31 = arith.constant dense<0xFF800000> : vector<16xf32>
    %90 = vector.multi_reduction <maximumf>, %89, %cst_31 [1] : vector<16x16xf32> to vector<16xf32>
    %91 = vector.shape_cast %90 : vector<16xf32> to vector<16x1xf32>
    %92 = vector.broadcast %91 : vector<16x1xf32> to vector<16x16xf32>
    %93 = arith.subf %89, %92 : vector<16x16xf32>
    %94 = math.exp %93 : vector<16x16xf32>
    %cst_32 = arith.constant dense<0.000000e+00> : vector<16xf32>
    %95 = vector.multi_reduction <add>, %94, %cst_32 [1] : vector<16x16xf32> to vector<16xf32>
    %96 = vector.shape_cast %95 : vector<16xf32> to vector<16x1xf32>
    %97 = arith.truncf %94 : vector<16x16xf32> to vector<16x16xbf16>
    %cst_33 = arith.constant dense<0.000000e+00> : vector<16x64xf32>
    %98 = tpu.matmul %97, %88, %cst_33 {dimension_numbers = #tpu.dot_dimension_numbers<[1], [0], [0], [1], [0, 0, 1, 1], [], []>} : vector<16x16xbf16>, vector<16x64xbf16>, vector<16x64xf32> -> vector<16x64xf32>
    %99 = tpu.reciprocal %96 {approx = true} : vector<16x1xf32> -> vector<16x1xf32>
    %100 = vector.broadcast %99 : vector<16x1xf32> to vector<16x64xf32>
    %101 = arith.mulf %98, %100 : vector<16x64xf32>
    %102 = arith.truncf %101 : vector<16x64xf32> to vector<16x64xbf16>
    %c16_34 = arith.constant 16 : index
    %c64_35 = arith.constant 64 : index
    %103 = vector.load %arg15[%c16_34, %c64_35] : memref<128x128xbf16, #tpu.memory_space<vmem>>, vector<16x64xbf16>
    tpu.vector_store %arg15[%c16_34, %c64_35], %102 {strides = array<i32>} : memref<128x128xbf16, #tpu.memory_space<vmem>>, vector<16x64xbf16>,
    %104 = vector.extract_strided_slice %31 {offsets = [32, 0], sizes = [16, 64], strides = [1, 1]} : vector<128x384xbf16> to vector<16x64xbf16>
    %105 = vector.extract_strided_slice %31 {offsets = [32, 128], sizes = [16, 64], strides = [1, 1]} : vector<128x384xbf16> to vector<16x64xbf16>
    %106 = vector.extract_strided_slice %31 {offsets = [32, 256], sizes = [16, 64], strides = [1, 1]} : vector<128x384xbf16> to vector<16x64xbf16>
    %cst_36 = arith.constant dense<0.000000e+00> : vector<16x16xf32>
    %107 = tpu.matmul %104, %105, %cst_36 {dimension_numbers = #tpu.dot_dimension_numbers<[1], [1], [0], [0], [0, 0, 1, 0], [], []>} : vector<16x64xbf16>, vector<16x64xbf16>, vector<16x16xf32> -> vector<16x16xf32>
    %cst_37 = arith.constant dense<0xFF800000> : vector<16xf32>
    %108 = vector.multi_reduction <maximumf>, %107, %cst_37 [1] : vector<16x16xf32> to vector<16xf32>
    %109 = vector.shape_cast %108 : vector<16xf32> to vector<16x1xf32>
    %110 = vector.broadcast %109 : vector<16x1xf32> to vector<16x16xf32>
    %111 = arith.subf %107, %110 : vector<16x16xf32>
    %112 = math.exp %111 : vector<16x16xf32>
    %cst_38 = arith.constant dense<0.000000e+00> : vector<16xf32>
    %113 = vector.multi_reduction <add>, %112, %cst_38 [1] : vector<16x16xf32> to vector<16xf32>
    %114 = vector.shape_cast %113 : vector<16xf32> to vector<16x1xf32>
    %115 = arith.truncf %112 : vector<16x16xf32> to vector<16x16xbf16>
    %cst_39 = arith.constant dense<0.000000e+00> : vector<16x64xf32>
    %116 = tpu.matmul %115, %106, %cst_39 {dimension_numbers = #tpu.dot_dimension_numbers<[1], [0], [0], [1], [0, 0, 1, 1], [], []>} : vector<16x16xbf16>, vector<16x64xbf16>, vector<16x64xf32> -> vector<16x64xf32>
    %117 = tpu.reciprocal %114 {approx = true} : vector<16x1xf32> -> vector<16x1xf32>
    %118 = vector.broadcast %117 : vector<16x1xf32> to vector<16x64xf32>
    %119 = arith.mulf %116, %118 : vector<16x64xf32>
    %120 = arith.truncf %119 : vector<16x64xf32> to vector<16x64xbf16>
    %c32 = arith.constant 32 : index
    %c0_40 = arith.constant 0 : index
    %121 = vector.load %arg15[%c32, %c0_40] : memref<128x128xbf16, #tpu.memory_space<vmem>>, vector<16x64xbf16>
    tpu.vector_store %arg15[%c32, %c0_40], %120 {strides = array<i32>} : memref<128x128xbf16, #tpu.memory_space<vmem>>, vector<16x64xbf16>,
    %122 = vector.extract_strided_slice %31 {offsets = [32, 64], sizes = [16, 64], strides = [1, 1]} : vector<128x384xbf16> to vector<16x64xbf16>
    %123 = vector.extract_strided_slice %31 {offsets = [32, 192], sizes = [16, 64], strides = [1, 1]} : vector<128x384xbf16> to vector<16x64xbf16>
    %124 = vector.extract_strided_slice %31 {offsets = [32, 320], sizes = [16, 64], strides = [1, 1]} : vector<128x384xbf16> to vector<16x64xbf16>
    %cst_41 = arith.constant dense<0.000000e+00> : vector<16x16xf32>
    %125 = tpu.matmul %122, %123, %cst_41 {dimension_numbers = #tpu.dot_dimension_numbers<[1], [1], [0], [0], [0, 0, 1, 0], [], []>} : vector<16x64xbf16>, vector<16x64xbf16>, vector<16x16xf32> -> vector<16x16xf32>
    %cst_42 = arith.constant dense<0xFF800000> : vector<16xf32>
    %126 = vector.multi_reduction <maximumf>, %125, %cst_42 [1] : vector<16x16xf32> to vector<16xf32>
    %127 = vector.shape_cast %126 : vector<16xf32> to vector<16x1xf32>
    %128 = vector.broadcast %127 : vector<16x1xf32> to vector<16x16xf32>
    %129 = arith.subf %125, %128 : vector<16x16xf32>
    %130 = math.exp %129 : vector<16x16xf32>
    %cst_43 = arith.constant dense<0.000000e+00> : vector<16xf32>
    %131 = vector.multi_reduction <add>, %130, %cst_43 [1] : vector<16x16xf32> to vector<16xf32>
    %132 = vector.shape_cast %131 : vector<16xf32> to vector<16x1xf32>
    %133 = arith.truncf %130 : vector<16x16xf32> to vector<16x16xbf16>
    %cst_44 = arith.constant dense<0.000000e+00> : vector<16x64xf32>
    %134 = tpu.matmul %133, %124, %cst_44 {dimension_numbers = #tpu.dot_dimension_numbers<[1], [0], [0], [1], [0, 0, 1, 1], [], []>} : vector<16x16xbf16>, vector<16x64xbf16>, vector<16x64xf32> -> vector<16x64xf32>
    %135 = tpu.reciprocal %132 {approx = true} : vector<16x1xf32> -> vector<16x1xf32>
    %136 = vector.broadcast %135 : vector<16x1xf32> to vector<16x64xf32>
    %137 = arith.mulf %134, %136 : vector<16x64xf32>
    %138 = arith.truncf %137 : vector<16x64xf32> to vector<16x64xbf16>
    %c32_45 = arith.constant 32 : index
    %c64_46 = arith.constant 64 : index
    %139 = vector.load %arg15[%c32_45, %c64_46] : memref<128x128xbf16, #tpu.memory_space<vmem>>, vector<16x64xbf16>
    tpu.vector_store %arg15[%c32_45, %c64_46], %138 {strides = array<i32>} : memref<128x128xbf16, #tpu.memory_space<vmem>>, vector<16x64xbf16>,
    %140 = vector.extract_strided_slice %31 {offsets = [48, 0], sizes = [16, 64], strides = [1, 1]} : vector<128x384xbf16> to vector<16x64xbf16>
    %141 = vector.extract_strided_slice %31 {offsets = [48, 128], sizes = [16, 64], strides = [1, 1]} : vector<128x384xbf16> to vector<16x64xbf16>
    %142 = vector.extract_strided_slice %31 {offsets = [48, 256], sizes = [16, 64], strides = [1, 1]} : vector<128x384xbf16> to vector<16x64xbf16>
    %cst_47 = arith.constant dense<0.000000e+00> : vector<16x16xf32>
    %143 = tpu.matmul %140, %141, %cst_47 {dimension_numbers = #tpu.dot_dimension_numbers<[1], [1], [0], [0], [0, 0, 1, 0], [], []>} : vector<16x64xbf16>, vector<16x64xbf16>, vector<16x16xf32> -> vector<16x16xf32>
    %cst_48 = arith.constant dense<0xFF800000> : vector<16xf32>
    %144 = vector.multi_reduction <maximumf>, %143, %cst_48 [1] : vector<16x16xf32> to vector<16xf32>
    %145 = vector.shape_cast %144 : vector<16xf32> to vector<16x1xf32>
    %146 = vector.broadcast %145 : vector<16x1xf32> to vector<16x16xf32>
    %147 = arith.subf %143, %146 : vector<16x16xf32>
    %148 = math.exp %147 : vector<16x16xf32>
    %cst_49 = arith.constant dense<0.000000e+00> : vector<16xf32>
    %149 = vector.multi_reduction <add>, %148, %cst_49 [1] : vector<16x16xf32> to vector<16xf32>
    %150 = vector.shape_cast %149 : vector<16xf32> to vector<16x1xf32>
    %151 = arith.truncf %148 : vector<16x16xf32> to vector<16x16xbf16>
    %cst_50 = arith.constant dense<0.000000e+00> : vector<16x64xf32>
    %152 = tpu.matmul %151, %142, %cst_50 {dimension_numbers = #tpu.dot_dimension_numbers<[1], [0], [0], [1], [0, 0, 1, 1], [], []>} : vector<16x16xbf16>, vector<16x64xbf16>, vector<16x64xf32> -> vector<16x64xf32>
    %153 = tpu.reciprocal %150 {approx = true} : vector<16x1xf32> -> vector<16x1xf32>
    %154 = vector.broadcast %153 : vector<16x1xf32> to vector<16x64xf32>
    %155 = arith.mulf %152, %154 : vector<16x64xf32>
    %156 = arith.truncf %155 : vector<16x64xf32> to vector<16x64xbf16>
    %c48 = arith.constant 48 : index
    %c0_51 = arith.constant 0 : index
    %157 = vector.load %arg15[%c48, %c0_51] : memref<128x128xbf16, #tpu.memory_space<vmem>>, vector<16x64xbf16>
    tpu.vector_store %arg15[%c48, %c0_51], %156 {strides = array<i32>} : memref<128x128xbf16, #tpu.memory_space<vmem>>, vector<16x64xbf16>,
    %158 = vector.extract_strided_slice %31 {offsets = [48, 64], sizes = [16, 64], strides = [1, 1]} : vector<128x384xbf16> to vector<16x64xbf16>
    %159 = vector.extract_strided_slice %31 {offsets = [48, 192], sizes = [16, 64], strides = [1, 1]} : vector<128x384xbf16> to vector<16x64xbf16>
    %160 = vector.extract_strided_slice %31 {offsets = [48, 320], sizes = [16, 64], strides = [1, 1]} : vector<128x384xbf16> to vector<16x64xbf16>
    %cst_52 = arith.constant dense<0.000000e+00> : vector<16x16xf32>
    %161 = tpu.matmul %158, %159, %cst_52 {dimension_numbers = #tpu.dot_dimension_numbers<[1], [1], [0], [0], [0, 0, 1, 0], [], []>} : vector<16x64xbf16>, vector<16x64xbf16>, vector<16x16xf32> -> vector<16x16xf32>
    %cst_53 = arith.constant dense<0xFF800000> : vector<16xf32>
    %162 = vector.multi_reduction <maximumf>, %161, %cst_53 [1] : vector<16x16xf32> to vector<16xf32>
    %163 = vector.shape_cast %162 : vector<16xf32> to vector<16x1xf32>
    %164 = vector.broadcast %163 : vector<16x1xf32> to vector<16x16xf32>
    %165 = arith.subf %161, %164 : vector<16x16xf32>
    %166 = math.exp %165 : vector<16x16xf32>
    %cst_54 = arith.constant dense<0.000000e+00> : vector<16xf32>
    %167 = vector.multi_reduction <add>, %166, %cst_54 [1] : vector<16x16xf32> to vector<16xf32>
    %168 = vector.shape_cast %167 : vector<16xf32> to vector<16x1xf32>
    %169 = arith.truncf %166 : vector<16x16xf32> to vector<16x16xbf16>
    %cst_55 = arith.constant dense<0.000000e+00> : vector<16x64xf32>
    %170 = tpu.matmul %169, %160, %cst_55 {dimension_numbers = #tpu.dot_dimension_numbers<[1], [0], [0], [1], [0, 0, 1, 1], [], []>} : vector<16x16xbf16>, vector<16x64xbf16>, vector<16x64xf32> -> vector<16x64xf32>
    %171 = tpu.reciprocal %168 {approx = true} : vector<16x1xf32> -> vector<16x1xf32>
    %172 = vector.broadcast %171 : vector<16x1xf32> to vector<16x64xf32>
    %173 = arith.mulf %170, %172 : vector<16x64xf32>
    %174 = arith.truncf %173 : vector<16x64xf32> to vector<16x64xbf16>
    %c48_56 = arith.constant 48 : index
    %c64_57 = arith.constant 64 : index
    %175 = vector.load %arg15[%c48_56, %c64_57] : memref<128x128xbf16, #tpu.memory_space<vmem>>, vector<16x64xbf16>
    tpu.vector_store %arg15[%c48_56, %c64_57], %174 {strides = array<i32>} : memref<128x128xbf16, #tpu.memory_space<vmem>>, vector<16x64xbf16>,
    %176 = vector.extract_strided_slice %31 {offsets = [64, 0], sizes = [16, 64], strides = [1, 1]} : vector<128x384xbf16> to vector<16x64xbf16>
    %177 = vector.extract_strided_slice %31 {offsets = [64, 128], sizes = [16, 64], strides = [1, 1]} : vector<128x384xbf16> to vector<16x64xbf16>
    %178 = vector.extract_strided_slice %31 {offsets = [64, 256], sizes = [16, 64], strides = [1, 1]} : vector<128x384xbf16> to vector<16x64xbf16>
    %cst_58 = arith.constant dense<0.000000e+00> : vector<16x16xf32>
    %179 = tpu.matmul %176, %177, %cst_58 {dimension_numbers = #tpu.dot_dimension_numbers<[1], [1], [0], [0], [0, 0, 1, 0], [], []>} : vector<16x64xbf16>, vector<16x64xbf16>, vector<16x16xf32> -> vector<16x16xf32>
    %cst_59 = arith.constant dense<0xFF800000> : vector<16xf32>
    %180 = vector.multi_reduction <maximumf>, %179, %cst_59 [1] : vector<16x16xf32> to vector<16xf32>
    %181 = vector.shape_cast %180 : vector<16xf32> to vector<16x1xf32>
    %182 = vector.broadcast %181 : vector<16x1xf32> to vector<16x16xf32>
    %183 = arith.subf %179, %182 : vector<16x16xf32>
    %184 = math.exp %183 : vector<16x16xf32>
    %cst_60 = arith.constant dense<0.000000e+00> : vector<16xf32>
    %185 = vector.multi_reduction <add>, %184, %cst_60 [1] : vector<16x16xf32> to vector<16xf32>
    %186 = vector.shape_cast %185 : vector<16xf32> to vector<16x1xf32>
    %187 = arith.truncf %184 : vector<16x16xf32> to vector<16x16xbf16>
    %cst_61 = arith.constant dense<0.000000e+00> : vector<16x64xf32>
    %188 = tpu.matmul %187, %178, %cst_61 {dimension_numbers = #tpu.dot_dimension_numbers<[1], [0], [0], [1], [0, 0, 1, 1], [], []>} : vector<16x16xbf16>, vector<16x64xbf16>, vector<16x64xf32> -> vector<16x64xf32>
    %189 = tpu.reciprocal %186 {approx = true} : vector<16x1xf32> -> vector<16x1xf32>
    %190 = vector.broadcast %189 : vector<16x1xf32> to vector<16x64xf32>
    %191 = arith.mulf %188, %190 : vector<16x64xf32>
    %192 = arith.truncf %191 : vector<16x64xf32> to vector<16x64xbf16>
    %c64_62 = arith.constant 64 : index
    %c0_63 = arith.constant 0 : index
    %193 = vector.load %arg15[%c64_62, %c0_63] : memref<128x128xbf16, #tpu.memory_space<vmem>>, vector<16x64xbf16>
    tpu.vector_store %arg15[%c64_62, %c0_63], %192 {strides = array<i32>} : memref<128x128xbf16, #tpu.memory_space<vmem>>, vector<16x64xbf16>,
    %194 = vector.extract_strided_slice %31 {offsets = [64, 64], sizes = [16, 64], strides = [1, 1]} : vector<128x384xbf16> to vector<16x64xbf16>
    %195 = vector.extract_strided_slice %31 {offsets = [64, 192], sizes = [16, 64], strides = [1, 1]} : vector<128x384xbf16> to vector<16x64xbf16>
    %196 = vector.extract_strided_slice %31 {offsets = [64, 320], sizes = [16, 64], strides = [1, 1]} : vector<128x384xbf16> to vector<16x64xbf16>
    %cst_64 = arith.constant dense<0.000000e+00> : vector<16x16xf32>
    %197 = tpu.matmul %194, %195, %cst_64 {dimension_numbers = #tpu.dot_dimension_numbers<[1], [1], [0], [0], [0, 0, 1, 0], [], []>} : vector<16x64xbf16>, vector<16x64xbf16>, vector<16x16xf32> -> vector<16x16xf32>
    %cst_65 = arith.constant dense<0xFF800000> : vector<16xf32>
    %198 = vector.multi_reduction <maximumf>, %197, %cst_65 [1] : vector<16x16xf32> to vector<16xf32>
    %199 = vector.shape_cast %198 : vector<16xf32> to vector<16x1xf32>
    %200 = vector.broadcast %199 : vector<16x1xf32> to vector<16x16xf32>
    %201 = arith.subf %197, %200 : vector<16x16xf32>
    %202 = math.exp %201 : vector<16x16xf32>
    %cst_66 = arith.constant dense<0.000000e+00> : vector<16xf32>
    %203 = vector.multi_reduction <add>, %202, %cst_66 [1] : vector<16x16xf32> to vector<16xf32>
    %204 = vector.shape_cast %203 : vector<16xf32> to vector<16x1xf32>
    %205 = arith.truncf %202 : vector<16x16xf32> to vector<16x16xbf16>
    %cst_67 = arith.constant dense<0.000000e+00> : vector<16x64xf32>
    %206 = tpu.matmul %205, %196, %cst_67 {dimension_numbers = #tpu.dot_dimension_numbers<[1], [0], [0], [1], [0, 0, 1, 1], [], []>} : vector<16x16xbf16>, vector<16x64xbf16>, vector<16x64xf32> -> vector<16x64xf32>
    %207 = tpu.reciprocal %204 {approx = true} : vector<16x1xf32> -> vector<16x1xf32>
    %208 = vector.broadcast %207 : vector<16x1xf32> to vector<16x64xf32>
    %209 = arith.mulf %206, %208 : vector<16x64xf32>
    %210 = arith.truncf %209 : vector<16x64xf32> to vector<16x64xbf16>
    %c64_68 = arith.constant 64 : index
    %c64_69 = arith.constant 64 : index
    %211 = vector.load %arg15[%c64_68, %c64_69] : memref<128x128xbf16, #tpu.memory_space<vmem>>, vector<16x64xbf16>
    tpu.vector_store %arg15[%c64_68, %c64_69], %210 {strides = array<i32>} : memref<128x128xbf16, #tpu.memory_space<vmem>>, vector<16x64xbf16>,
    %212 = vector.extract_strided_slice %31 {offsets = [80, 0], sizes = [16, 64], strides = [1, 1]} : vector<128x384xbf16> to vector<16x64xbf16>
    %213 = vector.extract_strided_slice %31 {offsets = [80, 128], sizes = [16, 64], strides = [1, 1]} : vector<128x384xbf16> to vector<16x64xbf16>
    %214 = vector.extract_strided_slice %31 {offsets = [80, 256], sizes = [16, 64], strides = [1, 1]} : vector<128x384xbf16> to vector<16x64xbf16>
    %cst_70 = arith.constant dense<0.000000e+00> : vector<16x16xf32>
    %215 = tpu.matmul %212, %213, %cst_70 {dimension_numbers = #tpu.dot_dimension_numbers<[1], [1], [0], [0], [0, 0, 1, 0], [], []>} : vector<16x64xbf16>, vector<16x64xbf16>, vector<16x16xf32> -> vector<16x16xf32>
    %cst_71 = arith.constant dense<0xFF800000> : vector<16xf32>
    %216 = vector.multi_reduction <maximumf>, %215, %cst_71 [1] : vector<16x16xf32> to vector<16xf32>
    %217 = vector.shape_cast %216 : vector<16xf32> to vector<16x1xf32>
    %218 = vector.broadcast %217 : vector<16x1xf32> to vector<16x16xf32>
    %219 = arith.subf %215, %218 : vector<16x16xf32>
    %220 = math.exp %219 : vector<16x16xf32>
    %cst_72 = arith.constant dense<0.000000e+00> : vector<16xf32>
    %221 = vector.multi_reduction <add>, %220, %cst_72 [1] : vector<16x16xf32> to vector<16xf32>
    %222 = vector.shape_cast %221 : vector<16xf32> to vector<16x1xf32>
    %223 = arith.truncf %220 : vector<16x16xf32> to vector<16x16xbf16>
    %cst_73 = arith.constant dense<0.000000e+00> : vector<16x64xf32>
    %224 = tpu.matmul %223, %214, %cst_73 {dimension_numbers = #tpu.dot_dimension_numbers<[1], [0], [0], [1], [0, 0, 1, 1], [], []>} : vector<16x16xbf16>, vector<16x64xbf16>, vector<16x64xf32> -> vector<16x64xf32>
    %225 = tpu.reciprocal %222 {approx = true} : vector<16x1xf32> -> vector<16x1xf32>
    %226 = vector.broadcast %225 : vector<16x1xf32> to vector<16x64xf32>
    %227 = arith.mulf %224, %226 : vector<16x64xf32>
    %228 = arith.truncf %227 : vector<16x64xf32> to vector<16x64xbf16>
    %c80 = arith.constant 80 : index
    %c0_74 = arith.constant 0 : index
    %229 = vector.load %arg15[%c80, %c0_74] : memref<128x128xbf16, #tpu.memory_space<vmem>>, vector<16x64xbf16>
    tpu.vector_store %arg15[%c80, %c0_74], %228 {strides = array<i32>} : memref<128x128xbf16, #tpu.memory_space<vmem>>, vector<16x64xbf16>,
    %230 = vector.extract_strided_slice %31 {offsets = [80, 64], sizes = [16, 64], strides = [1, 1]} : vector<128x384xbf16> to vector<16x64xbf16>
    %231 = vector.extract_strided_slice %31 {offsets = [80, 192], sizes = [16, 64], strides = [1, 1]} : vector<128x384xbf16> to vector<16x64xbf16>
    %232 = vector.extract_strided_slice %31 {offsets = [80, 320], sizes = [16, 64], strides = [1, 1]} : vector<128x384xbf16> to vector<16x64xbf16>
    %cst_75 = arith.constant dense<0.000000e+00> : vector<16x16xf32>
    %233 = tpu.matmul %230, %231, %cst_75 {dimension_numbers = #tpu.dot_dimension_numbers<[1], [1], [0], [0], [0, 0, 1, 0], [], []>} : vector<16x64xbf16>, vector<16x64xbf16>, vector<16x16xf32> -> vector<16x16xf32>
    %cst_76 = arith.constant dense<0xFF800000> : vector<16xf32>
    %234 = vector.multi_reduction <maximumf>, %233, %cst_76 [1] : vector<16x16xf32> to vector<16xf32>
    %235 = vector.shape_cast %234 : vector<16xf32> to vector<16x1xf32>
    %236 = vector.broadcast %235 : vector<16x1xf32> to vector<16x16xf32>
    %237 = arith.subf %233, %236 : vector<16x16xf32>
    %238 = math.exp %237 : vector<16x16xf32>
    %cst_77 = arith.constant dense<0.000000e+00> : vector<16xf32>
    %239 = vector.multi_reduction <add>, %238, %cst_77 [1] : vector<16x16xf32> to vector<16xf32>
    %240 = vector.shape_cast %239 : vector<16xf32> to vector<16x1xf32>
    %241 = arith.truncf %238 : vector<16x16xf32> to vector<16x16xbf16>
    %cst_78 = arith.constant dense<0.000000e+00> : vector<16x64xf32>
    %242 = tpu.matmul %241, %232, %cst_78 {dimension_numbers = #tpu.dot_dimension_numbers<[1], [0], [0], [1], [0, 0, 1, 1], [], []>} : vector<16x16xbf16>, vector<16x64xbf16>, vector<16x64xf32> -> vector<16x64xf32>
    %243 = tpu.reciprocal %240 {approx = true} : vector<16x1xf32> -> vector<16x1xf32>
    %244 = vector.broadcast %243 : vector<16x1xf32> to vector<16x64xf32>
    %245 = arith.mulf %242, %244 : vector<16x64xf32>
    %246 = arith.truncf %245 : vector<16x64xf32> to vector<16x64xbf16>
    %c80_79 = arith.constant 80 : index
    %c64_80 = arith.constant 64 : index
    %247 = vector.load %arg15[%c80_79, %c64_80] : memref<128x128xbf16, #tpu.memory_space<vmem>>, vector<16x64xbf16>
    tpu.vector_store %arg15[%c80_79, %c64_80], %246 {strides = array<i32>} : memref<128x128xbf16, #tpu.memory_space<vmem>>, vector<16x64xbf16>,
    %248 = vector.extract_strided_slice %31 {offsets = [96, 0], sizes = [16, 64], strides = [1, 1]} : vector<128x384xbf16> to vector<16x64xbf16>
    %249 = vector.extract_strided_slice %31 {offsets = [96, 128], sizes = [16, 64], strides = [1, 1]} : vector<128x384xbf16> to vector<16x64xbf16>
    %250 = vector.extract_strided_slice %31 {offsets = [96, 256], sizes = [16, 64], strides = [1, 1]} : vector<128x384xbf16> to vector<16x64xbf16>
    %cst_81 = arith.constant dense<0.000000e+00> : vector<16x16xf32>
    %251 = tpu.matmul %248, %249, %cst_81 {dimension_numbers = #tpu.dot_dimension_numbers<[1], [1], [0], [0], [0, 0, 1, 0], [], []>} : vector<16x64xbf16>, vector<16x64xbf16>, vector<16x16xf32> -> vector<16x16xf32>
    %cst_82 = arith.constant dense<0xFF800000> : vector<16xf32>
    %252 = vector.multi_reduction <maximumf>, %251, %cst_82 [1] : vector<16x16xf32> to vector<16xf32>
    %253 = vector.shape_cast %252 : vector<16xf32> to vector<16x1xf32>
    %254 = vector.broadcast %253 : vector<16x1xf32> to vector<16x16xf32>
    %255 = arith.subf %251, %254 : vector<16x16xf32>
    %256 = math.exp %255 : vector<16x16xf32>
    %cst_83 = arith.constant dense<0.000000e+00> : vector<16xf32>
    %257 = vector.multi_reduction <add>, %256, %cst_83 [1] : vector<16x16xf32> to vector<16xf32>
    %258 = vector.shape_cast %257 : vector<16xf32> to vector<16x1xf32>
    %259 = arith.truncf %256 : vector<16x16xf32> to vector<16x16xbf16>
    %cst_84 = arith.constant dense<0.000000e+00> : vector<16x64xf32>
    %260 = tpu.matmul %259, %250, %cst_84 {dimension_numbers = #tpu.dot_dimension_numbers<[1], [0], [0], [1], [0, 0, 1, 1], [], []>} : vector<16x16xbf16>, vector<16x64xbf16>, vector<16x64xf32> -> vector<16x64xf32>
    %261 = tpu.reciprocal %258 {approx = true} : vector<16x1xf32> -> vector<16x1xf32>
    %262 = vector.broadcast %261 : vector<16x1xf32> to vector<16x64xf32>
    %263 = arith.mulf %260, %262 : vector<16x64xf32>
    %264 = arith.truncf %263 : vector<16x64xf32> to vector<16x64xbf16>
    %c96 = arith.constant 96 : index
    %c0_85 = arith.constant 0 : index
    %265 = vector.load %arg15[%c96, %c0_85] : memref<128x128xbf16, #tpu.memory_space<vmem>>, vector<16x64xbf16>
    tpu.vector_store %arg15[%c96, %c0_85], %264 {strides = array<i32>} : memref<128x128xbf16, #tpu.memory_space<vmem>>, vector<16x64xbf16>,
    %266 = vector.extract_strided_slice %31 {offsets = [96, 64], sizes = [16, 64], strides = [1, 1]} : vector<128x384xbf16> to vector<16x64xbf16>
    %267 = vector.extract_strided_slice %31 {offsets = [96, 192], sizes = [16, 64], strides = [1, 1]} : vector<128x384xbf16> to vector<16x64xbf16>
    %268 = vector.extract_strided_slice %31 {offsets = [96, 320], sizes = [16, 64], strides = [1, 1]} : vector<128x384xbf16> to vector<16x64xbf16>
    %cst_86 = arith.constant dense<0.000000e+00> : vector<16x16xf32>
    %269 = tpu.matmul %266, %267, %cst_86 {dimension_numbers = #tpu.dot_dimension_numbers<[1], [1], [0], [0], [0, 0, 1, 0], [], []>} : vector<16x64xbf16>, vector<16x64xbf16>, vector<16x16xf32> -> vector<16x16xf32>
    %cst_87 = arith.constant dense<0xFF800000> : vector<16xf32>
    %270 = vector.multi_reduction <maximumf>, %269, %cst_87 [1] : vector<16x16xf32> to vector<16xf32>
    %271 = vector.shape_cast %270 : vector<16xf32> to vector<16x1xf32>
    %272 = vector.broadcast %271 : vector<16x1xf32> to vector<16x16xf32>
    %273 = arith.subf %269, %272 : vector<16x16xf32>
    %274 = math.exp %273 : vector<16x16xf32>
    %cst_88 = arith.constant dense<0.000000e+00> : vector<16xf32>
    %275 = vector.multi_reduction <add>, %274, %cst_88 [1] : vector<16x16xf32> to vector<16xf32>
    %276 = vector.shape_cast %275 : vector<16xf32> to vector<16x1xf32>
    %277 = arith.truncf %274 : vector<16x16xf32> to vector<16x16xbf16>
    %cst_89 = arith.constant dense<0.000000e+00> : vector<16x64xf32>
    %278 = tpu.matmul %277, %268, %cst_89 {dimension_numbers = #tpu.dot_dimension_numbers<[1], [0], [0], [1], [0, 0, 1, 1], [], []>} : vector<16x16xbf16>, vector<16x64xbf16>, vector<16x64xf32> -> vector<16x64xf32>
    %279 = tpu.reciprocal %276 {approx = true} : vector<16x1xf32> -> vector<16x1xf32>
    %280 = vector.broadcast %279 : vector<16x1xf32> to vector<16x64xf32>
    %281 = arith.mulf %278, %280 : vector<16x64xf32>
    %282 = arith.truncf %281 : vector<16x64xf32> to vector<16x64xbf16>
    %c96_90 = arith.constant 96 : index
    %c64_91 = arith.constant 64 : index
    %283 = vector.load %arg15[%c96_90, %c64_91] : memref<128x128xbf16, #tpu.memory_space<vmem>>, vector<16x64xbf16>
    tpu.vector_store %arg15[%c96_90, %c64_91], %282 {strides = array<i32>} : memref<128x128xbf16, #tpu.memory_space<vmem>>, vector<16x64xbf16>,
    %284 = vector.extract_strided_slice %31 {offsets = [112, 0], sizes = [16, 64], strides = [1, 1]} : vector<128x384xbf16> to vector<16x64xbf16>
    %285 = vector.extract_strided_slice %31 {offsets = [112, 128], sizes = [16, 64], strides = [1, 1]} : vector<128x384xbf16> to vector<16x64xbf16>
    %286 = vector.extract_strided_slice %31 {offsets = [112, 256], sizes = [16, 64], strides = [1, 1]} : vector<128x384xbf16> to vector<16x64xbf16>
    %cst_92 = arith.constant dense<0.000000e+00> : vector<16x16xf32>
    %287 = tpu.matmul %284, %285, %cst_92 {dimension_numbers = #tpu.dot_dimension_numbers<[1], [1], [0], [0], [0, 0, 1, 0], [], []>} : vector<16x64xbf16>, vector<16x64xbf16>, vector<16x16xf32> -> vector<16x16xf32>
    %cst_93 = arith.constant dense<0xFF800000> : vector<16xf32>
    %288 = vector.multi_reduction <maximumf>, %287, %cst_93 [1] : vector<16x16xf32> to vector<16xf32>
    %289 = vector.shape_cast %288 : vector<16xf32> to vector<16x1xf32>
    %290 = vector.broadcast %289 : vector<16x1xf32> to vector<16x16xf32>
    %291 = arith.subf %287, %290 : vector<16x16xf32>
    %292 = math.exp %291 : vector<16x16xf32>
    %cst_94 = arith.constant dense<0.000000e+00> : vector<16xf32>
    %293 = vector.multi_reduction <add>, %292, %cst_94 [1] : vector<16x16xf32> to vector<16xf32>
    %294 = vector.shape_cast %293 : vector<16xf32> to vector<16x1xf32>
    %295 = arith.truncf %292 : vector<16x16xf32> to vector<16x16xbf16>
    %cst_95 = arith.constant dense<0.000000e+00> : vector<16x64xf32>
    %296 = tpu.matmul %295, %286, %cst_95 {dimension_numbers = #tpu.dot_dimension_numbers<[1], [0], [0], [1], [0, 0, 1, 1], [], []>} : vector<16x16xbf16>, vector<16x64xbf16>, vector<16x64xf32> -> vector<16x64xf32>
    %297 = tpu.reciprocal %294 {approx = true} : vector<16x1xf32> -> vector<16x1xf32>
    %298 = vector.broadcast %297 : vector<16x1xf32> to vector<16x64xf32>
    %299 = arith.mulf %296, %298 : vector<16x64xf32>
    %300 = arith.truncf %299 : vector<16x64xf32> to vector<16x64xbf16>
    %c112 = arith.constant 112 : index
    %c0_96 = arith.constant 0 : index
    %301 = vector.load %arg15[%c112, %c0_96] : memref<128x128xbf16, #tpu.memory_space<vmem>>, vector<16x64xbf16>
    tpu.vector_store %arg15[%c112, %c0_96], %300 {strides = array<i32>} : memref<128x128xbf16, #tpu.memory_space<vmem>>, vector<16x64xbf16>,
    %302 = vector.extract_strided_slice %31 {offsets = [112, 64], sizes = [16, 64], strides = [1, 1]} : vector<128x384xbf16> to vector<16x64xbf16>
    %303 = vector.extract_strided_slice %31 {offsets = [112, 192], sizes = [16, 64], strides = [1, 1]} : vector<128x384xbf16> to vector<16x64xbf16>
    %304 = vector.extract_strided_slice %31 {offsets = [112, 320], sizes = [16, 64], strides = [1, 1]} : vector<128x384xbf16> to vector<16x64xbf16>
    %cst_97 = arith.constant dense<0.000000e+00> : vector<16x16xf32>
    %305 = tpu.matmul %302, %303, %cst_97 {dimension_numbers = #tpu.dot_dimension_numbers<[1], [1], [0], [0], [0, 0, 1, 0], [], []>} : vector<16x64xbf16>, vector<16x64xbf16>, vector<16x16xf32> -> vector<16x16xf32>
    %cst_98 = arith.constant dense<0xFF800000> : vector<16xf32>
    %306 = vector.multi_reduction <maximumf>, %305, %cst_98 [1] : vector<16x16xf32> to vector<16xf32>
    %307 = vector.shape_cast %306 : vector<16xf32> to vector<16x1xf32>
    %308 = vector.broadcast %307 : vector<16x1xf32> to vector<16x16xf32>
    %309 = arith.subf %305, %308 : vector<16x16xf32>
    %310 = math.exp %309 : vector<16x16xf32>
    %cst_99 = arith.constant dense<0.000000e+00> : vector<16xf32>
    %311 = vector.multi_reduction <add>, %310, %cst_99 [1] : vector<16x16xf32> to vector<16xf32>
    %312 = vector.shape_cast %311 : vector<16xf32> to vector<16x1xf32>
    %313 = arith.truncf %310 : vector<16x16xf32> to vector<16x16xbf16>
    %cst_100 = arith.constant dense<0.000000e+00> : vector<16x64xf32>
    %314 = tpu.matmul %313, %304, %cst_100 {dimension_numbers = #tpu.dot_dimension_numbers<[1], [0], [0], [1], [0, 0, 1, 1], [], []>} : vector<16x16xbf16>, vector<16x64xbf16>, vector<16x64xf32> -> vector<16x64xf32>
    %315 = tpu.reciprocal %312 {approx = true} : vector<16x1xf32> -> vector<16x1xf32>
    %316 = vector.broadcast %315 : vector<16x1xf32> to vector<16x64xf32>
    %317 = arith.mulf %314, %316 : vector<16x64xf32>
    %318 = arith.truncf %317 : vector<16x64xf32> to vector<16x64xbf16>
    %c112_101 = arith.constant 112 : index
    %c64_102 = arith.constant 64 : index
    %319 = vector.load %arg15[%c112_101, %c64_102] : memref<128x128xbf16, #tpu.memory_space<vmem>>, vector<16x64xbf16>
    tpu.vector_store %arg15[%c112_101, %c64_102], %318 {strides = array<i32>} : memref<128x128xbf16, #tpu.memory_space<vmem>>, vector<16x64xbf16>,
    %c0_103 = arith.constant 0 : index
    %c0_104 = arith.constant 0 : index
    %320 = vector.load %arg15[%c0_103, %c0_104] : memref<128x128xbf16, #tpu.memory_space<vmem>>, vector<128x128xbf16>
    %c0_105 = arith.constant 0 : index
    %c0_106 = arith.constant 0 : index
    %321 = vector.load %arg6[%c0_105, %c0_106] : memref<128x128xbf16, #tpu.memory_space<vmem>>, vector<128x128xbf16>
    %cst_107 = arith.constant dense<0.000000e+00> : vector<128x128xf32>
    %322 = tpu.matmul %320, %321, %cst_107 {dimension_numbers = #tpu.dot_dimension_numbers<[1], [0], [0], [1], [0, 0, 1, 1], [], []>} : vector<128x128xbf16>, vector<128x128xbf16>, vector<128x128xf32> -> vector<128x128xf32>
    %323 = arith.addf %0, %322 : vector<128x128xf32>
    %c0_108 = arith.constant 0 : index
    %c0_109 = arith.constant 0 : index
    %324 = vector.load %arg7[%c0_108, %c0_109] : memref<1x128xf32, #tpu.memory_space<vmem>>, vector<1x128xf32>
    %325 = vector.broadcast %324 : vector<1x128xf32> to vector<128x128xf32>
    %326 = arith.addf %323, %325 : vector<128x128xf32>
    %cst_110 = arith.constant dense<0.000000e+00> : vector<128xf32>
    %327 = vector.multi_reduction <add>, %326, %cst_110 [1] : vector<128x128xf32> to vector<128xf32>
    %328 = vector.shape_cast %327 : vector<128xf32> to vector<128x1xf32>
    %cst_111 = arith.constant 1.280000e+02 : f32
    %329 = vector.broadcast %cst_111 : f32 to vector<128x1xf32>
    %330 = arith.divf %328, %329 : vector<128x1xf32>
    %331 = arith.mulf %326, %326 : vector<128x128xf32>
    %cst_112 = arith.constant dense<0.000000e+00> : vector<128xf32>
    %332 = vector.multi_reduction <add>, %331, %cst_112 [1] : vector<128x128xf32> to vector<128xf32>
    %333 = vector.shape_cast %332 : vector<128xf32> to vector<128x1xf32>
    %cst_113 = arith.constant 1.280000e+02 : f32
    %334 = vector.broadcast %cst_113 : f32 to vector<128x1xf32>
    %335 = arith.divf %333, %334 : vector<128x1xf32>
    %336 = arith.mulf %330, %330 : vector<128x1xf32>
    %337 = arith.subf %335, %336 : vector<128x1xf32>
    %338 = vector.broadcast %330 : vector<128x1xf32> to vector<128x128xf32>
    %339 = arith.subf %326, %338 : vector<128x128xf32>
    %cst_114 = arith.constant 9.99999974E-6 : f32
    %340 = vector.broadcast %cst_114 : f32 to vector<128x1xf32>
    %341 = arith.addf %337, %340 : vector<128x1xf32>
    %342 = math.rsqrt %341 : vector<128x1xf32>
    %343 = vector.broadcast %342 : vector<128x1xf32> to vector<128x128xf32>
    %344 = arith.mulf %339, %343 : vector<128x128xf32>
    %c0_115 = arith.constant 0 : index
    %c0_116 = arith.constant 0 : index
    %345 = vector.load %arg8[%c0_115, %c0_116] : memref<1x128xf32, #tpu.memory_space<vmem>>, vector<1x128xf32>
    %346 = vector.broadcast %345 : vector<1x128xf32> to vector<128x128xf32>
    %347 = arith.mulf %344, %346 : vector<128x128xf32>
    %c0_117 = arith.constant 0 : index
    %c0_118 = arith.constant 0 : index
    %348 = vector.load %arg9[%c0_117, %c0_118] : memref<1x128xf32, #tpu.memory_space<vmem>>, vector<1x128xf32>
    %349 = vector.broadcast %348 : vector<1x128xf32> to vector<128x128xf32>
    %350 = arith.addf %347, %349 : vector<128x128xf32>
    %351 = arith.truncf %350 : vector<128x128xf32> to vector<128x128xbf16>
    %c0_119 = arith.constant 0 : index
    %c0_120 = arith.constant 0 : index
    %352 = vector.load %arg10[%c0_119, %c0_120] : memref<128x512xbf16, #tpu.memory_space<vmem>>, vector<128x512xbf16>
    %cst_121 = arith.constant dense<0.000000e+00> : vector<128x512xf32>
    %353 = tpu.matmul %351, %352, %cst_121 {dimension_numbers = #tpu.dot_dimension_numbers<[1], [0], [0], [1], [0, 0, 1, 1], [], []>} : vector<128x128xbf16>, vector<128x512xbf16>, vector<128x512xf32> -> vector<128x512xf32>
    %c0_122 = arith.constant 0 : index
    %c0_123 = arith.constant 0 : index
    %354 = vector.load %arg11[%c0_122, %c0_123] : memref<1x512xf32, #tpu.memory_space<vmem>>, vector<1x512xf32>
    %355 = vector.broadcast %354 : vector<1x512xf32> to vector<128x512xf32>
    %356 = arith.addf %353, %355 : vector<128x512xf32>
    %cst_124 = arith.constant 5.000000e-01 : f32
    %357 = vector.broadcast %cst_124 : f32 to vector<128x512xf32>
    %358 = arith.mulf %357, %356 : vector<128x512xf32>
    %cst_125 = arith.constant 0.707106769 : f32
    %359 = vector.broadcast %cst_125 : f32 to vector<128x512xf32>
    %360 = arith.mulf %356, %359 : vector<128x512xf32>
    %361 = math.erf %360 : vector<128x512xf32>
    %cst_126 = arith.constant 1.000000e+00 : f32
    %362 = vector.broadcast %cst_126 : f32 to vector<128x512xf32>
    %363 = arith.addf %362, %361 : vector<128x512xf32>
    %364 = arith.mulf %358, %363 : vector<128x512xf32>
    %365 = arith.truncf %364 : vector<128x512xf32> to vector<128x512xbf16>
    %c0_127 = arith.constant 0 : index
    %c0_128 = arith.constant 0 : index
    %366 = vector.load %arg12[%c0_127, %c0_128] : memref<512x128xbf16, #tpu.memory_space<vmem>>, vector<512x128xbf16>
    %cst_129 = arith.constant dense<0.000000e+00> : vector<128x128xf32>
    %367 = tpu.matmul %365, %366, %cst_129 {dimension_numbers = #tpu.dot_dimension_numbers<[1], [0], [0], [1], [0, 0, 1, 1], [], []>} : vector<128x512xbf16>, vector<512x128xbf16>, vector<128x128xf32> -> vector<128x128xf32>
    %c0_130 = arith.constant 0 : index
    %c0_131 = arith.constant 0 : index
    %368 = vector.load %arg13[%c0_130, %c0_131] : memref<1x128xf32, #tpu.memory_space<vmem>>, vector<1x128xf32>
    %369 = vector.broadcast %368 : vector<1x128xf32> to vector<128x128xf32>
    %370 = arith.addf %367, %369 : vector<128x128xf32>
    %371 = arith.addf %326, %370 : vector<128x128xf32>
    %c0_132 = arith.constant 0 : index
    %c0_133 = arith.constant 0 : index
    %372 = vector.load %arg14[%c0_132, %c0_133] : memref<128x128xf32, #tpu.memory_space<vmem>>, vector<128x128xf32>
    tpu.vector_store %arg14[%c0_132, %c0_133], %371 {strides = array<i32>} : memref<128x128xf32, #tpu.memory_space<vmem>>, vector<128x128xf32>,
    return
  }
  func.func @transform_0(%arg0: i32) -> (i32, i32) {
    %c0_i32 = arith.constant 0 : i32
    %c0_i32_0 = arith.constant 0 : i32
    return %arg0, %c0_i32 : i32, i32
  }
  func.func @transform_1(%arg0: i32) -> (i32, i32) {
    %c0_i32 = arith.constant 0 : i32
    %c0_i32_0 = arith.constant 0 : i32
    %c0_i32_1 = arith.constant 0 : i32
    return %c0_i32, %c0_i32_0 : i32, i32
  }
  func.func @transform_2(%arg0: i32) -> (i32, i32) {
    %c0_i32 = arith.constant 0 : i32
    %c0_i32_0 = arith.constant 0 : i32
    %c0_i32_1 = arith.constant 0 : i32
    return %c0_i32, %c0_i32_0 : i32, i32
  }
  func.func @transform_3(%arg0: i32) -> (i32, i32) {
    %c0_i32 = arith.constant 0 : i32
    %c0_i32_0 = arith.constant 0 : i32
    %c0_i32_1 = arith.constant 0 : i32
    return %c0_i32, %c0_i32_0 : i32, i32
  }
  func.func @transform_4(%arg0: i32) -> (i32, i32) {
    %c0_i32 = arith.constant 0 : i32
    %c0_i32_0 = arith.constant 0 : i32
    %c0_i32_1 = arith.constant 0 : i32
    return %c0_i32, %c0_i32_0 : i32, i32
  }
  func.func @transform_5(%arg0: i32) -> (i32, i32) {
    %c0_i32 = arith.constant 0 : i32
    %c0_i32_0 = arith.constant 0 : i32
    %c0_i32_1 = arith.constant 0 : i32
    return %c0_i32, %c0_i32_0 : i32, i32
  }
  func.func @transform_6(%arg0: i32) -> (i32, i32) {
    %c0_i32 = arith.constant 0 : i32
    %c0_i32_0 = arith.constant 0 : i32
    %c0_i32_1 = arith.constant 0 : i32
    return %c0_i32, %c0_i32_0 : i32, i32
  }
  func.func @transform_7(%arg0: i32) -> (i32, i32) {
    %c0_i32 = arith.constant 0 : i32
    %c0_i32_0 = arith.constant 0 : i32
    %c0_i32_1 = arith.constant 0 : i32
    return %c0_i32, %c0_i32_0 : i32, i32
  }
  func.func @transform_8(%arg0: i32) -> (i32, i32) {
    %c0_i32 = arith.constant 0 : i32
    %c0_i32_0 = arith.constant 0 : i32
    %c0_i32_1 = arith.constant 0 : i32
    return %c0_i32, %c0_i32_0 : i32, i32
  }
  func.func @transform_9(%arg0: i32) -> (i32, i32) {
    %c0_i32 = arith.constant 0 : i32
    %c0_i32_0 = arith.constant 0 : i32
    %c0_i32_1 = arith.constant 0 : i32
    return %c0_i32, %c0_i32_0 : i32, i32
  }
  func.func @transform_10(%arg0: i32) -> (i32, i32) {
    %c0_i32 = arith.constant 0 : i32
    %c0_i32_0 = arith.constant 0 : i32
    %c0_i32_1 = arith.constant 0 : i32
    return %c0_i32, %c0_i32_0 : i32, i32
  }
  func.func @transform_11(%arg0: i32) -> (i32, i32) {
    %c0_i32 = arith.constant 0 : i32
    %c0_i32_0 = arith.constant 0 : i32
    %c0_i32_1 = arith.constant 0 : i32
    return %c0_i32, %c0_i32_0 : i32, i32
  }
  func.func @transform_12(%arg0: i32) -> (i32, i32) {
    %c0_i32 = arith.constant 0 : i32
    %c0_i32_0 = arith.constant 0 : i32
    %c0_i32_1 = arith.constant 0 : i32
    return %c0_i32, %c0_i32_0 : i32, i32
  }
  func.func @transform_13(%arg0: i32) -> (i32, i32) {
    %c0_i32 = arith.constant 0 : i32
    %c0_i32_0 = arith.constant 0 : i32
    return %arg0, %c0_i32 : i32, i32
  }
}

</mosaic_0001>

<llo_original>
// kernel: tpu_custom_call.1
$region0: #{tpu_custom_call.1}
  #allocation0 [shape = 'u32[]', space=smem, size = 0x4, offset = 0x4, fixed_abs, tag = 'smem constant byte address 0x4 - core index']
  #allocation1 [shape = 'u32[144,128]{1,0:T(1,128)}', space=vmem, size = 0x12000, scoped, tag = 'internal scratch']
  #allocation2 [shape = 'bf16[128,128]{1,0:T(16,128)(2,1)}', space=vmem, size = 0x8000, scoped, tag = 'scratch operand']
  %s0 = inlined_call_operand.hbm [shape: f32[256,128], index: 0, kind: input, shape index: {}]
  %s1 = inlined_call_operand.hbm [shape: f32[1,128], index: 1, kind: input, shape index: {}]
  %s2 = inlined_call_operand.hbm [shape: f32[1,128], index: 2, kind: input, shape index: {}]
  %s3 = inlined_call_operand.hbm [shape: bf16[128,384], index: 3, kind: input, shape index: {}]
  %s4 = inlined_call_operand.vmem [shape: f32[1,384], index: 4, kind: input, shape index: {}]
  %s5 = inlined_call_operand.hbm [shape: bf16[128,128], index: 5, kind: input, shape index: {}]
  %s6 = inlined_call_operand.vmem [shape: f32[1,128], index: 6, kind: input, shape index: {}]
  %s7 = inlined_call_operand.vmem [shape: f32[1,128], index: 7, kind: input, shape index: {}]
  %s8 = inlined_call_operand.vmem [shape: f32[1,128], index: 8, kind: input, shape index: {}]
  %s9 = inlined_call_operand.hbm [shape: bf16[128,512], index: 9, kind: input, shape index: {}]
  %s10 = inlined_call_operand.vmem [shape: f32[1,512], index: 10, kind: input, shape index: {}]
  %s11 = inlined_call_operand.hbm [shape: bf16[512,128], index: 11, kind: input, shape index: {}]
  %s12 = inlined_call_operand.vmem [shape: f32[1,128], index: 12, kind: input, shape index: {}]
  %s13 = inlined_call_operand.hbm [shape: f32[256,128], index: 13, kind: output, shape index: {}]
  %s14 = sld [smem:[#allocation0]]
  $region113: #{tpu_custom_call.1} parent=0
    _
  %s16 = ssub.s32 1, %s14
  %s17 = scalar_select 0, %s16, %s14
  $region1: #{tpu_custom_call.1} parent=0
    #allocation3 [shape = 'u8[131072]{0}', space=vmem, size = 0x20000, scoped, tag = 'input window, operand 0']
    #allocation4 [shape = 's32[2]{0}', space=sflag, size = 0x8, scoped, tag = 'scoped memory for tpu_custom_call.1']
    #allocation5 [shape = 's32[2]{0}', space=sflag, size = 0x8, scoped, tag = 'scoped memory for tpu_custom_call.1']
    #allocation6 [shape = 'u8[512]{0}', space=vmem, size = 0x400, scoped, tag = 'input window, operand 1, single buffered']
    #allocation7 [shape = 's32[1]{0}', space=sflag, size = 0x4, scoped, tag = 'scoped memory for tpu_custom_call.1']
    #allocation8 [shape = 'u8[512]{0}', space=vmem, size = 0x400, scoped, tag = 'input window, operand 2, single buffered']
    #allocation9 [shape = 'u8[98304]{0}', space=vmem, size = 0x18000, scoped, tag = 'input window, operand 3, single buffered']
    #allocation10 [shape = 's32[1]{0}', space=sflag, size = 0x4, scoped, tag = 'scoped memory for tpu_custom_call.1']
    #allocation11 [shape = 'u8[32768]{0}', space=vmem, size = 0x8000, scoped, tag = 'input window, operand 5, single buffered']
    #allocation12 [shape = 'u8[131072]{0}', space=vmem, size = 0x20000, scoped, tag = 'input window, operand 9, single buffered']
    #allocation13 [shape = 's32[1]{0}', space=sflag, size = 0x4, scoped, tag = 'scoped memory for tpu_custom_call.1']
    #allocation14 [shape = 'u8[131072]{0}', space=vmem, size = 0x20000, scoped, tag = 'input window, operand 11, single buffered']
    #allocation15 [shape = 'u8[131072]{0}', space=vmem, size = 0x20000, scoped, tag = 'output window, operand 0']
    %18 = vsyncpa [#allocation4], 0
    %s19 = scalar_lea.sflag [#allocation4], 1
    %20 = vsyncpa %s19, 0
    %21 = vsyncpa [#allocation7], 0
    %22 = vsyncpa [#allocation10], 0
    %23 = vsyncpa [#allocation13], 0
    %24 = vsyncpa [#allocation5], 0
    %s25 = scalar_lea.sflag [#allocation5], 1
    %26 = vsyncpa %s25, 0
    loop: start=0, step=1, limit=4
    $region2: #{tpu_custom_call.1} parent=1 // loop_pre_header
      _
    $region3: #{tpu_custom_call.1} parent=1 // loop_header
      %s28 = sphi 0, %s32
      %p29 = scmp.ge.s32.totalorder %s28, 4
      %s38 = sphi 0, %s40
      %s41 = sphi 0, %s38
      %s42 = sphi 0, %s41
      %s58 = sphi 0, %s42
      %s62 = sphi 0, %s62
      %s64 = sphi 0, %s62
      %s65 = sphi 0, %s64
      %s79 = sphi 0, %s65
      %s83 = sphi 0, %s83
      %s85 = sphi 0, %s83
      %s86 = sphi 0, %s85
      %s100 = sphi 0, %s86
      %s104 = sphi 0, %s104
      %s106 = sphi 0, %s104
      %s107 = sphi 0, %s106
      %s121 = sphi 0, %s107
      %s125 = sphi 0, %s125
      %s127 = sphi 0, %s125
      %s128 = sphi 0, %s127
      %s142 = sphi 0, %s128
      %s146 = sphi 0, %s146
      %s148 = sphi 0, %s146
      %s149 = sphi 0, %s148
      %s163 = sphi 0, %s149
      %s167 = sphi 0, %s167
      %s169 = sphi 0, %s167
      %s170 = sphi 0, %s169
      %s184 = sphi 0, %s170
      %s188 = sphi 0, %s188
      %s190 = sphi 0, %s188
      %s191 = sphi 0, %s190
      %s205 = sphi 0, %s191
      %s209 = sphi 0, %s209
      %s211 = sphi 0, %s209
      %s212 = sphi 0, %s211
      %s226 = sphi 0, %s212
      %s230 = sphi 0, %s230
      %s232 = sphi 0, %s230
      %s233 = sphi 0, %s232
      %s247 = sphi 0, %s233
      %s251 = sphi 0, %s251
      %s253 = sphi 0, %s251
      %s254 = sphi 0, %s253
      %s268 = sphi 0, %s254
      %s272 = sphi 0, %s272
      %s274 = sphi 0, %s272
      %s275 = sphi 0, %s274
      %s289 = sphi 0, %s275
      %s293 = sphi 0, %s293
      %s295 = sphi 0, %s293
      %s296 = sphi 0, %s295
      %s310 = sphi 0, %s296
      %s316 = sphi 0, %s318
      %s319 = sphi 0, %s316
      %s320 = sphi 0, %s319
      %s336 = sphi 0, %s320
    $region4: #{tpu_custom_call.1} parent=1 // loop_header_branch
      %31 = sbr.rel (%p29) target = $region8
    $region5: #{tpu_custom_call.1} parent=1 // loop_body
      %s33 = ssub.s32 %s28, 1
      %s34 = ssub.s32 %s28, 2
      %s35 = sadd.s32 %s28, 1
      %s36 = ssub.s32 %s28, %s35
      %p37 = scmp.eq.s32.totalorder %s36, 0
      %s39 = sadd.s32 %s38, 1
      %s40 = scalar_select %p37, %s38, %s39
      %p43 = pneg %p37
      %p44 = scmp.eq.s32.totalorder %s28, 1
      %p45 = por %p43, %p44
      %p46 = scmp.ne.s32.totalorder %s38, %s41
      %p47 = scmp.eq.s32.totalorder %s28, 0
      %p48 = por %p46, %p47
      %p49 = scmp.ne.s32.totalorder %s38, %s41
      %p50 = scmp.eq.s32.totalorder %s33, 1
      %p51 = por %p49, %p50
      %p52 = scmp.ne.s32.totalorder %s41, %s42
      %p53 = scmp.eq.s32.totalorder %s33, 0
      %p54 = por %p52, %p53
      %p55 = scmp.ne.s32.totalorder %s41, %s42
      %p56 = scmp.eq.s32.totalorder %s34, 1
      %p57 = por %p55, %p56
      %p59 = scmp.ne.s32.totalorder %s42, %s58
      %p60 = scmp.eq.s32.totalorder %s34, 0
      %p61 = por %p59, %p60
      %s63 = sadd.s32 %s62, 1
      %p66 = scmp.eq.s32.totalorder %s28, 1
      %p67 = scmp.ne.s32.totalorder %s62, %s64
      %p68 = scmp.eq.s32.totalorder %s28, 0
      %p69 = por %p67, %p68
      %p70 = scmp.ne.s32.totalorder %s62, %s64
      %p71 = scmp.eq.s32.totalorder %s33, 1
      %p72 = por %p70, %p71
      %p73 = scmp.ne.s32.totalorder %s64, %s65
      %p74 = scmp.eq.s32.totalorder %s33, 0
      %p75 = por %p73, %p74
      %p76 = scmp.ne.s32.totalorder %s64, %s65
      %p77 = scmp.eq.s32.totalorder %s34, 1
      %p78 = por %p76, %p77
      %p80 = scmp.ne.s32.totalorder %s65, %s79
      %p81 = scmp.eq.s32.totalorder %s34, 0
      %p82 = por %p80, %p81
      %s84 = sadd.s32 %s83, 1
      %p87 = scmp.eq.s32.totalorder %s28, 1
      %p88 = scmp.ne.s32.totalorder %s83, %s85
      %p89 = scmp.eq.s32.totalorder %s28, 0
      %p90 = por %p88, %p89
      %p91 = scmp.ne.s32.totalorder %s83, %s85
      %p92 = scmp.eq.s32.totalorder %s33, 1
      %p93 = por %p91, %p92
      %p94 = scmp.ne.s32.totalorder %s85, %s86
      %p95 = scmp.eq.s32.totalorder %s33, 0
      %p96 = por %p94, %p95
      %p97 = scmp.ne.s32.totalorder %s85, %s86
      %p98 = scmp.eq.s32.totalorder %s34, 1
      %p99 = por %p97, %p98
      %p101 = scmp.ne.s32.totalorder %s86, %s100
      %p102 = scmp.eq.s32.totalorder %s34, 0
      %p103 = por %p101, %p102
      %s105 = sadd.s32 %s104, 1
      %p108 = scmp.eq.s32.totalorder %s28, 1
      %p109 = scmp.ne.s32.totalorder %s104, %s106
      %p110 = scmp.eq.s32.totalorder %s28, 0
      %p111 = por %p109, %p110
      %p112 = scmp.ne.s32.totalorder %s104, %s106
      %p113 = scmp.eq.s32.totalorder %s33, 1
      %p114 = por %p112, %p113
      %p115 = scmp.ne.s32.totalorder %s106, %s107
      %p116 = scmp.eq.s32.totalorder %s33, 0
      %p117 = por %p115, %p116
      %p118 = scmp.ne.s32.totalorder %s106, %s107
      %p119 = scmp.eq.s32.totalorder %s34, 1
      %p120 = por %p118, %p119
      %p122 = scmp.ne.s32.totalorder %s107, %s121
      %p123 = scmp.eq.s32.totalorder %s34, 0
      %p124 = por %p122, %p123
      %s126 = sadd.s32 %s125, 1
      %p129 = scmp.eq.s32.totalorder %s28, 1
      %p130 = scmp.ne.s32.totalorder %s125, %s127
      %p131 = scmp.eq.s32.totalorder %s28, 0
      %p132 = por %p130, %p131
      %p133 = scmp.ne.s32.totalorder %s125, %s127
      %p134 = scmp.eq.s32.totalorder %s33, 1
      %p135 = por %p133, %p134
      %p136 = scmp.ne.s32.totalorder %s127, %s128
      %p137 = scmp.eq.s32.totalorder %s33, 0
      %p138 = por %p136, %p137
      %p139 = scmp.ne.s32.totalorder %s127, %s128
      %p140 = scmp.eq.s32.totalorder %s34, 1
      %p141 = por %p139, %p140
      %p143 = scmp.ne.s32.totalorder %s128, %s142
      %p144 = scmp.eq.s32.totalorder %s34, 0
      %p145 = por %p143, %p144
      %s147 = sadd.s32 %s146, 1
      %p150 = scmp.eq.s32.totalorder %s28, 1
      %p151 = scmp.ne.s32.totalorder %s146, %s148
      %p152 = scmp.eq.s32.totalorder %s28, 0
      %p153 = por %p151, %p152
      %p154 = scmp.ne.s32.totalorder %s146, %s148
      %p155 = scmp.eq.s32.totalorder %s33, 1
      %p156 = por %p154, %p155
      %p157 = scmp.ne.s32.totalorder %s148, %s149
      %p158 = scmp.eq.s32.totalorder %s33, 0
      %p159 = por %p157, %p158
      %p160 = scmp.ne.s32.totalorder %s148, %s149
      %p161 = scmp.eq.s32.totalorder %s34, 1
      %p162 = por %p160, %p161
      %p164 = scmp.ne.s32.totalorder %s149, %s163
      %p165 = scmp.eq.s32.totalorder %s34, 0
      %p166 = por %p164, %p165
      %s168 = sadd.s32 %s167, 1
      %p171 = scmp.eq.s32.totalorder %s28, 1
      %p172 = scmp.ne.s32.totalorder %s167, %s169
      %p173 = scmp.eq.s32.totalorder %s28, 0
      %p174 = por %p172, %p173
      %p175 = scmp.ne.s32.totalorder %s167, %s169
      %p176 = scmp.eq.s32.totalorder %s33, 1
      %p177 = por %p175, %p176
      %p178 = scmp.ne.s32.totalorder %s169, %s170
      %p179 = scmp.eq.s32.totalorder %s33, 0
      %p180 = por %p178, %p179
      %p181 = scmp.ne.s32.totalorder %s169, %s170
      %p182 = scmp.eq.s32.totalorder %s34, 1
      %p183 = por %p181, %p182
      %p185 = scmp.ne.s32.totalorder %s170, %s184
      %p186 = scmp.eq.s32.totalorder %s34, 0
      %p187 = por %p185, %p186
      %s189 = sadd.s32 %s188, 1
      %p192 = scmp.eq.s32.totalorder %s28, 1
      %p193 = scmp.ne.s32.totalorder %s188, %s190
      %p194 = scmp.eq.s32.totalorder %s28, 0
      %p195 = por %p193, %p194
      %p196 = scmp.ne.s32.totalorder %s188, %s190
      %p197 = scmp.eq.s32.totalorder %s33, 1
      %p198 = por %p196, %p197
      %p199 = scmp.ne.s32.totalorder %s190, %s191
      %p200 = scmp.eq.s32.totalorder %s33, 0
      %p201 = por %p199, %p200
      %p202 = scmp.ne.s32.totalorder %s190, %s191
      %p203 = scmp.eq.s32.totalorder %s34, 1
      %p204 = por %p202, %p203
      %p206 = scmp.ne.s32.totalorder %s191, %s205
      %p207 = scmp.eq.s32.totalorder %s34, 0
      %p208 = por %p206, %p207
      %s210 = sadd.s32 %s209, 1
      %p213 = scmp.eq.s32.totalorder %s28, 1
      %p214 = scmp.ne.s32.totalorder %s209, %s211
      %p215 = scmp.eq.s32.totalorder %s28, 0
      %p216 = por %p214, %p215
      %p217 = scmp.ne.s32.totalorder %s209, %s211
      %p218 = scmp.eq.s32.totalorder %s33, 1
      %p219 = por %p217, %p218
      %p220 = scmp.ne.s32.totalorder %s211, %s212
      %p221 = scmp.eq.s32.totalorder %s33, 0
      %p222 = por %p220, %p221
      %p223 = scmp.ne.s32.totalorder %s211, %s212
      %p224 = scmp.eq.s32.totalorder %s34, 1
      %p225 = por %p223, %p224
      %p227 = scmp.ne.s32.totalorder %s212, %s226
      %p228 = scmp.eq.s32.totalorder %s34, 0
      %p229 = por %p227, %p228
      %s231 = sadd.s32 %s230, 1
      %p234 = scmp.eq.s32.totalorder %s28, 1
      %p235 = scmp.ne.s32.totalorder %s230, %s232
      %p236 = scmp.eq.s32.totalorder %s28, 0
      %p237 = por %p235, %p236
      %p238 = scmp.ne.s32.totalorder %s230, %s232
      %p239 = scmp.eq.s32.totalorder %s33, 1
      %p240 = por %p238, %p239
      %p241 = scmp.ne.s32.totalorder %s232, %s233
      %p242 = scmp.eq.s32.totalorder %s33, 0
      %p243 = por %p241, %p242
      %p244 = scmp.ne.s32.totalorder %s232, %s233
      %p245 = scmp.eq.s32.totalorder %s34, 1
      %p246 = por %p244, %p245
      %p248 = scmp.ne.s32.totalorder %s233, %s247
      %p249 = scmp.eq.s32.totalorder %s34, 0
      %p250 = por %p248, %p249
      %s252 = sadd.s32 %s251, 1
      %p255 = scmp.eq.s32.totalorder %s28, 1
      %p256 = scmp.ne.s32.totalorder %s251, %s253
      %p257 = scmp.eq.s32.totalorder %s28, 0
      %p258 = por %p256, %p257
      %p259 = scmp.ne.s32.totalorder %s251, %s253
      %p260 = scmp.eq.s32.totalorder %s33, 1
      %p261 = por %p259, %p260
      %p262 = scmp.ne.s32.totalorder %s253, %s254
      %p263 = scmp.eq.s32.totalorder %s33, 0
      %p264 = por %p262, %p263
      %p265 = scmp.ne.s32.totalorder %s253, %s254
      %p266 = scmp.eq.s32.totalorder %s34, 1
      %p267 = por %p265, %p266
      %p269 = scmp.ne.s32.totalorder %s254, %s268
      %p270 = scmp.eq.s32.totalorder %s34, 0
      %p271 = por %p269, %p270
      %s273 = sadd.s32 %s272, 1
      %p276 = scmp.eq.s32.totalorder %s28, 1
      %p277 = scmp.ne.s32.totalorder %s272, %s274
      %p278 = scmp.eq.s32.totalorder %s28, 0
      %p279 = por %p277, %p278
      %p280 = scmp.ne.s32.totalorder %s272, %s274
      %p281 = scmp.eq.s32.totalorder %s33, 1
      %p282 = por %p280, %p281
      %p283 = scmp.ne.s32.totalorder %s274, %s275
      %p284 = scmp.eq.s32.totalorder %s33, 0
      %p285 = por %p283, %p284
      %p286 = scmp.ne.s32.totalorder %s274, %s275
      %p287 = scmp.eq.s32.totalorder %s34, 1
      %p288 = por %p286, %p287
      %p290 = scmp.ne.s32.totalorder %s275, %s289
      %p291 = scmp.eq.s32.totalorder %s34, 0
      %p292 = por %p290, %p291
      %s294 = sadd.s32 %s293, 1
      %p297 = scmp.eq.s32.totalorder %s28, 1
      %p298 = scmp.ne.s32.totalorder %s293, %s295
      %p299 = scmp.eq.s32.totalorder %s28, 0
      %p300 = por %p298, %p299
      %p301 = scmp.ne.s32.totalorder %s293, %s295
      %p302 = scmp.eq.s32.totalorder %s33, 1
      %p303 = por %p301, %p302
      %p304 = scmp.ne.s32.totalorder %s295, %s296
      %p305 = scmp.eq.s32.totalorder %s33, 0
      %p306 = por %p304, %p305
      %p307 = scmp.ne.s32.totalorder %s295, %s296
      %p308 = scmp.eq.s32.totalorder %s34, 1
      %p309 = por %p307, %p308
      %p311 = scmp.ne.s32.totalorder %s296, %s310
      %p312 = scmp.eq.s32.totalorder %s34, 0
      %p313 = por %p311, %p312
      %s314 = ssub.s32 %s28, %s35
      %p315 = scmp.eq.s32.totalorder %s314, 0
      %s317 = sadd.s32 %s316, 1
      %s318 = scalar_select %p315, %s316, %s317
      %p321 = pneg %p315
      %p322 = scmp.eq.s32.totalorder %s28, 1
      %p323 = por %p321, %p322
      %p324 = scmp.ne.s32.totalorder %s316, %s319
      %p325 = scmp.eq.s32.totalorder %s28, 0
      %p326 = por %p324, %p325
      %p327 = scmp.ne.s32.totalorder %s316, %s319
      %p328 = scmp.eq.s32.totalorder %s33, 1
      %p329 = por %p327, %p328
      %p330 = scmp.ne.s32.totalorder %s319, %s320
      %p331 = scmp.eq.s32.totalorder %s33, 0
      %p332 = por %p330, %p331
      %p333 = scmp.ne.s32.totalorder %s319, %s320
      %p334 = scmp.eq.s32.totalorder %s34, 1
      %p335 = por %p333, %p334
      %p337 = scmp.ne.s32.totalorder %s320, %s336
      %p338 = scmp.eq.s32.totalorder %s34, 0
      %p339 = por %p337, %p338
      %p340 = scmp.le.s32.totalorder 1, %s28
      %p341 = scmp.lt.s32.totalorder %s28, 3
      %p342 = pnand %p340, %p341
      %p343 = pneg %p342
      // Predicated region
      $region9: #{tpu_custom_call.1} parent=5 // pred_check
        _
      $region10: #{tpu_custom_call.1} parent=5 // pred_check_branch
        %345 = sbr.rel (%p342) target = $region12
      $region11: #{tpu_custom_call.1} parent=5 // pred_region
        %s346 = ssub.s32 %s28, 1
        // Predicated region
        $region13: #{tpu_custom_call.1} parent=11 // pred_check
          %p347 = pneg %p75
        $region14: #{tpu_custom_call.1} parent=11 // pred_check_branch
          %349 = sbr.rel (%p347) target = $region16
        $region15: #{tpu_custom_call.1} parent=11 // pred_region
          %s351 = ssub.s32 16, 16
          %352 = vsyncadd [#allocation7], %s351
          %s354 = sshll.u32 [#allocation6], 4
          %s355 = int_to_ptr.vmem [resolvable:$true] %s354
          %357 = dma.hbm_to_vmem [thread:$0]  %s1, 16, %s355, [#allocation7]
        $region16: #{tpu_custom_call.1} parent=11 // pred_fallthru
          _
        // Predicated region
        $region17: #{tpu_custom_call.1} parent=11 // pred_check
          %p358 = pneg %p96
        $region18: #{tpu_custom_call.1} parent=11 // pred_check_branch
          %360 = sbr.rel (%p358) target = $region20
        $region19: #{tpu_custom_call.1} parent=11 // pred_region
          %s362 = ssub.s32 16, 16
          %363 = vsyncadd [#allocation7], %s362
          %s365 = sshll.u32 [#allocation8], 4
          %s366 = int_to_ptr.vmem [resolvable:$true] %s365
          %368 = dma.hbm_to_vmem [thread:$0]  %s2, 16, %s366, [#allocation7]
        $region20: #{tpu_custom_call.1} parent=11 // pred_fallthru
          _
        // Predicated region
        $region21: #{tpu_custom_call.1} parent=11 // pred_check
          %p369 = pneg %p117
        $region22: #{tpu_custom_call.1} parent=11 // pred_check_branch
          %371 = sbr.rel (%p369) target = $region24
        $region23: #{tpu_custom_call.1} parent=11 // pred_region
          %s373 = ssub.s32 3072, 3072
          %374 = vsyncadd [#allocation10], %s373
          %s375 = sshll.u32 [#allocation9], 4
          %s376 = int_to_ptr.vmem [resolvable:$true] %s375
          %381 = dma.hbm_to_vmem [thread:$0]  %s3, 3072, %s376, [#allocation10], 192, 192, 12
        $region24: #{tpu_custom_call.1} parent=11 // pred_fallthru
          _
        // Predicated region
        $region25: #{tpu_custom_call.1} parent=11 // pred_check
          %p382 = pneg %p138
        $region26: #{tpu_custom_call.1} parent=11 // pred_check_branch
          %384 = sbr.rel (%p382) target = $region28
        $region27: #{tpu_custom_call.1} parent=11 // pred_region
          _
        $region28: #{tpu_custom_call.1} parent=11 // pred_fallthru
          _
        // Predicated region
        $region29: #{tpu_custom_call.1} parent=11 // pred_check
          %p385 = pneg %p159
        $region30: #{tpu_custom_call.1} parent=11 // pred_check_branch
          %387 = sbr.rel (%p385) target = $region32
        $region31: #{tpu_custom_call.1} parent=11 // pred_region
          %s389 = ssub.s32 1024, 1024
          %390 = vsyncadd [#allocation10], %s389
          %s391 = sshll.u32 [#allocation11], 4
          %s392 = int_to_ptr.vmem [resolvable:$true] %s391
          %397 = dma.hbm_to_vmem [thread:$0]  %s5, 1024, %s392, [#allocation10], 64, 64, 4
        $region32: #{tpu_custom_call.1} parent=11 // pred_fallthru
          _
        // Predicated region
        $region33: #{tpu_custom_call.1} parent=11 // pred_check
          %p398 = pneg %p180
        $region34: #{tpu_custom_call.1} parent=11 // pred_check_branch
          %400 = sbr.rel (%p398) target = $region36
        $region35: #{tpu_custom_call.1} parent=11 // pred_region
          _
        $region36: #{tpu_custom_call.1} parent=11 // pred_fallthru
          _
        // Predicated region
        $region37: #{tpu_custom_call.1} parent=11 // pred_check
          %p401 = pneg %p201
        $region38: #{tpu_custom_call.1} parent=11 // pred_check_branch
          %403 = sbr.rel (%p401) target = $region40
        $region39: #{tpu_custom_call.1} parent=11 // pred_region
          _
        $region40: #{tpu_custom_call.1} parent=11 // pred_fallthru
          _
        // Predicated region
        $region41: #{tpu_custom_call.1} parent=11 // pred_check
          %p404 = pneg %p222
        $region42: #{tpu_custom_call.1} parent=11 // pred_check_branch
          %406 = sbr.rel (%p404) target = $region44
        $region43: #{tpu_custom_call.1} parent=11 // pred_region
          _
        $region44: #{tpu_custom_call.1} parent=11 // pred_fallthru
          _
        // Predicated region
        $region45: #{tpu_custom_call.1} parent=11 // pred_check
          %p407 = pneg %p243
        $region46: #{tpu_custom_call.1} parent=11 // pred_check_branch
          %409 = sbr.rel (%p407) target = $region48
        $region47: #{tpu_custom_call.1} parent=11 // pred_region
          %s411 = ssub.s32 4096, 4096
          %412 = vsyncadd [#allocation13], %s411
          %s413 = sshll.u32 [#allocation12], 4
          %s414 = int_to_ptr.vmem [resolvable:$true] %s413
          %419 = dma.hbm_to_vmem [thread:$0]  %s9, 4096, %s414, [#allocation13], 256, 256, 16
        $region48: #{tpu_custom_call.1} parent=11 // pred_fallthru
          _
        // Predicated region
        $region49: #{tpu_custom_call.1} parent=11 // pred_check
          %p420 = pneg %p264
        $region50: #{tpu_custom_call.1} parent=11 // pred_check_branch
          %422 = sbr.rel (%p420) target = $region52
        $region51: #{tpu_custom_call.1} parent=11 // pred_region
          _
        $region52: #{tpu_custom_call.1} parent=11 // pred_fallthru
          _
        // Predicated region
        $region53: #{tpu_custom_call.1} parent=11 // pred_check
          %p423 = pneg %p285
        $region54: #{tpu_custom_call.1} parent=11 // pred_check_branch
          %425 = sbr.rel (%p423) target = $region56
        $region55: #{tpu_custom_call.1} parent=11 // pred_region
          %s427 = ssub.s32 4096, 4096
          %428 = vsyncadd [#allocation13], %s427
          %s429 = sshll.u32 [#allocation14], 4
          %s430 = int_to_ptr.vmem [resolvable:$true] %s429
          %435 = dma.hbm_to_vmem [thread:$0]  %s11, 4096, %s430, [#allocation13], 64, 64, 4
        $region56: #{tpu_custom_call.1} parent=11 // pred_fallthru
          _
        // Predicated region
        $region57: #{tpu_custom_call.1} parent=11 // pred_check
          %p436 = pneg %p306
        $region58: #{tpu_custom_call.1} parent=11 // pred_check_branch
          %438 = sbr.rel (%p436) target = $region60
        $region59: #{tpu_custom_call.1} parent=11 // pred_region
          _
        $region60: #{tpu_custom_call.1} parent=11 // pred_fallthru
          _
      $region12: #{tpu_custom_call.1} parent=5 // pred_fallthru
        _
      %p439 = scmp.lt.s32.totalorder %s28, 2
      // Predicated region
      $region61: #{tpu_custom_call.1} parent=5 // pred_check
        %p440 = pneg %p439
      $region62: #{tpu_custom_call.1} parent=5 // pred_check_branch
        %442 = sbr.rel (%p440) target = $region64
      $region63: #{tpu_custom_call.1} parent=5 // pred_region
        // Predicated region
        $region65: #{tpu_custom_call.1} parent=63 // pred_check
          %p443 = pneg %p48
        $region66: #{tpu_custom_call.1} parent=63 // pred_check_branch
          %445 = sbr.rel (%p443) target = $region68
        $region67: #{tpu_custom_call.1} parent=63 // pred_region
          %s446 = sand.u32 %s38, 1
          %s447 = scalar_lea.sflag [#allocation4], %s446
          %s448 = sand.u32 %s38, 1
          %s449 = smul.addr %s448, 128
          %s450 = scalar_lea.vmem [#allocation3], %s449
          %s451 = smul.u32 16, %s28
          %s453 = ssub.s32 2048, 2048
          %454 = vsyncadd %s447, %s453
          %s455 = smul.addr %s451, 128
          %s456 = scalar_lea.hbm %s0, %s455
          %s457 = sshll.u32 %s450, 4
          %s458 = int_to_ptr.vmem [resolvable:$true] %s457
          %463 = dma.hbm_to_vmem [thread:$0]  %s456, 2048, %s458, %s447, 128, 128, 8
        $region68: #{tpu_custom_call.1} parent=63 // pred_fallthru
          _
      $region64: #{tpu_custom_call.1} parent=5 // pred_fallthru
        _
      %p464 = scmp.le.s32.totalorder 1, %s28
      %p465 = scmp.lt.s32.totalorder %s28, 3
      %p466 = pnand %p464, %p465
      %p467 = pneg %p466
      // Predicated region
      $region69: #{tpu_custom_call.1} parent=5 // pred_check
        _
      $region70: #{tpu_custom_call.1} parent=5 // pred_check_branch
        %469 = sbr.rel (%p466) target = $region72
      $region71: #{tpu_custom_call.1} parent=5 // pred_region
        %s470 = ssub.s32 %s28, 1
        %s471 = sand.u32 %s41, 1
        %s472 = scalar_lea.sflag [#allocation4], %s471
        %s473 = sand.u32 %s41, 1
        %s474 = smul.addr %s473, 128
        %s475 = scalar_lea.vmem [#allocation3], %s474
        // Predicated region
        $region73: #{tpu_custom_call.1} parent=71 // pred_check
          %p476 = pneg %p54
        $region74: #{tpu_custom_call.1} parent=71 // pred_check_branch
          %478 = sbr.rel (%p476) target = $region76
        $region75: #{tpu_custom_call.1} parent=71 // pred_region
          %479 = dma.done %s472, 2048
        $region76: #{tpu_custom_call.1} parent=71 // pred_fallthru
          _
        // Predicated region
        $region77: #{tpu_custom_call.1} parent=71 // pred_check
          %p480 = pneg %p75
        $region78: #{tpu_custom_call.1} parent=71 // pred_check_branch
          %482 = sbr.rel (%p480) target = $region80
        $region79: #{tpu_custom_call.1} parent=71 // pred_region
          %483 = dma.done [#allocation7], 16
        $region80: #{tpu_custom_call.1} parent=71 // pred_fallthru
          _
        // Predicated region
        $region81: #{tpu_custom_call.1} parent=71 // pred_check
          %p484 = pneg %p96
        $region82: #{tpu_custom_call.1} parent=71 // pred_check_branch
          %486 = sbr.rel (%p484) target = $region84
        $region83: #{tpu_custom_call.1} parent=71 // pred_region
          %487 = dma.done [#allocation7], 16
        $region84: #{tpu_custom_call.1} parent=71 // pred_fallthru
          _
        // Predicated region
        $region85: #{tpu_custom_call.1} parent=71 // pred_check
          %p488 = pneg %p117
        $region86: #{tpu_custom_call.1} parent=71 // pred_check_branch
          %490 = sbr.rel (%p488) target = $region88
        $region87: #{tpu_custom_call.1} parent=71 // pred_region
          %491 = dma.done [#allocation10], 3072
        $region88: #{tpu_custom_call.1} parent=71 // pred_fallthru
          _
        // Predicated region
        $region89: #{tpu_custom_call.1} parent=71 // pred_check
          %p492 = pneg %p159
        $region90: #{tpu_custom_call.1} parent=71 // pred_check_branch
          %494 = sbr.rel (%p492) target = $region92
        $region91: #{tpu_custom_call.1} parent=71 // pred_region
          %495 = dma.done [#allocation10], 1024
        $region92: #{tpu_custom_call.1} parent=71 // pred_fallthru
          _
        // Predicated region
        $region93: #{tpu_custom_call.1} parent=71 // pred_check
          %p496 = pneg %p243
        $region94: #{tpu_custom_call.1} parent=71 // pred_check_branch
          %498 = sbr.rel (%p496) target = $region96
        $region95: #{tpu_custom_call.1} parent=71 // pred_region
          %499 = dma.done [#allocation13], 4096
        $region96: #{tpu_custom_call.1} parent=71 // pred_fallthru
          _
        // Predicated region
        $region97: #{tpu_custom_call.1} parent=71 // pred_check
          %p500 = pneg %p285
        $region98: #{tpu_custom_call.1} parent=71 // pred_check_branch
          %502 = sbr.rel (%p500) target = $region100
        $region99: #{tpu_custom_call.1} parent=71 // pred_region
          %503 = dma.done [#allocation13], 4096
        $region100: #{tpu_custom_call.1} parent=71 // pred_fallthru
          _
        %s504 = sand.u32 %s41, 1
        %s505 = scalar_lea.sflag [#allocation4], %s504
        %s506 = sand.u32 %s41, 1
        %s507 = smul.addr %s506, 128
        %s508 = scalar_lea.vmem [#allocation3], %s507
        %p509 = pneg %p54
        %p510 = pneg %p51
        %p511 = pneg %p75
        %p512 = pneg %p72
        %p513 = pneg %p96
        %p514 = pneg %p93
        %p515 = pneg %p117
        %p516 = pneg %p114
        %p517 = pneg %p138
        %p518 = pneg %p135
        %p519 = pneg %p159
        %p520 = pneg %p156
        %p521 = pneg %p180
        %p522 = pneg %p177
        %p523 = pneg %p201
        %p524 = pneg %p198
        %p525 = pneg %p222
        %p526 = pneg %p219
        %p527 = pneg %p243
        %p528 = pneg %p240
        %p529 = pneg %p264
        %p530 = pneg %p261
        %p531 = pneg %p285
        %p532 = pneg %p282
        %p533 = pneg %p306
        %p534 = pneg %p303
        %p535 = pneg %p332
        %p536 = pneg %p329
        %s537 = sand.u32 %s319, 1
        %s538 = scalar_lea.sflag [#allocation5], %s537
        %s539 = sand.u32 %s319, 1
        %s540 = smul.addr %s539, 128
        %s541 = scalar_lea.vmem [#allocation15], %s540
        %s542 = smul.u32 16, %s33
        %s543 = smul.u32 16, %s33
        %v545 = vld [vmem:[%s475] sm:$0xff]
        %v546 = vld [vmem:[%s475 + $0x8] sm:$0xff]
        %v547 = vld [vmem:[%s475 + $0x10] sm:$0xff]
        %v548 = vld [vmem:[%s475 + $0x18] sm:$0xff]
        %v549 = vld [vmem:[%s475 + $0x20] sm:$0xff]
        %v550 = vld [vmem:[%s475 + $0x28] sm:$0xff]
        %v551 = vld [vmem:[%s475 + $0x30] sm:$0xff]
        %v552 = vld [vmem:[%s475 + $0x38] sm:$0xff]
        %v553 = vld [vmem:[%s475 + $0x40] sm:$0xff]
        %v554 = vld [vmem:[%s475 + $0x48] sm:$0xff]
        %v555 = vld [vmem:[%s475 + $0x50] sm:$0xff]
        %v556 = vld [vmem:[%s475 + $0x58] sm:$0xff]
        %v557 = vld [vmem:[%s475 + $0x60] sm:$0xff]
        %v558 = vld [vmem:[%s475 + $0x68] sm:$0xff]
        %v559 = vld [vmem:[%s475 + $0x70] sm:$0xff]
        %v560 = vld [vmem:[%s475 + $0x78] sm:$0xff]
        %561 = vadd.xlane.f32.xlu0 %v545
        %v562 = vpop.xlane.xlu0 %561
        %563 = vadd.xlane.f32.xlu0 %v546
        %v564 = vpop.xlane.xlu0 %563
        %565 = vadd.xlane.f32.xlu0 %v547
        %v566 = vpop.xlane.xlu0 %565
        %567 = vadd.xlane.f32.xlu0 %v548
        %v568 = vpop.xlane.xlu0 %567
        %569 = vadd.xlane.f32.xlu0 %v549
        %v570 = vpop.xlane.xlu0 %569
        %571 = vadd.xlane.f32.xlu0 %v550
        %v572 = vpop.xlane.xlu0 %571
        %573 = vadd.xlane.f32.xlu0 %v551
        %v574 = vpop.xlane.xlu0 %573
        %575 = vadd.xlane.f32.xlu0 %v552
        %v576 = vpop.xlane.xlu0 %575
        %577 = vadd.xlane.f32.xlu0 %v553
        %v578 = vpop.xlane.xlu0 %577
        %579 = vadd.xlane.f32.xlu0 %v554
        %v580 = vpop.xlane.xlu0 %579
        %581 = vadd.xlane.f32.xlu0 %v555
        %v582 = vpop.xlane.xlu0 %581
        %583 = vadd.xlane.f32.xlu0 %v556
        %v584 = vpop.xlane.xlu0 %583
        %585 = vadd.xlane.f32.xlu0 %v557
        %v586 = vpop.xlane.xlu0 %585
        %587 = vadd.xlane.f32.xlu0 %v558
        %v588 = vpop.xlane.xlu0 %587
        %589 = vadd.xlane.f32.xlu0 %v559
        %v590 = vpop.xlane.xlu0 %589
        %591 = vadd.xlane.f32.xlu0 %v560
        %v592 = vpop.xlane.xlu0 %591
        %v593 = vrcp.pop 128.0
        %v594 = vmul.f32 %v562, %v593
        %v595 = vmul.f32 %v564, %v593
        %v596 = vmul.f32 %v566, %v593
        %v597 = vmul.f32 %v568, %v593
        %v598 = vmul.f32 %v570, %v593
        %v599 = vmul.f32 %v572, %v593
        %v600 = vmul.f32 %v574, %v593
        %v601 = vmul.f32 %v576, %v593
        %v602 = vmul.f32 %v578, %v593
        %v603 = vmul.f32 %v580, %v593
        %v604 = vmul.f32 %v582, %v593
        %v605 = vmul.f32 %v584, %v593
        %v606 = vmul.f32 %v586, %v593
        %v607 = vmul.f32 %v588, %v593
        %v608 = vmul.f32 %v590, %v593
        %v609 = vmul.f32 %v592, %v593
        %v610 = vmul.f32 %v545, %v545
        %v611 = vmul.f32 %v546, %v546
        %v612 = vmul.f32 %v547, %v547
        %v613 = vmul.f32 %v548, %v548
        %v614 = vmul.f32 %v549, %v549
        %v615 = vmul.f32 %v550, %v550
        %v616 = vmul.f32 %v551, %v551
        %v617 = vmul.f32 %v552, %v552
        %v618 = vmul.f32 %v553, %v553
        %v619 = vmul.f32 %v554, %v554
        %v620 = vmul.f32 %v555, %v555
        %v621 = vmul.f32 %v556, %v556
        %v622 = vmul.f32 %v557, %v557
        %v623 = vmul.f32 %v558, %v558
        %v624 = vmul.f32 %v559, %v559
        %v625 = vmul.f32 %v560, %v560
        %626 = vadd.xlane.f32.xlu0 %v610
        %v627 = vpop.xlane.xlu0 %626
        %628 = vadd.xlane.f32.xlu0 %v611
        %v629 = vpop.xlane.xlu0 %628
        %630 = vadd.xlane.f32.xlu0 %v612
        %v631 = vpop.xlane.xlu0 %630
        %632 = vadd.xlane.f32.xlu0 %v613
        %v633 = vpop.xlane.xlu0 %632
        %634 = vadd.xlane.f32.xlu0 %v614
        %v635 = vpop.xlane.xlu0 %634
        %636 = vadd.xlane.f32.xlu0 %v615
        %v637 = vpop.xlane.xlu0 %636
        %638 = vadd.xlane.f32.xlu0 %v616
        %v639 = vpop.xlane.xlu0 %638
        %640 = vadd.xlane.f32.xlu0 %v617
        %v641 = vpop.xlane.xlu0 %640
        %642 = vadd.xlane.f32.xlu0 %v618
        %v643 = vpop.xlane.xlu0 %642
        %644 = vadd.xlane.f32.xlu0 %v619
        %v645 = vpop.xlane.xlu0 %644
        %646 = vadd.xlane.f32.xlu0 %v620
        %v647 = vpop.xlane.xlu0 %646
        %648 = vadd.xlane.f32.xlu0 %v621
        %v649 = vpop.xlane.xlu0 %648
        %650 = vadd.xlane.f32.xlu0 %v622
        %v651 = vpop.xlane.xlu0 %650
        %652 = vadd.xlane.f32.xlu0 %v623
        %v653 = vpop.xlane.xlu0 %652
        %654 = vadd.xlane.f32.xlu0 %v624
        %v655 = vpop.xlane.xlu0 %654
        %656 = vadd.xlane.f32.xlu0 %v625
        %v657 = vpop.xlane.xlu0 %656
        %v658 = vmul.f32 %v627, %v593
        %v659 = vmul.f32 %v629, %v593
        %v660 = vmul.f32 %v631, %v593
        %v661 = vmul.f32 %v633, %v593
        %v662 = vmul.f32 %v635, %v593
        %v663 = vmul.f32 %v637, %v593
        %v664 = vmul.f32 %v639, %v593
        %v665 = vmul.f32 %v641, %v593
        %v666 = vmul.f32 %v643, %v593
        %v667 = vmul.f32 %v645, %v593
        %v668 = vmul.f32 %v647, %v593
        %v669 = vmul.f32 %v649, %v593
        %v670 = vmul.f32 %v651, %v593
        %v671 = vmul.f32 %v653, %v593
        %v672 = vmul.f32 %v655, %v593
        %v673 = vmul.f32 %v657, %v593
        %v674 = vmul.f32 %v594, %v594
        %v675 = vmul.f32 %v595, %v595
        %v676 = vmul.f32 %v596, %v596
        %v677 = vmul.f32 %v597, %v597
        %v678 = vmul.f32 %v598, %v598
        %v679 = vmul.f32 %v599, %v599
        %v680 = vmul.f32 %v600, %v600
        %v681 = vmul.f32 %v601, %v601
        %v682 = vmul.f32 %v602, %v602
        %v683 = vmul.f32 %v603, %v603
        %v684 = vmul.f32 %v604, %v604
        %v685 = vmul.f32 %v605, %v605
        %v686 = vmul.f32 %v606, %v606
        %v687 = vmul.f32 %v607, %v607
        %v688 = vmul.f32 %v608, %v608
        %v689 = vmul.f32 %v609, %v609
        %v690 = vsub.f32 %v658, %v674
        %v691 = vsub.f32 %v659, %v675
        %v692 = vsub.f32 %v660, %v676
        %v693 = vsub.f32 %v661, %v677
        %v694 = vsub.f32 %v662, %v678
        %v695 = vsub.f32 %v663, %v679
        %v696 = vsub.f32 %v664, %v680
        %v697 = vsub.f32 %v665, %v681
        %v698 = vsub.f32 %v666, %v682
        %v699 = vsub.f32 %v667, %v683
        %v700 = vsub.f32 %v668, %v684
        %v701 = vsub.f32 %v669, %v685
        %v702 = vsub.f32 %v670, %v686
        %v703 = vsub.f32 %v671, %v687
        %v704 = vsub.f32 %v672, %v688
        %v705 = vsub.f32 %v673, %v689
        %v706 = vsub.f32 %v545, %v594
        %v707 = vsub.f32 %v546, %v595
        %v708 = vsub.f32 %v547, %v596
        %v709 = vsub.f32 %v548, %v597
        %v710 = vsub.f32 %v549, %v598
        %v711 = vsub.f32 %v550, %v599
        %v712 = vsub.f32 %v551, %v600
        %v713 = vsub.f32 %v552, %v601
        %v714 = vsub.f32 %v553, %v602
        %v715 = vsub.f32 %v554, %v603
        %v716 = vsub.f32 %v555, %v604
        %v717 = vsub.f32 %v556, %v605
        %v718 = vsub.f32 %v557, %v606
        %v719 = vsub.f32 %v558, %v607
        %v720 = vsub.f32 %v559, %v608
        %v721 = vsub.f32 %v560, %v609
        %v722 = vadd.f32 %v690, 1e-05
        %v723 = vadd.f32 %v691, 1e-05
        %v724 = vadd.f32 %v692, 1e-05
        %v725 = vadd.f32 %v693, 1e-05
        %v726 = vadd.f32 %v694, 1e-05
        %v727 = vadd.f32 %v695, 1e-05
        %v728 = vadd.f32 %v696, 1e-05
        %v729 = vadd.f32 %v697, 1e-05
        %v730 = vadd.f32 %v698, 1e-05
        %v731 = vadd.f32 %v699, 1e-05
        %v732 = vadd.f32 %v700, 1e-05
        %v733 = vadd.f32 %v701, 1e-05
        %v734 = vadd.f32 %v702, 1e-05
        %v735 = vadd.f32 %v703, 1e-05
        %v736 = vadd.f32 %v704, 1e-05
        %v737 = vadd.f32 %v705, 1e-05
        %v738 = vrsqrt.pop %v722
        %v739 = vrsqrt.pop %v723
        %v740 = vrsqrt.pop %v724
        %v741 = vrsqrt.pop %v725
        %v742 = vrsqrt.pop %v726
        %v743 = vrsqrt.pop %v727
        %v744 = vrsqrt.pop %v728
        %v745 = vrsqrt.pop %v729
        %v746 = vrsqrt.pop %v730
        %v747 = vrsqrt.pop %v731
        %v748 = vrsqrt.pop %v732
        %v749 = vrsqrt.pop %v733
        %v750 = vrsqrt.pop %v734
        %v751 = vrsqrt.pop %v735
        %v752 = vrsqrt.pop %v736
        %v753 = vrsqrt.pop %v737
        %v754 = vmul.f32 %v706, %v738
        %v755 = vmul.f32 %v707, %v739
        %v756 = vmul.f32 %v708, %v740
        %v757 = vmul.f32 %v709, %v741
        %v758 = vmul.f32 %v710, %v742
        %v759 = vmul.f32 %v711, %v743
        %v760 = vmul.f32 %v712, %v744
        %v761 = vmul.f32 %v713, %v745
        %v762 = vmul.f32 %v714, %v746
        %v763 = vmul.f32 %v715, %v747
        %v764 = vmul.f32 %v716, %v748
        %v765 = vmul.f32 %v717, %v749
        %v766 = vmul.f32 %v718, %v750
        %v767 = vmul.f32 %v719, %v751
        %v768 = vmul.f32 %v720, %v752
        %v769 = vmul.f32 %v721, %v753
        %v770 = vld [vmem:[#allocation6] sm:$0x1]
        %v772 = vlaneseq
        %v773 = vshrl.u32 %v772, 7
        %v774 = vsub.s32 0, %v773
        %v775 = vrot.slane %v770, %v774
        %v777 = vmul.f32 %v754, %v775
        %v778 = vmul.f32 %v755, %v775
        %v779 = vmul.f32 %v756, %v775
        %v780 = vmul.f32 %v757, %v775
        %v781 = vmul.f32 %v758, %v775
        %v782 = vmul.f32 %v759, %v775
        %v783 = vmul.f32 %v760, %v775
        %v784 = vmul.f32 %v761, %v775
        %v785 = vmul.f32 %v762, %v775
        %v786 = vmul.f32 %v763, %v775
        %v787 = vmul.f32 %v764, %v775
        %v788 = vmul.f32 %v765, %v775
        %v789 = vmul.f32 %v766, %v775
        %v790 = vmul.f32 %v767, %v775
        %v791 = vmul.f32 %v768, %v775
        %v792 = vmul.f32 %v769, %v775
        %v793 = vld [vmem:[#allocation8] sm:$0x1]
        %v795 = vlaneseq
        %v796 = vshrl.u32 %v795, 7
        %v797 = vsub.s32 0, %v796
        %v798 = vrot.slane %v793, %v797
        %v800 = vadd.f32 %v777, %v798
        %v801 = vadd.f32 %v778, %v798
        %v802 = vadd.f32 %v779, %v798
        %v803 = vadd.f32 %v780, %v798
        %v804 = vadd.f32 %v781, %v798
        %v805 = vadd.f32 %v782, %v798
        %v806 = vadd.f32 %v783, %v798
        %v807 = vadd.f32 %v784, %v798
        %v808 = vadd.f32 %v785, %v798
        %v809 = vadd.f32 %v786, %v798
        %v810 = vadd.f32 %v787, %v798
        %v811 = vadd.f32 %v788, %v798
        %v812 = vadd.f32 %v789, %v798
        %v813 = vadd.f32 %v790, %v798
        %v814 = vadd.f32 %v791, %v798
        %v815 = vadd.f32 %v792, %v798
        %v816 = vpack.c.bf16 %v801, %v800
        %v817 = vpack.c.bf16 %v803, %v802
        %v818 = vpack.c.bf16 %v805, %v804
        %v819 = vpack.c.bf16 %v807, %v806
        %v820 = vpack.c.bf16 %v809, %v808
        %v821 = vpack.c.bf16 %v811, %v810
        %v822 = vpack.c.bf16 %v813, %v812
        %v823 = vpack.c.bf16 %v815, %v814
        %v824 = vld [vmem:[#allocation9] sm:$0xff]
        %v825 = vld [vmem:[#allocation9 + $0x8] sm:$0xf]
        %v826 = vld [vmem:[#allocation9 + $0xc] sm:$0xff]
        %v827 = vld [vmem:[#allocation9 + $0x14] sm:$0xf]
        %v828 = vld [vmem:[#allocation9 + $0x18] sm:$0xff]
        %v829 = vld [vmem:[#allocation9 + $0x20] sm:$0xf]
        %v830 = vld [vmem:[#allocation9 + $0x24] sm:$0xff]
        %v831 = vld [vmem:[#allocation9 + $0x2c] sm:$0xf]
        %v832 = vld [vmem:[#allocation9 + $0x30] sm:$0xff]
        %v833 = vld [vmem:[#allocation9 + $0x38] sm:$0xf]
        %v834 = vld [vmem:[#allocation9 + $0x3c] sm:$0xff]
        %v835 = vld [vmem:[#allocation9 + $0x44] sm:$0xf]
        %v836 = vld [vmem:[#allocation9 + $0x48] sm:$0xff]
        %v837 = vld [vmem:[#allocation9 + $0x50] sm:$0xf]
        %v838 = vld [vmem:[#allocation9 + $0x54] sm:$0xff]
        %v839 = vld [vmem:[#allocation9 + $0x5c] sm:$0xf]
        %v840 = vld [vmem:[#allocation9 + $0x60] sm:$0xff]
        %v841 = vld [vmem:[#allocation9 + $0x68] sm:$0xf]
        %v842 = vld [vmem:[#allocation9 + $0x6c] sm:$0xff]
        %v843 = vld [vmem:[#allocation9 + $0x74] sm:$0xf]
        %v844 = vld [vmem:[#allocation9 + $0x78] sm:$0xff]
        %v845 = vld [vmem:[#allocation9 + $0x80] sm:$0xf]
        %v846 = vld [vmem:[#allocation9 + $0x84] sm:$0xff]
        %v847 = vld [vmem:[#allocation9 + $0x8c] sm:$0xf]
        %v848 = vld [vmem:[#allocation9 + $0x90] sm:$0xff]
        %v849 = vld [vmem:[#allocation9 + $0x98] sm:$0xf]
        %v850 = vld [vmem:[#allocation9 + $0x9c] sm:$0xff]
        %v851 = vld [vmem:[#allocation9 + $0xa4] sm:$0xf]
        %v852 = vld [vmem:[#allocation9 + $0xa8] sm:$0xff]
        %v853 = vld [vmem:[#allocation9 + $0xb0] sm:$0xf]
        %v854 = vld [vmem:[#allocation9 + $0xb4] sm:$0xff]
        %v855 = vld [vmem:[#allocation9 + $0xbc] sm:$0xf]
        %v856 = vld [vmem:[%s4] sm:$0x7]
        %v858 = vlaneseq
        %v859 = vshrl.u32 %v858, 7
        %v860 = vsub.s32 0, %v859
        %v861 = vrot.slane %v856, %v860
        %v862 = vlaneseq
        %v863 = vshrl.u32 %v862, 7
        %v864 = vsub.s32 1, %v863
        %v865 = vrot.slane %v856, %v864
        %v866 = vlaneseq
        %v867 = vshrl.u32 %v866, 7
        %v868 = vsub.s32 2, %v867
        %v869 = vrot.slane %v856, %v868
        %v905 = vunpack.c.l.b16 %v824
        %v906 = vunpack.c.h.b16 %v824
        %v907 = vunpack.c.l.b16 %v825
        %v908 = vunpack.c.l.b16 %v826
        %v909 = vunpack.c.h.b16 %v826
        %v910 = vunpack.c.l.b16 %v827
        %v911 = vunpack.c.l.b16 %v828
        %v912 = vunpack.c.h.b16 %v828
        %v913 = vunpack.c.l.b16 %v829
        %v914 = vunpack.c.l.b16 %v830
        %v915 = vunpack.c.h.b16 %v830
        %v916 = vunpack.c.l.b16 %v831
        %v917 = vunpack.c.l.b16 %v832
        %v918 = vunpack.c.h.b16 %v832
        %v919 = vunpack.c.l.b16 %v833
        %v920 = vunpack.c.l.b16 %v834
        %v921 = vunpack.c.h.b16 %v834
        %v922 = vunpack.c.l.b16 %v835
        %v923 = vunpack.c.l.b16 %v836
        %v924 = vunpack.c.h.b16 %v836
        %v925 = vunpack.c.l.b16 %v837
        %v926 = vunpack.c.l.b16 %v838
        %v927 = vunpack.c.h.b16 %v838
        %v928 = vunpack.c.l.b16 %v839
        %v929 = vunpack.c.l.b16 %v840
        %v930 = vunpack.c.h.b16 %v840
        %v931 = vunpack.c.l.b16 %v841
        %v932 = vunpack.c.l.b16 %v842
        %v933 = vunpack.c.h.b16 %v842
        %v934 = vunpack.c.l.b16 %v843
        %v935 = vunpack.c.l.b16 %v844
        %v936 = vunpack.c.h.b16 %v844
        %v937 = vunpack.c.l.b16 %v845
        %v938 = vunpack.c.l.b16 %v846
        %v939 = vunpack.c.h.b16 %v846
        %v940 = vunpack.c.l.b16 %v847
        %v941 = vunpack.c.l.b16 %v848
        %v942 = vunpack.c.h.b16 %v848
        %v943 = vunpack.c.l.b16 %v849
        %v944 = vunpack.c.l.b16 %v850
        %v945 = vunpack.c.h.b16 %v850
        %v946 = vunpack.c.l.b16 %v851
        %v947 = vunpack.c.l.b16 %v852
        %v948 = vunpack.c.h.b16 %v852
        %v949 = vunpack.c.l.b16 %v853
        %v950 = vunpack.c.l.b16 %v854
        %v951 = vunpack.c.h.b16 %v854
        %v952 = vunpack.c.l.b16 %v855
        %v953 = vpack.c.b16 %v908, %v905
        %v954 = vpack.c.b16 %v909, %v906
        %v955 = vpack.c.b16 %v910, %v907
        %v956 = vpack.c.b16 %v914, %v911
        %v957 = vpack.c.b16 %v915, %v912
        %v958 = vpack.c.b16 %v916, %v913
        %v959 = vpack.c.b16 %v920, %v917
        %v960 = vpack.c.b16 %v921, %v918
        %v961 = vpack.c.b16 %v922, %v919
        %v962 = vpack.c.b16 %v926, %v923
        %v963 = vpack.c.b16 %v927, %v924
        %v964 = vpack.c.b16 %v928, %v925
        %v965 = vpack.c.b16 %v932, %v929
        %v966 = vpack.c.b16 %v933, %v930
        %v967 = vpack.c.b16 %v934, %v931
        %v968 = vpack.c.b16 %v938, %v935
        %v969 = vpack.c.b16 %v939, %v936
        %v970 = vpack.c.b16 %v940, %v937
        %v971 = vpack.c.b16 %v944, %v941
        %v972 = vpack.c.b16 %v945, %v942
        %v973 = vpack.c.b16 %v946, %v943
        %v974 = vpack.c.b16 %v950, %v947
        %v975 = vpack.c.b16 %v951, %v948
        %v976 = vpack.c.b16 %v952, %v949
        %1001 = vmatprep.subr.bf16.mxu0 %v954
        %1002 = vmatpush1.bf16.msra.mxu0 %v953
        %1003 = vmatprep.subr.bf16.mxu0 %v957
        %1004 = vmatpush1.bf16.msra.mxu0 %v956
        %1005 = vmatprep.subr.bf16.mxu0 %v960
        %1006 = vmatpush1.bf16.msra.mxu0 %v959
        %1007 = vmatprep.subr.bf16.mxu0 %v963
        %1008 = vmatpush1.bf16.msra.mxu0 %v962
        %1009 = vmatprep.subr.bf16.mxu0 %v966
        %1010 = vmatpush1.bf16.msra.mxu0 %v965
        %1011 = vmatprep.subr.bf16.mxu0 %v969
        %1012 = vmatpush1.bf16.msra.mxu0 %v968
        %1013 = vmatprep.subr.bf16.mxu0 %v972
        %1014 = vmatpush1.bf16.msra.mxu0 %v971
        %1015 = vmatprep.subr.bf16.mxu0 %v975
        %1016 = vmatpush1.bf16.msra.mxu0 %v974
        %1017 = vmatprep.subr.bf16.mxu0 0
        %1018 = vmatpush1.bf16.msra.mxu0 0
        %1019 = vmatprep.subr.bf16.mxu0 0
        %1020 = vmatpush1.bf16.msra.mxu0 0
        %1021 = vmatprep.subr.bf16.mxu0 0
        %1022 = vmatpush1.bf16.msra.mxu0 0
        %1023 = vmatprep.subr.bf16.mxu0 0
        %1024 = vmatpush1.bf16.msra.mxu0 0
        %1025 = vmatprep.subr.bf16.mxu0 0
        %1026 = vmatpush1.bf16.msra.mxu0 0
        %1027 = vmatprep.subr.bf16.mxu0 0
        %1028 = vmatpush1.bf16.msra.mxu0 0
        %1029 = vmatprep.subr.bf16.mxu0 0
        %1030 = vmatpush1.bf16.msra.mxu0 0
        %1031 = vmatprep.subr.bf16.mxu0 0
        %1032 = vmatpush1.bf16.msra.mxu0 0
        %1033 = vmatprep.mubr.bf16.mxu0 0
        %1034 = vmatmul.mubr.bf16.gmra.mrb[0].mxu0 %v816
        %v1035 = vpop.f32.mrb[0].mxu0
        %v1036 = vadd.f32 %v861, %v1035
        %v1037 = vpop.f32.mrb[0].mxu0
        %v1038 = vadd.f32 %v865, %v1037
        %v1039 = vpop.f32.mrb[0].mxu0
        %v1040 = vadd.f32 %v861, %v1039
        %v1041 = vpop.f32.mrb[0].mxu0
        %v1042 = vadd.f32 %v865, %v1041
        %1043 = vmatprep.mubr.bf16.mxu0 0
        %1044 = vmatmul.mubr.bf16.gmra.mrb[0].mxu0 %v817
        %v1045 = vpop.f32.mrb[0].mxu0
        %v1046 = vadd.f32 %v861, %v1045
        %v1047 = vpop.f32.mrb[0].mxu0
        %v1048 = vadd.f32 %v865, %v1047
        %v1049 = vpop.f32.mrb[0].mxu0
        %v1050 = vadd.f32 %v861, %v1049
        %v1051 = vpop.f32.mrb[0].mxu0
        %v1052 = vadd.f32 %v865, %v1051
        %1053 = vmatprep.mubr.bf16.mxu0 0
        %1054 = vmatmul.mubr.bf16.gmra.mrb[0].mxu0 %v818
        %v1055 = vpop.f32.mrb[0].mxu0
        %v1056 = vadd.f32 %v861, %v1055
        %v1057 = vpop.f32.mrb[0].mxu0
        %v1058 = vadd.f32 %v865, %v1057
        %v1059 = vpop.f32.mrb[0].mxu0
        %v1060 = vadd.f32 %v861, %v1059
        %v1061 = vpop.f32.mrb[0].mxu0
        %v1062 = vadd.f32 %v865, %v1061
        %1063 = vmatprep.mubr.bf16.mxu0 0
        %1064 = vmatmul.mubr.bf16.gmra.mrb[0].mxu0 %v819
        %v1065 = vpop.f32.mrb[0].mxu0
        %v1066 = vadd.f32 %v861, %v1065
        %v1067 = vpop.f32.mrb[0].mxu0
        %v1068 = vadd.f32 %v865, %v1067
        %v1069 = vpop.f32.mrb[0].mxu0
        %v1070 = vadd.f32 %v861, %v1069
        %v1071 = vpop.f32.mrb[0].mxu0
        %v1072 = vadd.f32 %v865, %v1071
        %1073 = vmatprep.mubr.bf16.mxu0 0
        %1074 = vmatmul.mubr.bf16.gmra.mrb[0].mxu0 %v820
        %v1075 = vpop.f32.mrb[0].mxu0
        %v1076 = vadd.f32 %v861, %v1075
        %v1077 = vpop.f32.mrb[0].mxu0
        %v1078 = vadd.f32 %v865, %v1077
        %v1079 = vpop.f32.mrb[0].mxu0
        %v1080 = vadd.f32 %v861, %v1079
        %v1081 = vpop.f32.mrb[0].mxu0
        %v1082 = vadd.f32 %v865, %v1081
        %1083 = vmatprep.mubr.bf16.mxu0 0
        %1084 = vmatmul.mubr.bf16.gmra.mrb[0].mxu0 %v821
        %v1085 = vpop.f32.mrb[0].mxu0
        %v1086 = vadd.f32 %v861, %v1085
        %v1087 = vpop.f32.mrb[0].mxu0
        %v1088 = vadd.f32 %v865, %v1087
        %v1089 = vpop.f32.mrb[0].mxu0
        %v1090 = vadd.f32 %v861, %v1089
        %v1091 = vpop.f32.mrb[0].mxu0
        %v1092 = vadd.f32 %v865, %v1091
        %1093 = vmatprep.mubr.bf16.mxu0 0
        %1094 = vmatmul.mubr.bf16.gmra.mrb[0].mxu0 %v822
        %v1095 = vpop.f32.mrb[0].mxu0
        %v1096 = vadd.f32 %v861, %v1095
        %v1097 = vpop.f32.mrb[0].mxu0
        %v1098 = vadd.f32 %v865, %v1097
        %v1099 = vpop.f32.mrb[0].mxu0
        %v1100 = vadd.f32 %v861, %v1099
        %v1101 = vpop.f32.mrb[0].mxu0
        %v1102 = vadd.f32 %v865, %v1101
        %1103 = vmatprep.mubr.bf16.mxu0 0
        %1104 = vmatmul.mubr.bf16.gmra.mrb[0].mxu0 %v823
        %v1105 = vpop.f32.mrb[0].mxu0
        %v1106 = vadd.f32 %v861, %v1105
        %v1107 = vpop.f32.mrb[0].mxu0
        %v1108 = vadd.f32 %v865, %v1107
        %v1109 = vpop.f32.mrb[0].mxu0
        %v1110 = vadd.f32 %v861, %v1109
        %v1111 = vpop.f32.mrb[0].mxu0
        %v1112 = vadd.f32 %v865, %v1111
        %1113 = vdwg.mxu0
        %1114 = vmatprep.subr.bf16.mxu0 0
        %1115 = vmatpush1.bf16.msra.mxu0 %v955
        %1116 = vmatprep.subr.bf16.mxu0 0
        %1117 = vmatpush1.bf16.msra.mxu0 %v958
        %1118 = vmatprep.subr.bf16.mxu0 0
        %1119 = vmatpush1.bf16.msra.mxu0 %v961
        %1120 = vmatprep.subr.bf16.mxu0 0
        %1121 = vmatpush1.bf16.msra.mxu0 %v964
        %1122 = vmatprep.subr.bf16.mxu0 0
        %1123 = vmatpush1.bf16.msra.mxu0 %v967
        %1124 = vmatprep.subr.bf16.mxu0 0
        %1125 = vmatpush1.bf16.msra.mxu0 %v970
        %1126 = vmatprep.subr.bf16.mxu0 0
        %1127 = vmatpush1.bf16.msra.mxu0 %v973
        %1128 = vmatprep.subr.bf16.mxu0 0
        %1129 = vmatpush1.bf16.msra.mxu0 %v976
        %1130 = vmatprep.subr.bf16.mxu0 0
        %1131 = vmatpush1.bf16.msra.mxu0 0
        %1132 = vmatprep.subr.bf16.mxu0 0
        %1133 = vmatpush1.bf16.msra.mxu0 0
        %1134 = vmatprep.subr.bf16.mxu0 0
        %1135 = vmatpush1.bf16.msra.mxu0 0
        %1136 = vmatprep.subr.bf16.mxu0 0
        %1137 = vmatpush1.bf16.msra.mxu0 0
        %1138 = vmatprep.subr.bf16.mxu0 0
        %1139 = vmatpush1.bf16.msra.mxu0 0
        %1140 = vmatprep.subr.bf16.mxu0 0
        %1141 = vmatpush1.bf16.msra.mxu0 0
        %1142 = vmatprep.subr.bf16.mxu0 0
        %1143 = vmatpush1.bf16.msra.mxu0 0
        %1144 = vmatprep.subr.bf16.mxu0 0
        %1145 = vmatpush1.bf16.msra.mxu0 0
        %1146 = vmatprep.mubr.bf16.mxu0 0
        %1147 = vmatmul.mubr.bf16.gmra.mrb[0].mxu0 %v816
        %v1148 = vpop.f32.mrb[0].mxu0
        %v1149 = vadd.f32 %v869, %v1148
        %v1150 = vpop.f32.mrb[0].mxu0
        %v1151 = vpop.f32.mrb[0].mxu0
        %v1152 = vadd.f32 %v869, %v1151
        %v1153 = vpop.f32.mrb[0].mxu0
        %1154 = vmatprep.mubr.bf16.mxu0 0
        %1155 = vmatmul.mubr.bf16.gmra.mrb[0].mxu0 %v817
        %v1156 = vpop.f32.mrb[0].mxu0
        %v1157 = vadd.f32 %v869, %v1156
        %v1158 = vpop.f32.mrb[0].mxu0
        %v1159 = vpop.f32.mrb[0].mxu0
        %v1160 = vadd.f32 %v869, %v1159
        %v1161 = vpop.f32.mrb[0].mxu0
        %1162 = vmatprep.mubr.bf16.mxu0 0
        %1163 = vmatmul.mubr.bf16.gmra.mrb[0].mxu0 %v818
        %v1164 = vpop.f32.mrb[0].mxu0
        %v1165 = vadd.f32 %v869, %v1164
        %v1166 = vpop.f32.mrb[0].mxu0
        %v1167 = vpop.f32.mrb[0].mxu0
        %v1168 = vadd.f32 %v869, %v1167
        %v1169 = vpop.f32.mrb[0].mxu0
        %1170 = vmatprep.mubr.bf16.mxu0 0
        %1171 = vmatmul.mubr.bf16.gmra.mrb[0].mxu0 %v819
        %v1172 = vpop.f32.mrb[0].mxu0
        %v1173 = vadd.f32 %v869, %v1172
        %v1174 = vpop.f32.mrb[0].mxu0
        %v1175 = vpop.f32.mrb[0].mxu0
        %v1176 = vadd.f32 %v869, %v1175
        %v1177 = vpop.f32.mrb[0].mxu0
        %1178 = vmatprep.mubr.bf16.mxu0 0
        %1179 = vmatmul.mubr.bf16.gmra.mrb[0].mxu0 %v820
        %v1180 = vpop.f32.mrb[0].mxu0
        %v1181 = vadd.f32 %v869, %v1180
        %v1182 = vpop.f32.mrb[0].mxu0
        %v1183 = vpop.f32.mrb[0].mxu0
        %v1184 = vadd.f32 %v869, %v1183
        %v1185 = vpop.f32.mrb[0].mxu0
        %1186 = vmatprep.mubr.bf16.mxu0 0
        %1187 = vmatmul.mubr.bf16.gmra.mrb[0].mxu0 %v821
        %v1188 = vpop.f32.mrb[0].mxu0
        %v1189 = vadd.f32 %v869, %v1188
        %v1190 = vpop.f32.mrb[0].mxu0
        %v1191 = vpop.f32.mrb[0].mxu0
        %v1192 = vadd.f32 %v869, %v1191
        %v1193 = vpop.f32.mrb[0].mxu0
        %1194 = vmatprep.mubr.bf16.mxu0 0
        %1195 = vmatmul.mubr.bf16.gmra.mrb[0].mxu0 %v822
        %v1196 = vpop.f32.mrb[0].mxu0
        %v1197 = vadd.f32 %v869, %v1196
        %v1198 = vpop.f32.mrb[0].mxu0
        %v1199 = vpop.f32.mrb[0].mxu0
        %v1200 = vadd.f32 %v869, %v1199
        %v1201 = vpop.f32.mrb[0].mxu0
        %1202 = vmatprep.mubr.bf16.mxu0 0
        %1203 = vmatmul.mubr.bf16.gmra.mrb[0].mxu0 %v823
        %v1204 = vpop.f32.mrb[0].mxu0
        %v1205 = vadd.f32 %v869, %v1204
        %v1206 = vpop.f32.mrb[0].mxu0
        %v1207 = vpop.f32.mrb[0].mxu0
        %v1208 = vadd.f32 %v869, %v1207
        %v1209 = vpop.f32.mrb[0].mxu0
        %1210 = vdwg.mxu0
        %v1211 = vpack.c.bf16 %v1040, %v1036
        %v1212 = vpack.c.bf16 %v1042, %v1038
        %v1213 = vpack.c.bf16 %v1152, %v1149
        %v1214 = vpack.c.bf16 %v1050, %v1046
        %v1215 = vpack.c.bf16 %v1052, %v1048
        %v1216 = vpack.c.bf16 %v1160, %v1157
        %v1217 = vpack.c.bf16 %v1060, %v1056
        %v1218 = vpack.c.bf16 %v1062, %v1058
        %v1219 = vpack.c.bf16 %v1168, %v1165
        %v1220 = vpack.c.bf16 %v1070, %v1066
        %v1221 = vpack.c.bf16 %v1072, %v1068
        %v1222 = vpack.c.bf16 %v1176, %v1173
        %v1223 = vpack.c.bf16 %v1080, %v1076
        %v1224 = vpack.c.bf16 %v1082, %v1078
        %v1225 = vpack.c.bf16 %v1184, %v1181
        %v1226 = vpack.c.bf16 %v1090, %v1086
        %v1227 = vpack.c.bf16 %v1092, %v1088
        %v1228 = vpack.c.bf16 %v1192, %v1189
        %v1229 = vpack.c.bf16 %v1100, %v1096
        %v1230 = vpack.c.bf16 %v1102, %v1098
        %v1231 = vpack.c.bf16 %v1200, %v1197
        %v1232 = vpack.c.bf16 %v1110, %v1106
        %v1233 = vpack.c.bf16 %v1112, %v1108
        %v1234 = vpack.c.bf16 %v1208, %v1205
        %vm1235 = vcmask 523264
        %v1237 = vsel %vm1235, %v1211, 0
        %v1240 = vsel %vm1235, %v1212, 0
        %1242 = vmatprep.subr.bf16.mxu0 0
        %1243 = vmatpush1.bf16.xpose.msra.mxu0 %v1240
        %1244 = vmatprep.subr.bf16.mxu0 0
        %1245 = vmatpush1.bf16.xpose.msra.mxu0 0
        %1246 = vmatprep.subr.bf16.mxu0 0
        %1247 = vmatpush1.bf16.xpose.msra.mxu0 0
        %1248 = vmatprep.subr.bf16.mxu0 0
        %1249 = vmatpush1.bf16.xpose.msra.mxu0 0
        %1250 = vmatprep.subr.bf16.mxu0 0
        %1251 = vmatpush1.bf16.xpose.msra.mxu0 0
        %1252 = vmatprep.subr.bf16.mxu0 0
        %1253 = vmatpush1.bf16.xpose.msra.mxu0 0
        %1254 = vmatprep.subr.bf16.mxu0 0
        %1255 = vmatpush1.bf16.xpose.msra.mxu0 0
        %1256 = vmatprep.subr.bf16.mxu0 0
        %1257 = vmatpush1.bf16.xpose.msra.mxu0 0
        %1258 = vmatprep.subr.bf16.mxu0 0
        %1259 = vmatpush1.bf16.xpose.msra.mxu0 0
        %1260 = vmatprep.subr.bf16.mxu0 0
        %1261 = vmatpush1.bf16.xpose.msra.mxu0 0
        %1262 = vmatprep.subr.bf16.mxu0 0
        %1263 = vmatpush1.bf16.xpose.msra.mxu0 0
        %1264 = vmatprep.subr.bf16.mxu0 0
        %1265 = vmatpush1.bf16.xpose.msra.mxu0 0
        %1266 = vmatprep.subr.bf16.mxu0 0
        %1267 = vmatpush1.bf16.xpose.msra.mxu0 0
        %1268 = vmatprep.subr.bf16.mxu0 0
        %1269 = vmatpush1.bf16.xpose.msra.mxu0 0
        %1270 = vmatprep.subr.bf16.mxu0 0
        %1271 = vmatpush1.bf16.xpose.msra.mxu0 0
        %1272 = vmatprep.subr.bf16.mxu0 0
        %1273 = vmatpush1.bf16.xpose.msra.mxu0 0
        %1274 = vmatprep.mubr.bf16.mxu0 0
        %1275 = vmatmul.mubr.bf16.gmra.mrb[0].mxu0 %v1237
        %v1276 = vpop.f32.mrb[0].mxu0
        %v1277 = vadd.f32 0.0, %v1276
        %v1278 = vpop.f32.mrb[0].mxu0
        %v1279 = vpop.f32.mrb[0].mxu0
        %v1280 = vadd.f32 0.0, %v1279
        %v1281 = vpop.f32.mrb[0].mxu0
        %1282 = vdwg.mxu0
        %vm1283 = vcmask 130048
        %v1284 = vsel %vm1283, %v1277, -inf
        %1285 = vmax.xlane.f32.xlu0 %v1284
        %v1286 = vpop.xlane.xlu0 %1285
        %v1287 = vsel %vm1283, %v1280, -inf
        %1288 = vmax.xlane.f32.xlu0 %v1287
        %v1289 = vpop.xlane.xlu0 %1288
        %v1290 = vsub.f32 %v1277, %v1286
        %v1291 = vsub.f32 %v1280, %v1289
        %v1292 = vmul.f32 %v1290, 1.442695
        %v1293 = vpow.pop %v1292
        %v1294 = vmul.f32 %v1291, 1.442695
        %v1295 = vpow.pop %v1294
        %v1296 = vsel %vm1283, %v1293, 0.0
        %1297 = vadd.xlane.f32.xlu0 %v1296
        %v1298 = vpop.xlane.xlu0 %1297
        %v1299 = vsel %vm1283, %v1295, 0.0
        %1300 = vadd.xlane.f32.xlu0 %v1299
        %v1301 = vpop.xlane.xlu0 %1300
        %v1302 = vpack.c.bf16 %v1295, %v1293
        %v1304 = vsel %vm1283, %v1302, 0
        %1306 = vmatprep.subr.bf16.mxu0 0
        %1307 = vmatpush1.bf16.msra.mxu0 %v1213
        %1308 = vmatprep.subr.bf16.mxu0 0
        %1309 = vmatpush1.bf16.msra.mxu0 0
        %1310 = vmatprep.subr.bf16.mxu0 0
        %1311 = vmatpush1.bf16.msra.mxu0 0
        %1312 = vmatprep.subr.bf16.mxu0 0
        %1313 = vmatpush1.bf16.msra.mxu0 0
        %1314 = vmatprep.subr.bf16.mxu0 0
        %1315 = vmatpush1.bf16.msra.mxu0 0
        %1316 = vmatprep.subr.bf16.mxu0 0
        %1317 = vmatpush1.bf16.msra.mxu0 0
        %1318 = vmatprep.subr.bf16.mxu0 0
        %1319 = vmatpush1.bf16.msra.mxu0 0
        %1320 = vmatprep.subr.bf16.mxu0 0
        %1321 = vmatpush1.bf16.msra.mxu0 0
        %1322 = vmatprep.subr.bf16.mxu0 0
        %1323 = vmatpush1.bf16.msra.mxu0 0
        %1324 = vmatprep.subr.bf16.mxu0 0
        %1325 = vmatpush1.bf16.msra.mxu0 0
        %1326 = vmatprep.subr.bf16.mxu0 0
        %1327 = vmatpush1.bf16.msra.mxu0 0
        %1328 = vmatprep.subr.bf16.mxu0 0
        %1329 = vmatpush1.bf16.msra.mxu0 0
        %1330 = vmatprep.subr.bf16.mxu0 0
        %1331 = vmatpush1.bf16.msra.mxu0 0
        %1332 = vmatprep.subr.bf16.mxu0 0
        %1333 = vmatpush1.bf16.msra.mxu0 0
        %1334 = vmatprep.subr.bf16.mxu0 0
        %1335 = vmatpush1.bf16.msra.mxu0 0
        %1336 = vmatprep.subr.bf16.mxu0 0
        %1337 = vmatpush1.bf16.msra.mxu0 0
        %1338 = vmatprep.mubr.bf16.mxu0 0
        %1339 = vmatmul.mubr.bf16.gmra.mrb[0].mxu0 %v1304
        %v1340 = vpop.f32.mrb[0].mxu0
        %v1341 = vadd.f32 0.0, %v1340
        %v1342 = vpop.f32.mrb[0].mxu0
        %v1343 = vpop.f32.mrb[0].mxu0
        %v1344 = vadd.f32 0.0, %v1343
        %v1345 = vpop.f32.mrb[0].mxu0
        %1346 = vdwg.mxu0
        %v1347 = vrcp.pop %v1298
        %v1348 = vrcp.pop %v1301
        %v1349 = vmul.f32 %v1341, %v1347
        %v1350 = vmul.f32 %v1344, %v1348
        %v1351 = vpack.c.bf16 %v1350, %v1349
        %1352 = vst.msk [vmem:[#allocation2] sm:$0xff] %vm1235, %v1351
        %1354 = vrot.lane.b32.xlu0 %v1211, 64
        %v1355 = vpop.permute.xlu0 %1354
        %1357 = vrot.lane.b32.xlu0 %v1212, 64
        %v1358 = vpop.permute.xlu0 %1357
        %v1360 = vsel %vm1235, %v1355, 0
        %v1363 = vsel %vm1235, %v1358, 0
        %1365 = vmatprep.subr.bf16.mxu0 0
        %1366 = vmatpush1.bf16.xpose.msra.mxu0 %v1363
        %1367 = vmatprep.subr.bf16.mxu0 0
        %1368 = vmatpush1.bf16.xpose.msra.mxu0 0
        %1369 = vmatprep.subr.bf16.mxu0 0
        %1370 = vmatpush1.bf16.xpose.msra.mxu0 0
        %1371 = vmatprep.subr.bf16.mxu0 0
        %1372 = vmatpush1.bf16.xpose.msra.mxu0 0
        %1373 = vmatprep.subr.bf16.mxu0 0
        %1374 = vmatpush1.bf16.xpose.msra.mxu0 0
        %1375 = vmatprep.subr.bf16.mxu0 0
        %1376 = vmatpush1.bf16.xpose.msra.mxu0 0
        %1377 = vmatprep.subr.bf16.mxu0 0
        %1378 = vmatpush1.bf16.xpose.msra.mxu0 0
        %1379 = vmatprep.subr.bf16.mxu0 0
        %1380 = vmatpush1.bf16.xpose.msra.mxu0 0
        %1381 = vmatprep.subr.bf16.mxu0 0
        %1382 = vmatpush1.bf16.xpose.msra.mxu0 0
        %1383 = vmatprep.subr.bf16.mxu0 0
        %1384 = vmatpush1.bf16.xpose.msra.mxu0 0
        %1385 = vmatprep.subr.bf16.mxu0 0
        %1386 = vmatpush1.bf16.xpose.msra.mxu0 0
        %1387 = vmatprep.subr.bf16.mxu0 0
        %1388 = vmatpush1.bf16.xpose.msra.mxu0 0
        %1389 = vmatprep.subr.bf16.mxu0 0
        %1390 = vmatpush1.bf16.xpose.msra.mxu0 0
        %1391 = vmatprep.subr.bf16.mxu0 0
        %1392 = vmatpush1.bf16.xpose.msra.mxu0 0
        %1393 = vmatprep.subr.bf16.mxu0 0
        %1394 = vmatpush1.bf16.xpose.msra.mxu0 0
        %1395 = vmatprep.subr.bf16.mxu0 0
        %1396 = vmatpush1.bf16.xpose.msra.mxu0 0
        %1397 = vmatprep.mubr.bf16.mxu0 0
        %1398 = vmatmul.mubr.bf16.gmra.mrb[0].mxu0 %v1360
        %v1399 = vpop.f32.mrb[0].mxu0
        %v1400 = vadd.f32 0.0, %v1399
        %v1401 = vpop.f32.mrb[0].mxu0
        %v1402 = vpop.f32.mrb[0].mxu0
        %v1403 = vadd.f32 0.0, %v1402
        %v1404 = vpop.f32.mrb[0].mxu0
        %1405 = vdwg.mxu0
        %v1406 = vsel %vm1283, %v1400, -inf
        %1407 = vmax.xlane.f32.xlu0 %v1406
        %v1408 = vpop.xlane.xlu0 %1407
        %v1409 = vsel %vm1283, %v1403, -inf
        %1410 = vmax.xlane.f32.xlu0 %v1409
        %v1411 = vpop.xlane.xlu0 %1410
        %v1412 = vsub.f32 %v1400, %v1408
        %v1413 = vsub.f32 %v1403, %v1411
        %v1414 = vmul.f32 %v1412, 1.442695
        %v1415 = vpow.pop %v1414
        %v1416 = vmul.f32 %v1413, 1.442695
        %v1417 = vpow.pop %v1416
        %v1418 = vsel %vm1283, %v1415, 0.0
        %1419 = vadd.xlane.f32.xlu0 %v1418
        %v1420 = vpop.xlane.xlu0 %1419
        %v1421 = vsel %vm1283, %v1417, 0.0
        %1422 = vadd.xlane.f32.xlu0 %v1421
        %v1423 = vpop.xlane.xlu0 %1422
        %v1424 = vpack.c.bf16 %v1417, %v1415
        %1426 = vrot.lane.b32.xlu0 %v1213, 64
        %v1427 = vpop.permute.xlu0 %1426
        %v1430 = vsel %vm1283, %v1424, 0
        %1432 = vmatprep.subr.bf16.mxu0 0
        %1433 = vmatpush1.bf16.msra.mxu0 %v1427
        %1434 = vmatprep.subr.bf16.mxu0 0
        %1435 = vmatpush1.bf16.msra.mxu0 0
        %1436 = vmatprep.subr.bf16.mxu0 0
        %1437 = vmatpush1.bf16.msra.mxu0 0
        %1438 = vmatprep.subr.bf16.mxu0 0
        %1439 = vmatpush1.bf16.msra.mxu0 0
        %1440 = vmatprep.subr.bf16.mxu0 0
        %1441 = vmatpush1.bf16.msra.mxu0 0
        %1442 = vmatprep.subr.bf16.mxu0 0
        %1443 = vmatpush1.bf16.msra.mxu0 0
        %1444 = vmatprep.subr.bf16.mxu0 0
        %1445 = vmatpush1.bf16.msra.mxu0 0
        %1446 = vmatprep.subr.bf16.mxu0 0
        %1447 = vmatpush1.bf16.msra.mxu0 0
        %1448 = vmatprep.subr.bf16.mxu0 0
        %1449 = vmatpush1.bf16.msra.mxu0 0
        %1450 = vmatprep.subr.bf16.mxu0 0
        %1451 = vmatpush1.bf16.msra.mxu0 0
        %1452 = vmatprep.subr.bf16.mxu0 0
        %1453 = vmatpush1.bf16.msra.mxu0 0
        %1454 = vmatprep.subr.bf16.mxu0 0
        %1455 = vmatpush1.bf16.msra.mxu0 0
        %1456 = vmatprep.subr.bf16.mxu0 0
        %1457 = vmatpush1.bf16.msra.mxu0 0
        %1458 = vmatprep.subr.bf16.mxu0 0
        %1459 = vmatpush1.bf16.msra.mxu0 0
        %1460 = vmatprep.subr.bf16.mxu0 0
        %1461 = vmatpush1.bf16.msra.mxu0 0
        %1462 = vmatprep.subr.bf16.mxu0 0
        %1463 = vmatpush1.bf16.msra.mxu0 0
        %1464 = vmatprep.mubr.bf16.mxu0 0
        %1465 = vmatmul.mubr.bf16.gmra.mrb[0].mxu0 %v1430
        %v1466 = vpop.f32.mrb[0].mxu0
        %v1467 = vadd.f32 0.0, %v1466
        %v1468 = vpop.f32.mrb[0].mxu0
        %v1469 = vpop.f32.mrb[0].mxu0
        %v1470 = vadd.f32 0.0, %v1469
        %v1471 = vpop.f32.mrb[0].mxu0
        %1472 = vdwg.mxu0
        %v1473 = vrcp.pop %v1420
        %v1474 = vrcp.pop %v1423
        %v1475 = vmul.f32 %v1467, %v1473
        %v1476 = vmul.f32 %v1470, %v1474
        %v1477 = vpack.c.bf16 %v1476, %v1475
        %1479 = vrot.lane.b32.xlu0 %v1477, 64
        %v1480 = vpop.permute.xlu0 %1479
        %vm1482 = vcmask 1048064
        %1483 = vst.msk [vmem:[#allocation2] sm:$0xff] %vm1482, %v1480
        %v1485 = vsel %vm1235, %v1214, 0
        %v1488 = vsel %vm1235, %v1215, 0
        %1490 = vmatprep.subr.bf16.mxu0 0
        %1491 = vmatpush1.bf16.xpose.msra.mxu0 %v1488
        %1492 = vmatprep.subr.bf16.mxu0 0
        %1493 = vmatpush1.bf16.xpose.msra.mxu0 0
        %1494 = vmatprep.subr.bf16.mxu0 0
        %1495 = vmatpush1.bf16.xpose.msra.mxu0 0
        %1496 = vmatprep.subr.bf16.mxu0 0
        %1497 = vmatpush1.bf16.xpose.msra.mxu0 0
        %1498 = vmatprep.subr.bf16.mxu0 0
        %1499 = vmatpush1.bf16.xpose.msra.mxu0 0
        %1500 = vmatprep.subr.bf16.mxu0 0
        %1501 = vmatpush1.bf16.xpose.msra.mxu0 0
        %1502 = vmatprep.subr.bf16.mxu0 0
        %1503 = vmatpush1.bf16.xpose.msra.mxu0 0
        %1504 = vmatprep.subr.bf16.mxu0 0
        %1505 = vmatpush1.bf16.xpose.msra.mxu0 0
        %1506 = vmatprep.subr.bf16.mxu0 0
        %1507 = vmatpush1.bf16.xpose.msra.mxu0 0
        %1508 = vmatprep.subr.bf16.mxu0 0
        %1509 = vmatpush1.bf16.xpose.msra.mxu0 0
        %1510 = vmatprep.subr.bf16.mxu0 0
        %1511 = vmatpush1.bf16.xpose.msra.mxu0 0
        %1512 = vmatprep.subr.bf16.mxu0 0
        %1513 = vmatpush1.bf16.xpose.msra.mxu0 0
        %1514 = vmatprep.subr.bf16.mxu0 0
        %1515 = vmatpush1.bf16.xpose.msra.mxu0 0
        %1516 = vmatprep.subr.bf16.mxu0 0
        %1517 = vmatpush1.bf16.xpose.msra.mxu0 0
        %1518 = vmatprep.subr.bf16.mxu0 0
        %1519 = vmatpush1.bf16.xpose.msra.mxu0 0
        %1520 = vmatprep.subr.bf16.mxu0 0
        %1521 = vmatpush1.bf16.xpose.msra.mxu0 0
        %1522 = vmatprep.mubr.bf16.mxu0 0
        %1523 = vmatmul.mubr.bf16.gmra.mrb[0].mxu0 %v1485
        %v1524 = vpop.f32.mrb[0].mxu0
        %v1525 = vadd.f32 0.0, %v1524
        %v1526 = vpop.f32.mrb[0].mxu0
        %v1527 = vpop.f32.mrb[0].mxu0
        %v1528 = vadd.f32 0.0, %v1527
        %v1529 = vpop.f32.mrb[0].mxu0
        %1530 = vdwg.mxu0
        %v1531 = vsel %vm1283, %v1525, -inf
        %1532 = vmax.xlane.f32.xlu0 %v1531
        %v1533 = vpop.xlane.xlu0 %1532
        %v1534 = vsel %vm1283, %v1528, -inf
        %1535 = vmax.xlane.f32.xlu0 %v1534
        %v1536 = vpop.xlane.xlu0 %1535
        %v1537 = vsub.f32 %v1525, %v1533
        %v1538 = vsub.f32 %v1528, %v1536
        %v1539 = vmul.f32 %v1537, 1.442695
        %v1540 = vpow.pop %v1539
        %v1541 = vmul.f32 %v1538, 1.442695
        %v1542 = vpow.pop %v1541
        %v1543 = vsel %vm1283, %v1540, 0.0
        %1544 = vadd.xlane.f32.xlu0 %v1543
        %v1545 = vpop.xlane.xlu0 %1544
        %v1546 = vsel %vm1283, %v1542, 0.0
        %1547 = vadd.xlane.f32.xlu0 %v1546
        %v1548 = vpop.xlane.xlu0 %1547
        %v1549 = vpack.c.bf16 %v1542, %v1540
        %v1551 = vsel %vm1283, %v1549, 0
        %1553 = vmatprep.subr.bf16.mxu0 0
        %1554 = vmatpush1.bf16.msra.mxu0 %v1216
        %1555 = vmatprep.subr.bf16.mxu0 0
        %1556 = vmatpush1.bf16.msra.mxu0 0
        %1557 = vmatprep.subr.bf16.mxu0 0
        %1558 = vmatpush1.bf16.msra.mxu0 0
        %1559 = vmatprep.subr.bf16.mxu0 0
        %1560 = vmatpush1.bf16.msra.mxu0 0
        %1561 = vmatprep.subr.bf16.mxu0 0
        %1562 = vmatpush1.bf16.msra.mxu0 0
        %1563 = vmatprep.subr.bf16.mxu0 0
        %1564 = vmatpush1.bf16.msra.mxu0 0
        %1565 = vmatprep.subr.bf16.mxu0 0
        %1566 = vmatpush1.bf16.msra.mxu0 0
        %1567 = vmatprep.subr.bf16.mxu0 0
        %1568 = vmatpush1.bf16.msra.mxu0 0
        %1569 = vmatprep.subr.bf16.mxu0 0
        %1570 = vmatpush1.bf16.msra.mxu0 0
        %1571 = vmatprep.subr.bf16.mxu0 0
        %1572 = vmatpush1.bf16.msra.mxu0 0
        %1573 = vmatprep.subr.bf16.mxu0 0
        %1574 = vmatpush1.bf16.msra.mxu0 0
        %1575 = vmatprep.subr.bf16.mxu0 0
        %1576 = vmatpush1.bf16.msra.mxu0 0
        %1577 = vmatprep.subr.bf16.mxu0 0
        %1578 = vmatpush1.bf16.msra.mxu0 0
        %1579 = vmatprep.subr.bf16.mxu0 0
        %1580 = vmatpush1.bf16.msra.mxu0 0
        %1581 = vmatprep.subr.bf16.mxu0 0
        %1582 = vmatpush1.bf16.msra.mxu0 0
        %1583 = vmatprep.subr.bf16.mxu0 0
        %1584 = vmatpush1.bf16.msra.mxu0 0
        %1585 = vmatprep.mubr.bf16.mxu0 0
        %1586 = vmatmul.mubr.bf16.gmra.mrb[0].mxu0 %v1551
        %v1587 = vpop.f32.mrb[0].mxu0
        %v1588 = vadd.f32 0.0, %v1587
        %v1589 = vpop.f32.mrb[0].mxu0
        %v1590 = vpop.f32.mrb[0].mxu0
        %v1591 = vadd.f32 0.0, %v1590
        %v1592 = vpop.f32.mrb[0].mxu0
        %1593 = vdwg.mxu0
        %v1594 = vrcp.pop %v1545
        %v1595 = vrcp.pop %v1548
        %v1596 = vmul.f32 %v1588, %v1594
        %v1597 = vmul.f32 %v1591, %v1595
        %v1598 = vpack.c.bf16 %v1597, %v1596
        %1599 = vst.msk [vmem:[#allocation2 + $0x8] sm:$0xff] %vm1235, %v1598
        %1601 = vrot.lane.b32.xlu0 %v1214, 64
        %v1602 = vpop.permute.xlu0 %1601
        %1604 = vrot.lane.b32.xlu0 %v1215, 64
        %v1605 = vpop.permute.xlu0 %1604
        %v1607 = vsel %vm1235, %v1602, 0
        %v1610 = vsel %vm1235, %v1605, 0
        %1612 = vmatprep.subr.bf16.mxu0 0
        %1613 = vmatpush1.bf16.xpose.msra.mxu0 %v1610
        %1614 = vmatprep.subr.bf16.mxu0 0
        %1615 = vmatpush1.bf16.xpose.msra.mxu0 0
        %1616 = vmatprep.subr.bf16.mxu0 0
        %1617 = vmatpush1.bf16.xpose.msra.mxu0 0
        %1618 = vmatprep.subr.bf16.mxu0 0
        %1619 = vmatpush1.bf16.xpose.msra.mxu0 0
        %1620 = vmatprep.subr.bf16.mxu0 0
        %1621 = vmatpush1.bf16.xpose.msra.mxu0 0
        %1622 = vmatprep.subr.bf16.mxu0 0
        %1623 = vmatpush1.bf16.xpose.msra.mxu0 0
        %1624 = vmatprep.subr.bf16.mxu0 0
        %1625 = vmatpush1.bf16.xpose.msra.mxu0 0
        %1626 = vmatprep.subr.bf16.mxu0 0
        %1627 = vmatpush1.bf16.xpose.msra.mxu0 0
        %1628 = vmatprep.subr.bf16.mxu0 0
        %1629 = vmatpush1.bf16.xpose.msra.mxu0 0
        %1630 = vmatprep.subr.bf16.mxu0 0
        %1631 = vmatpush1.bf16.xpose.msra.mxu0 0
        %1632 = vmatprep.subr.bf16.mxu0 0
        %1633 = vmatpush1.bf16.xpose.msra.mxu0 0
        %1634 = vmatprep.subr.bf16.mxu0 0
        %1635 = vmatpush1.bf16.xpose.msra.mxu0 0
        %1636 = vmatprep.subr.bf16.mxu0 0
        %1637 = vmatpush1.bf16.xpose.msra.mxu0 0
        %1638 = vmatprep.subr.bf16.mxu0 0
        %1639 = vmatpush1.bf16.xpose.msra.mxu0 0
        %1640 = vmatprep.subr.bf16.mxu0 0
        %1641 = vmatpush1.bf16.xpose.msra.mxu0 0
        %1642 = vmatprep.subr.bf16.mxu0 0
        %1643 = vmatpush1.bf16.xpose.msra.mxu0 0
        %1644 = vmatprep.mubr.bf16.mxu0 0
        %1645 = vmatmul.mubr.bf16.gmra.mrb[0].mxu0 %v1607
        %v1646 = vpop.f32.mrb[0].mxu0
        %v1647 = vadd.f32 0.0, %v1646
        %v1648 = vpop.f32.mrb[0].mxu0
        %v1649 = vpop.f32.mrb[0].mxu0
        %v1650 = vadd.f32 0.0, %v1649
        %v1651 = vpop.f32.mrb[0].mxu0
        %1652 = vdwg.mxu0
        %v1653 = vsel %vm1283, %v1647, -inf
        %1654 = vmax.xlane.f32.xlu0 %v1653
        %v1655 = vpop.xlane.xlu0 %1654
        %v1656 = vsel %vm1283, %v1650, -inf
        %1657 = vmax.xlane.f32.xlu0 %v1656
        %v1658 = vpop.xlane.xlu0 %1657
        %v1659 = vsub.f32 %v1647, %v1655
        %v1660 = vsub.f32 %v1650, %v1658
        %v1661 = vmul.f32 %v1659, 1.442695
        %v1662 = vpow.pop %v1661
        %v1663 = vmul.f32 %v1660, 1.442695
        %v1664 = vpow.pop %v1663
        %v1665 = vsel %vm1283, %v1662, 0.0
        %1666 = vadd.xlane.f32.xlu0 %v1665
        %v1667 = vpop.xlane.xlu0 %1666
        %v1668 = vsel %vm1283, %v1664, 0.0
        %1669 = vadd.xlane.f32.xlu0 %v1668
        %v1670 = vpop.xlane.xlu0 %1669
        %v1671 = vpack.c.bf16 %v1664, %v1662
        %1673 = vrot.lane.b32.xlu0 %v1216, 64
        %v1674 = vpop.permute.xlu0 %1673
        %v1677 = vsel %vm1283, %v1671, 0
        %1679 = vmatprep.subr.bf16.mxu0 0
        %1680 = vmatpush1.bf16.msra.mxu0 %v1674
        %1681 = vmatprep.subr.bf16.mxu0 0
        %1682 = vmatpush1.bf16.msra.mxu0 0
        %1683 = vmatprep.subr.bf16.mxu0 0
        %1684 = vmatpush1.bf16.msra.mxu0 0
        %1685 = vmatprep.subr.bf16.mxu0 0
        %1686 = vmatpush1.bf16.msra.mxu0 0
        %1687 = vmatprep.subr.bf16.mxu0 0
        %1688 = vmatpush1.bf16.msra.mxu0 0
        %1689 = vmatprep.subr.bf16.mxu0 0
        %1690 = vmatpush1.bf16.msra.mxu0 0
        %1691 = vmatprep.subr.bf16.mxu0 0
        %1692 = vmatpush1.bf16.msra.mxu0 0
        %1693 = vmatprep.subr.bf16.mxu0 0
        %1694 = vmatpush1.bf16.msra.mxu0 0
        %1695 = vmatprep.subr.bf16.mxu0 0
        %1696 = vmatpush1.bf16.msra.mxu0 0
        %1697 = vmatprep.subr.bf16.mxu0 0
        %1698 = vmatpush1.bf16.msra.mxu0 0
        %1699 = vmatprep.subr.bf16.mxu0 0
        %1700 = vmatpush1.bf16.msra.mxu0 0
        %1701 = vmatprep.subr.bf16.mxu0 0
        %1702 = vmatpush1.bf16.msra.mxu0 0
        %1703 = vmatprep.subr.bf16.mxu0 0
        %1704 = vmatpush1.bf16.msra.mxu0 0
        %1705 = vmatprep.subr.bf16.mxu0 0
        %1706 = vmatpush1.bf16.msra.mxu0 0
        %1707 = vmatprep.subr.bf16.mxu0 0
        %1708 = vmatpush1.bf16.msra.mxu0 0
        %1709 = vmatprep.subr.bf16.mxu0 0
        %1710 = vmatpush1.bf16.msra.mxu0 0
        %1711 = vmatprep.mubr.bf16.mxu0 0
        %1712 = vmatmul.mubr.bf16.gmra.mrb[0].mxu0 %v1677
        %v1713 = vpop.f32.mrb[0].mxu0
        %v1714 = vadd.f32 0.0, %v1713
        %v1715 = vpop.f32.mrb[0].mxu0
        %v1716 = vpop.f32.mrb[0].mxu0
        %v1717 = vadd.f32 0.0, %v1716
        %v1718 = vpop.f32.mrb[0].mxu0
        %1719 = vdwg.mxu0
        %v1720 = vrcp.pop %v1667
        %v1721 = vrcp.pop %v1670
        %v1722 = vmul.f32 %v1714, %v1720
        %v1723 = vmul.f32 %v1717, %v1721
        %v1724 = vpack.c.bf16 %v1723, %v1722
        %1726 = vrot.lane.b32.xlu0 %v1724, 64
        %v1727 = vpop.permute.xlu0 %1726
        %1729 = vst.msk [vmem:[#allocation2 + $0x8] sm:$0xff] %vm1482, %v1727
        %v1731 = vsel %vm1235, %v1217, 0
        %v1734 = vsel %vm1235, %v1218, 0
        %1736 = vmatprep.subr.bf16.mxu0 0
        %1737 = vmatpush1.bf16.xpose.msra.mxu0 %v1734
        %1738 = vmatprep.subr.bf16.mxu0 0
        %1739 = vmatpush1.bf16.xpose.msra.mxu0 0
        %1740 = vmatprep.subr.bf16.mxu0 0
        %1741 = vmatpush1.bf16.xpose.msra.mxu0 0
        %1742 = vmatprep.subr.bf16.mxu0 0
        %1743 = vmatpush1.bf16.xpose.msra.mxu0 0
        %1744 = vmatprep.subr.bf16.mxu0 0
        %1745 = vmatpush1.bf16.xpose.msra.mxu0 0
        %1746 = vmatprep.subr.bf16.mxu0 0
        %1747 = vmatpush1.bf16.xpose.msra.mxu0 0
        %1748 = vmatprep.subr.bf16.mxu0 0
        %1749 = vmatpush1.bf16.xpose.msra.mxu0 0
        %1750 = vmatprep.subr.bf16.mxu0 0
        %1751 = vmatpush1.bf16.xpose.msra.mxu0 0
        %1752 = vmatprep.subr.bf16.mxu0 0
        %1753 = vmatpush1.bf16.xpose.msra.mxu0 0
        %1754 = vmatprep.subr.bf16.mxu0 0
        %1755 = vmatpush1.bf16.xpose.msra.mxu0 0
        %1756 = vmatprep.subr.bf16.mxu0 0
        %1757 = vmatpush1.bf16.xpose.msra.mxu0 0
        %1758 = vmatprep.subr.bf16.mxu0 0
        %1759 = vmatpush1.bf16.xpose.msra.mxu0 0
        %1760 = vmatprep.subr.bf16.mxu0 0
        %1761 = vmatpush1.bf16.xpose.msra.mxu0 0
        %1762 = vmatprep.subr.bf16.mxu0 0
        %1763 = vmatpush1.bf16.xpose.msra.mxu0 0
        %1764 = vmatprep.subr.bf16.mxu0 0
        %1765 = vmatpush1.bf16.xpose.msra.mxu0 0
        %1766 = vmatprep.subr.bf16.mxu0 0
        %1767 = vmatpush1.bf16.xpose.msra.mxu0 0
        %1768 = vmatprep.mubr.bf16.mxu0 0
        %1769 = vmatmul.mubr.bf16.gmra.mrb[0].mxu0 %v1731
        %v1770 = vpop.f32.mrb[0].mxu0
        %v1771 = vadd.f32 0.0, %v1770
        %v1772 = vpop.f32.mrb[0].mxu0
        %v1773 = vpop.f32.mrb[0].mxu0
        %v1774 = vadd.f32 0.0, %v1773
        %v1775 = vpop.f32.mrb[0].mxu0
        %1776 = vdwg.mxu0
        %v1777 = vsel %vm1283, %v1771, -inf
        %1778 = vmax.xlane.f32.xlu0 %v1777
        %v1779 = vpop.xlane.xlu0 %1778
        %v1780 = vsel %vm1283, %v1774, -inf
        %1781 = vmax.xlane.f32.xlu0 %v1780
        %v1782 = vpop.xlane.xlu0 %1781
        %v1783 = vsub.f32 %v1771, %v1779
        %v1784 = vsub.f32 %v1774, %v1782
        %v1785 = vmul.f32 %v1783, 1.442695
        %v1786 = vpow.pop %v1785
        %v1787 = vmul.f32 %v1784, 1.442695
        %v1788 = vpow.pop %v1787
        %v1789 = vsel %vm1283, %v1786, 0.0
        %1790 = vadd.xlane.f32.xlu0 %v1789
        %v1791 = vpop.xlane.xlu0 %1790
        %v1792 = vsel %vm1283, %v1788, 0.0
        %1793 = vadd.xlane.f32.xlu0 %v1792
        %v1794 = vpop.xlane.xlu0 %1793
        %v1795 = vpack.c.bf16 %v1788, %v1786
        %v1797 = vsel %vm1283, %v1795, 0
        %1799 = vmatprep.subr.bf16.mxu0 0
        %1800 = vmatpush1.bf16.msra.mxu0 %v1219
        %1801 = vmatprep.subr.bf16.mxu0 0
        %1802 = vmatpush1.bf16.msra.mxu0 0
        %1803 = vmatprep.subr.bf16.mxu0 0
        %1804 = vmatpush1.bf16.msra.mxu0 0
        %1805 = vmatprep.subr.bf16.mxu0 0
        %1806 = vmatpush1.bf16.msra.mxu0 0
        %1807 = vmatprep.subr.bf16.mxu0 0
        %1808 = vmatpush1.bf16.msra.mxu0 0
        %1809 = vmatprep.subr.bf16.mxu0 0
        %1810 = vmatpush1.bf16.msra.mxu0 0
        %1811 = vmatprep.subr.bf16.mxu0 0
        %1812 = vmatpush1.bf16.msra.mxu0 0
        %1813 = vmatprep.subr.bf16.mxu0 0
        %1814 = vmatpush1.bf16.msra.mxu0 0
        %1815 = vmatprep.subr.bf16.mxu0 0
        %1816 = vmatpush1.bf16.msra.mxu0 0
        %1817 = vmatprep.subr.bf16.mxu0 0
        %1818 = vmatpush1.bf16.msra.mxu0 0
        %1819 = vmatprep.subr.bf16.mxu0 0
        %1820 = vmatpush1.bf16.msra.mxu0 0
        %1821 = vmatprep.subr.bf16.mxu0 0
        %1822 = vmatpush1.bf16.msra.mxu0 0
        %1823 = vmatprep.subr.bf16.mxu0 0
        %1824 = vmatpush1.bf16.msra.mxu0 0
        %1825 = vmatprep.subr.bf16.mxu0 0
        %1826 = vmatpush1.bf16.msra.mxu0 0
        %1827 = vmatprep.subr.bf16.mxu0 0
        %1828 = vmatpush1.bf16.msra.mxu0 0
        %1829 = vmatprep.subr.bf16.mxu0 0
        %1830 = vmatpush1.bf16.msra.mxu0 0
        %1831 = vmatprep.mubr.bf16.mxu0 0
        %1832 = vmatmul.mubr.bf16.gmra.mrb[0].mxu0 %v1797
        %v1833 = vpop.f32.mrb[0].mxu0
        %v1834 = vadd.f32 0.0, %v1833
        %v1835 = vpop.f32.mrb[0].mxu0
        %v1836 = vpop.f32.mrb[0].mxu0
        %v1837 = vadd.f32 0.0, %v1836
        %v1838 = vpop.f32.mrb[0].mxu0
        %1839 = vdwg.mxu0
        %v1840 = vrcp.pop %v1791
        %v1841 = vrcp.pop %v1794
        %v1842 = vmul.f32 %v1834, %v1840
        %v1843 = vmul.f32 %v1837, %v1841
        %v1844 = vpack.c.bf16 %v1843, %v1842
        %1845 = vst.msk [vmem:[#allocation2 + $0x10] sm:$0xff] %vm1235, %v1844
        %1847 = vrot.lane.b32.xlu0 %v1217, 64
        %v1848 = vpop.permute.xlu0 %1847
        %1850 = vrot.lane.b32.xlu0 %v1218, 64
        %v1851 = vpop.permute.xlu0 %1850
        %v1853 = vsel %vm1235, %v1848, 0
        %v1856 = vsel %vm1235, %v1851, 0
        %1858 = vmatprep.subr.bf16.mxu0 0
        %1859 = vmatpush1.bf16.xpose.msra.mxu0 %v1856
        %1860 = vmatprep.subr.bf16.mxu0 0
        %1861 = vmatpush1.bf16.xpose.msra.mxu0 0
        %1862 = vmatprep.subr.bf16.mxu0 0
        %1863 = vmatpush1.bf16.xpose.msra.mxu0 0
        %1864 = vmatprep.subr.bf16.mxu0 0
        %1865 = vmatpush1.bf16.xpose.msra.mxu0 0
        %1866 = vmatprep.subr.bf16.mxu0 0
        %1867 = vmatpush1.bf16.xpose.msra.mxu0 0
        %1868 = vmatprep.subr.bf16.mxu0 0
        %1869 = vmatpush1.bf16.xpose.msra.mxu0 0
        %1870 = vmatprep.subr.bf16.mxu0 0
        %1871 = vmatpush1.bf16.xpose.msra.mxu0 0
        %1872 = vmatprep.subr.bf16.mxu0 0
        %1873 = vmatpush1.bf16.xpose.msra.mxu0 0
        %1874 = vmatprep.subr.bf16.mxu0 0
        %1875 = vmatpush1.bf16.xpose.msra.mxu0 0
        %1876 = vmatprep.subr.bf16.mxu0 0
        %1877 = vmatpush1.bf16.xpose.msra.mxu0 0
        %1878 = vmatprep.subr.bf16.mxu0 0
        %1879 = vmatpush1.bf16.xpose.msra.mxu0 0
        %1880 = vmatprep.subr.bf16.mxu0 0
        %1881 = vmatpush1.bf16.xpose.msra.mxu0 0
        %1882 = vmatprep.subr.bf16.mxu0 0
        %1883 = vmatpush1.bf16.xpose.msra.mxu0 0
        %1884 = vmatprep.subr.bf16.mxu0 0
        %1885 = vmatpush1.bf16.xpose.msra.mxu0 0
        %1886 = vmatprep.subr.bf16.mxu0 0
        %1887 = vmatpush1.bf16.xpose.msra.mxu0 0
        %1888 = vmatprep.subr.bf16.mxu0 0
        %1889 = vmatpush1.bf16.xpose.msra.mxu0 0
        %1890 = vmatprep.mubr.bf16.mxu0 0
        %1891 = vmatmul.mubr.bf16.gmra.mrb[0].mxu0 %v1853
        %v1892 = vpop.f32.mrb[0].mxu0
        %v1893 = vadd.f32 0.0, %v1892
        %v1894 = vpop.f32.mrb[0].mxu0
        %v1895 = vpop.f32.mrb[0].mxu0
        %v1896 = vadd.f32 0.0, %v1895
        %v1897 = vpop.f32.mrb[0].mxu0
        %1898 = vdwg.mxu0
        %v1899 = vsel %vm1283, %v1893, -inf
        %1900 = vmax.xlane.f32.xlu0 %v1899
        %v1901 = vpop.xlane.xlu0 %1900
        %v1902 = vsel %vm1283, %v1896, -inf
        %1903 = vmax.xlane.f32.xlu0 %v1902
        %v1904 = vpop.xlane.xlu0 %1903
        %v1905 = vsub.f32 %v1893, %v1901
        %v1906 = vsub.f32 %v1896, %v1904
        %v1907 = vmul.f32 %v1905, 1.442695
        %v1908 = vpow.pop %v1907
        %v1909 = vmul.f32 %v1906, 1.442695
        %v1910 = vpow.pop %v1909
        %v1911 = vsel %vm1283, %v1908, 0.0
        %1912 = vadd.xlane.f32.xlu0 %v1911
        %v1913 = vpop.xlane.xlu0 %1912
        %v1914 = vsel %vm1283, %v1910, 0.0
        %1915 = vadd.xlane.f32.xlu0 %v1914
        %v1916 = vpop.xlane.xlu0 %1915
        %v1917 = vpack.c.bf16 %v1910, %v1908
        %1919 = vrot.lane.b32.xlu0 %v1219, 64
        %v1920 = vpop.permute.xlu0 %1919
        %v1923 = vsel %vm1283, %v1917, 0
        %1925 = vmatprep.subr.bf16.mxu0 0
        %1926 = vmatpush1.bf16.msra.mxu0 %v1920
        %1927 = vmatprep.subr.bf16.mxu0 0
        %1928 = vmatpush1.bf16.msra.mxu0 0
        %1929 = vmatprep.subr.bf16.mxu0 0
        %1930 = vmatpush1.bf16.msra.mxu0 0
        %1931 = vmatprep.subr.bf16.mxu0 0
        %1932 = vmatpush1.bf16.msra.mxu0 0
        %1933 = vmatprep.subr.bf16.mxu0 0
        %1934 = vmatpush1.bf16.msra.mxu0 0
        %1935 = vmatprep.subr.bf16.mxu0 0
        %1936 = vmatpush1.bf16.msra.mxu0 0
        %1937 = vmatprep.subr.bf16.mxu0 0
        %1938 = vmatpush1.bf16.msra.mxu0 0
        %1939 = vmatprep.subr.bf16.mxu0 0
        %1940 = vmatpush1.bf16.msra.mxu0 0
        %1941 = vmatprep.subr.bf16.mxu0 0
        %1942 = vmatpush1.bf16.msra.mxu0 0
        %1943 = vmatprep.subr.bf16.mxu0 0
        %1944 = vmatpush1.bf16.msra.mxu0 0
        %1945 = vmatprep.subr.bf16.mxu0 0
        %1946 = vmatpush1.bf16.msra.mxu0 0
        %1947 = vmatprep.subr.bf16.mxu0 0
        %1948 = vmatpush1.bf16.msra.mxu0 0
        %1949 = vmatprep.subr.bf16.mxu0 0
        %1950 = vmatpush1.bf16.msra.mxu0 0
        %1951 = vmatprep.subr.bf16.mxu0 0
        %1952 = vmatpush1.bf16.msra.mxu0 0
        %1953 = vmatprep.subr.bf16.mxu0 0
        %1954 = vmatpush1.bf16.msra.mxu0 0
        %1955 = vmatprep.subr.bf16.mxu0 0
        %1956 = vmatpush1.bf16.msra.mxu0 0
        %1957 = vmatprep.mubr.bf16.mxu0 0
        %1958 = vmatmul.mubr.bf16.gmra.mrb[0].mxu0 %v1923
        %v1959 = vpop.f32.mrb[0].mxu0
        %v1960 = vadd.f32 0.0, %v1959
        %v1961 = vpop.f32.mrb[0].mxu0
        %v1962 = vpop.f32.mrb[0].mxu0
        %v1963 = vadd.f32 0.0, %v1962
        %v1964 = vpop.f32.mrb[0].mxu0
        %1965 = vdwg.mxu0
        %v1966 = vrcp.pop %v1913
        %v1967 = vrcp.pop %v1916
        %v1968 = vmul.f32 %v1960, %v1966
        %v1969 = vmul.f32 %v1963, %v1967
        %v1970 = vpack.c.bf16 %v1969, %v1968
        %1972 = vrot.lane.b32.xlu0 %v1970, 64
        %v1973 = vpop.permute.xlu0 %1972
        %1975 = vst.msk [vmem:[#allocation2 + $0x10] sm:$0xff] %vm1482, %v1973
        %v1977 = vsel %vm1235, %v1220, 0
        %v1980 = vsel %vm1235, %v1221, 0
        %1982 = vmatprep.subr.bf16.mxu0 0
        %1983 = vmatpush1.bf16.xpose.msra.mxu0 %v1980
        %1984 = vmatprep.subr.bf16.mxu0 0
        %1985 = vmatpush1.bf16.xpose.msra.mxu0 0
        %1986 = vmatprep.subr.bf16.mxu0 0
        %1987 = vmatpush1.bf16.xpose.msra.mxu0 0
        %1988 = vmatprep.subr.bf16.mxu0 0
        %1989 = vmatpush1.bf16.xpose.msra.mxu0 0
        %1990 = vmatprep.subr.bf16.mxu0 0
        %1991 = vmatpush1.bf16.xpose.msra.mxu0 0
        %1992 = vmatprep.subr.bf16.mxu0 0
        %1993 = vmatpush1.bf16.xpose.msra.mxu0 0
        %1994 = vmatprep.subr.bf16.mxu0 0
        %1995 = vmatpush1.bf16.xpose.msra.mxu0 0
        %1996 = vmatprep.subr.bf16.mxu0 0
        %1997 = vmatpush1.bf16.xpose.msra.mxu0 0
        %1998 = vmatprep.subr.bf16.mxu0 0
        %1999 = vmatpush1.bf16.xpose.msra.mxu0 0
        %2000 = vmatprep.subr.bf16.mxu0 0
        %2001 = vmatpush1.bf16.xpose.msra.mxu0 0
        %2002 = vmatprep.subr.bf16.mxu0 0
        %2003 = vmatpush1.bf16.xpose.msra.mxu0 0
        %2004 = vmatprep.subr.bf16.mxu0 0
        %2005 = vmatpush1.bf16.xpose.msra.mxu0 0
        %2006 = vmatprep.subr.bf16.mxu0 0
        %2007 = vmatpush1.bf16.xpose.msra.mxu0 0
        %2008 = vmatprep.subr.bf16.mxu0 0
        %2009 = vmatpush1.bf16.xpose.msra.mxu0 0
        %2010 = vmatprep.subr.bf16.mxu0 0
        %2011 = vmatpush1.bf16.xpose.msra.mxu0 0
        %2012 = vmatprep.subr.bf16.mxu0 0
        %2013 = vmatpush1.bf16.xpose.msra.mxu0 0
        %2014 = vmatprep.mubr.bf16.mxu0 0
        %2015 = vmatmul.mubr.bf16.gmra.mrb[0].mxu0 %v1977
        %v2016 = vpop.f32.mrb[0].mxu0
        %v2017 = vadd.f32 0.0, %v2016
        %v2018 = vpop.f32.mrb[0].mxu0
        %v2019 = vpop.f32.mrb[0].mxu0
        %v2020 = vadd.f32 0.0, %v2019
        %v2021 = vpop.f32.mrb[0].mxu0
        %2022 = vdwg.mxu0
        %v2023 = vsel %vm1283, %v2017, -inf
        %2024 = vmax.xlane.f32.xlu0 %v2023
        %v2025 = vpop.xlane.xlu0 %2024
        %v2026 = vsel %vm1283, %v2020, -inf
        %2027 = vmax.xlane.f32.xlu0 %v2026
        %v2028 = vpop.xlane.xlu0 %2027
        %v2029 = vsub.f32 %v2017, %v2025
        %v2030 = vsub.f32 %v2020, %v2028
        %v2031 = vmul.f32 %v2029, 1.442695
        %v2032 = vpow.pop %v2031
        %v2033 = vmul.f32 %v2030, 1.442695
        %v2034 = vpow.pop %v2033
        %v2035 = vsel %vm1283, %v2032, 0.0
        %2036 = vadd.xlane.f32.xlu0 %v2035
        %v2037 = vpop.xlane.xlu0 %2036
        %v2038 = vsel %vm1283, %v2034, 0.0
        %2039 = vadd.xlane.f32.xlu0 %v2038
        %v2040 = vpop.xlane.xlu0 %2039
        %v2041 = vpack.c.bf16 %v2034, %v2032
        %v2043 = vsel %vm1283, %v2041, 0
        %2045 = vmatprep.subr.bf16.mxu0 0
        %2046 = vmatpush1.bf16.msra.mxu0 %v1222
        %2047 = vmatprep.subr.bf16.mxu0 0
        %2048 = vmatpush1.bf16.msra.mxu0 0
        %2049 = vmatprep.subr.bf16.mxu0 0
        %2050 = vmatpush1.bf16.msra.mxu0 0
        %2051 = vmatprep.subr.bf16.mxu0 0
        %2052 = vmatpush1.bf16.msra.mxu0 0
        %2053 = vmatprep.subr.bf16.mxu0 0
        %2054 = vmatpush1.bf16.msra.mxu0 0
        %2055 = vmatprep.subr.bf16.mxu0 0
        %2056 = vmatpush1.bf16.msra.mxu0 0
        %2057 = vmatprep.subr.bf16.mxu0 0
        %2058 = vmatpush1.bf16.msra.mxu0 0
        %2059 = vmatprep.subr.bf16.mxu0 0
        %2060 = vmatpush1.bf16.msra.mxu0 0
        %2061 = vmatprep.subr.bf16.mxu0 0
        %2062 = vmatpush1.bf16.msra.mxu0 0
        %2063 = vmatprep.subr.bf16.mxu0 0
        %2064 = vmatpush1.bf16.msra.mxu0 0
        %2065 = vmatprep.subr.bf16.mxu0 0
        %2066 = vmatpush1.bf16.msra.mxu0 0
        %2067 = vmatprep.subr.bf16.mxu0 0
        %2068 = vmatpush1.bf16.msra.mxu0 0
        %2069 = vmatprep.subr.bf16.mxu0 0
        %2070 = vmatpush1.bf16.msra.mxu0 0
        %2071 = vmatprep.subr.bf16.mxu0 0
        %2072 = vmatpush1.bf16.msra.mxu0 0
        %2073 = vmatprep.subr.bf16.mxu0 0
        %2074 = vmatpush1.bf16.msra.mxu0 0
        %2075 = vmatprep.subr.bf16.mxu0 0
        %2076 = vmatpush1.bf16.msra.mxu0 0
        %2077 = vmatprep.mubr.bf16.mxu0 0
        %2078 = vmatmul.mubr.bf16.gmra.mrb[0].mxu0 %v2043
        %v2079 = vpop.f32.mrb[0].mxu0
        %v2080 = vadd.f32 0.0, %v2079
        %v2081 = vpop.f32.mrb[0].mxu0
        %v2082 = vpop.f32.mrb[0].mxu0
        %v2083 = vadd.f32 0.0, %v2082
        %v2084 = vpop.f32.mrb[0].mxu0
        %2085 = vdwg.mxu0
        %v2086 = vrcp.pop %v2037
        %v2087 = vrcp.pop %v2040
        %v2088 = vmul.f32 %v2080, %v2086
        %v2089 = vmul.f32 %v2083, %v2087
        %v2090 = vpack.c.bf16 %v2089, %v2088
        %2091 = vst.msk [vmem:[#allocation2 + $0x18] sm:$0xff] %vm1235, %v2090
        %2093 = vrot.lane.b32.xlu0 %v1220, 64
        %v2094 = vpop.permute.xlu0 %2093
        %2096 = vrot.lane.b32.xlu0 %v1221, 64
        %v2097 = vpop.permute.xlu0 %2096
        %v2099 = vsel %vm1235, %v2094, 0
        %v2102 = vsel %vm1235, %v2097, 0
        %2104 = vmatprep.subr.bf16.mxu0 0
        %2105 = vmatpush1.bf16.xpose.msra.mxu0 %v2102
        %2106 = vmatprep.subr.bf16.mxu0 0
        %2107 = vmatpush1.bf16.xpose.msra.mxu0 0
        %2108 = vmatprep.subr.bf16.mxu0 0
        %2109 = vmatpush1.bf16.xpose.msra.mxu0 0
        %2110 = vmatprep.subr.bf16.mxu0 0
        %2111 = vmatpush1.bf16.xpose.msra.mxu0 0
        %2112 = vmatprep.subr.bf16.mxu0 0
        %2113 = vmatpush1.bf16.xpose.msra.mxu0 0
        %2114 = vmatprep.subr.bf16.mxu0 0
        %2115 = vmatpush1.bf16.xpose.msra.mxu0 0
        %2116 = vmatprep.subr.bf16.mxu0 0
        %2117 = vmatpush1.bf16.xpose.msra.mxu0 0
        %2118 = vmatprep.subr.bf16.mxu0 0
        %2119 = vmatpush1.bf16.xpose.msra.mxu0 0
        %2120 = vmatprep.subr.bf16.mxu0 0
        %2121 = vmatpush1.bf16.xpose.msra.mxu0 0
        %2122 = vmatprep.subr.bf16.mxu0 0
        %2123 = vmatpush1.bf16.xpose.msra.mxu0 0
        %2124 = vmatprep.subr.bf16.mxu0 0
        %2125 = vmatpush1.bf16.xpose.msra.mxu0 0
        %2126 = vmatprep.subr.bf16.mxu0 0
        %2127 = vmatpush1.bf16.xpose.msra.mxu0 0
        %2128 = vmatprep.subr.bf16.mxu0 0
        %2129 = vmatpush1.bf16.xpose.msra.mxu0 0
        %2130 = vmatprep.subr.bf16.mxu0 0
        %2131 = vmatpush1.bf16.xpose.msra.mxu0 0
        %2132 = vmatprep.subr.bf16.mxu0 0
        %2133 = vmatpush1.bf16.xpose.msra.mxu0 0
        %2134 = vmatprep.subr.bf16.mxu0 0
        %2135 = vmatpush1.bf16.xpose.msra.mxu0 0
        %2136 = vmatprep.mubr.bf16.mxu0 0
        %2137 = vmatmul.mubr.bf16.gmra.mrb[0].mxu0 %v2099
        %v2138 = vpop.f32.mrb[0].mxu0
        %v2139 = vadd.f32 0.0, %v2138
        %v2140 = vpop.f32.mrb[0].mxu0
        %v2141 = vpop.f32.mrb[0].mxu0
        %v2142 = vadd.f32 0.0, %v2141
        %v2143 = vpop.f32.mrb[0].mxu0
        %2144 = vdwg.mxu0
        %v2145 = vsel %vm1283, %v2139, -inf
        %2146 = vmax.xlane.f32.xlu0 %v2145
        %v2147 = vpop.xlane.xlu0 %2146
        %v2148 = vsel %vm1283, %v2142, -inf
        %2149 = vmax.xlane.f32.xlu0 %v2148
        %v2150 = vpop.xlane.xlu0 %2149
        %v2151 = vsub.f32 %v2139, %v2147
        %v2152 = vsub.f32 %v2142, %v2150
        %v2153 = vmul.f32 %v2151, 1.442695
        %v2154 = vpow.pop %v2153
        %v2155 = vmul.f32 %v2152, 1.442695
        %v2156 = vpow.pop %v2155
        %v2157 = vsel %vm1283, %v2154, 0.0
        %2158 = vadd.xlane.f32.xlu0 %v2157
        %v2159 = vpop.xlane.xlu0 %2158
        %v2160 = vsel %vm1283, %v2156, 0.0
        %2161 = vadd.xlane.f32.xlu0 %v2160
        %v2162 = vpop.xlane.xlu0 %2161
        %v2163 = vpack.c.bf16 %v2156, %v2154
        %2165 = vrot.lane.b32.xlu0 %v1222, 64
        %v2166 = vpop.permute.xlu0 %2165
        %v2169 = vsel %vm1283, %v2163, 0
        %2171 = vmatprep.subr.bf16.mxu0 0
        %2172 = vmatpush1.bf16.msra.mxu0 %v2166
        %2173 = vmatprep.subr.bf16.mxu0 0
        %2174 = vmatpush1.bf16.msra.mxu0 0
        %2175 = vmatprep.subr.bf16.mxu0 0
        %2176 = vmatpush1.bf16.msra.mxu0 0
        %2177 = vmatprep.subr.bf16.mxu0 0
        %2178 = vmatpush1.bf16.msra.mxu0 0
        %2179 = vmatprep.subr.bf16.mxu0 0
        %2180 = vmatpush1.bf16.msra.mxu0 0
        %2181 = vmatprep.subr.bf16.mxu0 0
        %2182 = vmatpush1.bf16.msra.mxu0 0
        %2183 = vmatprep.subr.bf16.mxu0 0
        %2184 = vmatpush1.bf16.msra.mxu0 0
        %2185 = vmatprep.subr.bf16.mxu0 0
        %2186 = vmatpush1.bf16.msra.mxu0 0
        %2187 = vmatprep.subr.bf16.mxu0 0
        %2188 = vmatpush1.bf16.msra.mxu0 0
        %2189 = vmatprep.subr.bf16.mxu0 0
        %2190 = vmatpush1.bf16.msra.mxu0 0
        %2191 = vmatprep.subr.bf16.mxu0 0
        %2192 = vmatpush1.bf16.msra.mxu0 0
        %2193 = vmatprep.subr.bf16.mxu0 0
        %2194 = vmatpush1.bf16.msra.mxu0 0
        %2195 = vmatprep.subr.bf16.mxu0 0
        %2196 = vmatpush1.bf16.msra.mxu0 0
        %2197 = vmatprep.subr.bf16.mxu0 0
        %2198 = vmatpush1.bf16.msra.mxu0 0
        %2199 = vmatprep.subr.bf16.mxu0 0
        %2200 = vmatpush1.bf16.msra.mxu0 0
        %2201 = vmatprep.subr.bf16.mxu0 0
        %2202 = vmatpush1.bf16.msra.mxu0 0
        %2203 = vmatprep.mubr.bf16.mxu0 0
        %2204 = vmatmul.mubr.bf16.gmra.mrb[0].mxu0 %v2169
        %v2205 = vpop.f32.mrb[0].mxu0
        %v2206 = vadd.f32 0.0, %v2205
        %v2207 = vpop.f32.mrb[0].mxu0
        %v2208 = vpop.f32.mrb[0].mxu0
        %v2209 = vadd.f32 0.0, %v2208
        %v2210 = vpop.f32.mrb[0].mxu0
        %2211 = vdwg.mxu0
        %v2212 = vrcp.pop %v2159
        %v2213 = vrcp.pop %v2162
        %v2214 = vmul.f32 %v2206, %v2212
        %v2215 = vmul.f32 %v2209, %v2213
        %v2216 = vpack.c.bf16 %v2215, %v2214
        %2218 = vrot.lane.b32.xlu0 %v2216, 64
        %v2219 = vpop.permute.xlu0 %2218
        %2221 = vst.msk [vmem:[#allocation2 + $0x18] sm:$0xff] %vm1482, %v2219
        %v2223 = vsel %vm1235, %v1223, 0
        %v2226 = vsel %vm1235, %v1224, 0
        %2228 = vmatprep.subr.bf16.mxu0 0
        %2229 = vmatpush1.bf16.xpose.msra.mxu0 %v2226
        %2230 = vmatprep.subr.bf16.mxu0 0
        %2231 = vmatpush1.bf16.xpose.msra.mxu0 0
        %2232 = vmatprep.subr.bf16.mxu0 0
        %2233 = vmatpush1.bf16.xpose.msra.mxu0 0
        %2234 = vmatprep.subr.bf16.mxu0 0
        %2235 = vmatpush1.bf16.xpose.msra.mxu0 0
        %2236 = vmatprep.subr.bf16.mxu0 0
        %2237 = vmatpush1.bf16.xpose.msra.mxu0 0
        %2238 = vmatprep.subr.bf16.mxu0 0
        %2239 = vmatpush1.bf16.xpose.msra.mxu0 0
        %2240 = vmatprep.subr.bf16.mxu0 0
        %2241 = vmatpush1.bf16.xpose.msra.mxu0 0
        %2242 = vmatprep.subr.bf16.mxu0 0
        %2243 = vmatpush1.bf16.xpose.msra.mxu0 0
        %2244 = vmatprep.subr.bf16.mxu0 0
        %2245 = vmatpush1.bf16.xpose.msra.mxu0 0
        %2246 = vmatprep.subr.bf16.mxu0 0
        %2247 = vmatpush1.bf16.xpose.msra.mxu0 0
        %2248 = vmatprep.subr.bf16.mxu0 0
        %2249 = vmatpush1.bf16.xpose.msra.mxu0 0
        %2250 = vmatprep.subr.bf16.mxu0 0
        %2251 = vmatpush1.bf16.xpose.msra.mxu0 0
        %2252 = vmatprep.subr.bf16.mxu0 0
        %2253 = vmatpush1.bf16.xpose.msra.mxu0 0
        %2254 = vmatprep.subr.bf16.mxu0 0
        %2255 = vmatpush1.bf16.xpose.msra.mxu0 0
        %2256 = vmatprep.subr.bf16.mxu0 0
        %2257 = vmatpush1.bf16.xpose.msra.mxu0 0
        %2258 = vmatprep.subr.bf16.mxu0 0
        %2259 = vmatpush1.bf16.xpose.msra.mxu0 0
        %2260 = vmatprep.mubr.bf16.mxu0 0
        %2261 = vmatmul.mubr.bf16.gmra.mrb[0].mxu0 %v2223
        %v2262 = vpop.f32.mrb[0].mxu0
        %v2263 = vadd.f32 0.0, %v2262
        %v2264 = vpop.f32.mrb[0].mxu0
        %v2265 = vpop.f32.mrb[0].mxu0
        %v2266 = vadd.f32 0.0, %v2265
        %v2267 = vpop.f32.mrb[0].mxu0
        %2268 = vdwg.mxu0
        %v2269 = vsel %vm1283, %v2263, -inf
        %2270 = vmax.xlane.f32.xlu0 %v2269
        %v2271 = vpop.xlane.xlu0 %2270
        %v2272 = vsel %vm1283, %v2266, -inf
        %2273 = vmax.xlane.f32.xlu0 %v2272
        %v2274 = vpop.xlane.xlu0 %2273
        %v2275 = vsub.f32 %v2263, %v2271
        %v2276 = vsub.f32 %v2266, %v2274
        %v2277 = vmul.f32 %v2275, 1.442695
        %v2278 = vpow.pop %v2277
        %v2279 = vmul.f32 %v2276, 1.442695
        %v2280 = vpow.pop %v2279
        %v2281 = vsel %vm1283, %v2278, 0.0
        %2282 = vadd.xlane.f32.xlu0 %v2281
        %v2283 = vpop.xlane.xlu0 %2282
        %v2284 = vsel %vm1283, %v2280, 0.0
        %2285 = vadd.xlane.f32.xlu0 %v2284
        %v2286 = vpop.xlane.xlu0 %2285
        %v2287 = vpack.c.bf16 %v2280, %v2278
        %v2289 = vsel %vm1283, %v2287, 0
        %2291 = vmatprep.subr.bf16.mxu0 0
        %2292 = vmatpush1.bf16.msra.mxu0 %v1225
        %2293 = vmatprep.subr.bf16.mxu0 0
        %2294 = vmatpush1.bf16.msra.mxu0 0
        %2295 = vmatprep.subr.bf16.mxu0 0
        %2296 = vmatpush1.bf16.msra.mxu0 0
        %2297 = vmatprep.subr.bf16.mxu0 0
        %2298 = vmatpush1.bf16.msra.mxu0 0
        %2299 = vmatprep.subr.bf16.mxu0 0
        %2300 = vmatpush1.bf16.msra.mxu0 0
        %2301 = vmatprep.subr.bf16.mxu0 0
        %2302 = vmatpush1.bf16.msra.mxu0 0
        %2303 = vmatprep.subr.bf16.mxu0 0
        %2304 = vmatpush1.bf16.msra.mxu0 0
        %2305 = vmatprep.subr.bf16.mxu0 0
        %2306 = vmatpush1.bf16.msra.mxu0 0
        %2307 = vmatprep.subr.bf16.mxu0 0
        %2308 = vmatpush1.bf16.msra.mxu0 0
        %2309 = vmatprep.subr.bf16.mxu0 0
        %2310 = vmatpush1.bf16.msra.mxu0 0
        %2311 = vmatprep.subr.bf16.mxu0 0
        %2312 = vmatpush1.bf16.msra.mxu0 0
        %2313 = vmatprep.subr.bf16.mxu0 0
        %2314 = vmatpush1.bf16.msra.mxu0 0
        %2315 = vmatprep.subr.bf16.mxu0 0
        %2316 = vmatpush1.bf16.msra.mxu0 0
        %2317 = vmatprep.subr.bf16.mxu0 0
        %2318 = vmatpush1.bf16.msra.mxu0 0
        %2319 = vmatprep.subr.bf16.mxu0 0
        %2320 = vmatpush1.bf16.msra.mxu0 0
        %2321 = vmatprep.subr.bf16.mxu0 0
        %2322 = vmatpush1.bf16.msra.mxu0 0
        %2323 = vmatprep.mubr.bf16.mxu0 0
        %2324 = vmatmul.mubr.bf16.gmra.mrb[0].mxu0 %v2289
        %v2325 = vpop.f32.mrb[0].mxu0
        %v2326 = vadd.f32 0.0, %v2325
        %v2327 = vpop.f32.mrb[0].mxu0
        %v2328 = vpop.f32.mrb[0].mxu0
        %v2329 = vadd.f32 0.0, %v2328
        %v2330 = vpop.f32.mrb[0].mxu0
        %2331 = vdwg.mxu0
        %v2332 = vrcp.pop %v2283
        %v2333 = vrcp.pop %v2286
        %v2334 = vmul.f32 %v2326, %v2332
        %v2335 = vmul.f32 %v2329, %v2333
        %v2336 = vpack.c.bf16 %v2335, %v2334
        %2337 = vst.msk [vmem:[#allocation2 + $0x20] sm:$0xff] %vm1235, %v2336
        %2339 = vrot.lane.b32.xlu0 %v1223, 64
        %v2340 = vpop.permute.xlu0 %2339
        %2342 = vrot.lane.b32.xlu0 %v1224, 64
        %v2343 = vpop.permute.xlu0 %2342
        %v2345 = vsel %vm1235, %v2340, 0
        %v2348 = vsel %vm1235, %v2343, 0
        %2350 = vmatprep.subr.bf16.mxu0 0
        %2351 = vmatpush1.bf16.xpose.msra.mxu0 %v2348
        %2352 = vmatprep.subr.bf16.mxu0 0
        %2353 = vmatpush1.bf16.xpose.msra.mxu0 0
        %2354 = vmatprep.subr.bf16.mxu0 0
        %2355 = vmatpush1.bf16.xpose.msra.mxu0 0
        %2356 = vmatprep.subr.bf16.mxu0 0
        %2357 = vmatpush1.bf16.xpose.msra.mxu0 0
        %2358 = vmatprep.subr.bf16.mxu0 0
        %2359 = vmatpush1.bf16.xpose.msra.mxu0 0
        %2360 = vmatprep.subr.bf16.mxu0 0
        %2361 = vmatpush1.bf16.xpose.msra.mxu0 0
        %2362 = vmatprep.subr.bf16.mxu0 0
        %2363 = vmatpush1.bf16.xpose.msra.mxu0 0
        %2364 = vmatprep.subr.bf16.mxu0 0
        %2365 = vmatpush1.bf16.xpose.msra.mxu0 0
        %2366 = vmatprep.subr.bf16.mxu0 0
        %2367 = vmatpush1.bf16.xpose.msra.mxu0 0
        %2368 = vmatprep.subr.bf16.mxu0 0
        %2369 = vmatpush1.bf16.xpose.msra.mxu0 0
        %2370 = vmatprep.subr.bf16.mxu0 0
        %2371 = vmatpush1.bf16.xpose.msra.mxu0 0
        %2372 = vmatprep.subr.bf16.mxu0 0
        %2373 = vmatpush1.bf16.xpose.msra.mxu0 0
        %2374 = vmatprep.subr.bf16.mxu0 0
        %2375 = vmatpush1.bf16.xpose.msra.mxu0 0
        %2376 = vmatprep.subr.bf16.mxu0 0
        %2377 = vmatpush1.bf16.xpose.msra.mxu0 0
        %2378 = vmatprep.subr.bf16.mxu0 0
        %2379 = vmatpush1.bf16.xpose.msra.mxu0 0
        %2380 = vmatprep.subr.bf16.mxu0 0
        %2381 = vmatpush1.bf16.xpose.msra.mxu0 0
        %2382 = vmatprep.mubr.bf16.mxu0 0
        %2383 = vmatmul.mubr.bf16.gmra.mrb[0].mxu0 %v2345
        %v2384 = vpop.f32.mrb[0].mxu0
        %v2385 = vadd.f32 0.0, %v2384
        %v2386 = vpop.f32.mrb[0].mxu0
        %v2387 = vpop.f32.mrb[0].mxu0
        %v2388 = vadd.f32 0.0, %v2387
        %v2389 = vpop.f32.mrb[0].mxu0
        %2390 = vdwg.mxu0
        %v2391 = vsel %vm1283, %v2385, -inf
        %2392 = vmax.xlane.f32.xlu0 %v2391
        %v2393 = vpop.xlane.xlu0 %2392
        %v2394 = vsel %vm1283, %v2388, -inf
        %2395 = vmax.xlane.f32.xlu0 %v2394
        %v2396 = vpop.xlane.xlu0 %2395
        %v2397 = vsub.f32 %v2385, %v2393
        %v2398 = vsub.f32 %v2388, %v2396
        %v2399 = vmul.f32 %v2397, 1.442695
        %v2400 = vpow.pop %v2399
        %v2401 = vmul.f32 %v2398, 1.442695
        %v2402 = vpow.pop %v2401
        %v2403 = vsel %vm1283, %v2400, 0.0
        %2404 = vadd.xlane.f32.xlu0 %v2403
        %v2405 = vpop.xlane.xlu0 %2404
        %v2406 = vsel %vm1283, %v2402, 0.0
        %2407 = vadd.xlane.f32.xlu0 %v2406
        %v2408 = vpop.xlane.xlu0 %2407
        %v2409 = vpack.c.bf16 %v2402, %v2400
        %2411 = vrot.lane.b32.xlu0 %v1225, 64
        %v2412 = vpop.permute.xlu0 %2411
        %v2415 = vsel %vm1283, %v2409, 0
        %2417 = vmatprep.subr.bf16.mxu0 0
        %2418 = vmatpush1.bf16.msra.mxu0 %v2412
        %2419 = vmatprep.subr.bf16.mxu0 0
        %2420 = vmatpush1.bf16.msra.mxu0 0
        %2421 = vmatprep.subr.bf16.mxu0 0
        %2422 = vmatpush1.bf16.msra.mxu0 0
        %2423 = vmatprep.subr.bf16.mxu0 0
        %2424 = vmatpush1.bf16.msra.mxu0 0
        %2425 = vmatprep.subr.bf16.mxu0 0
        %2426 = vmatpush1.bf16.msra.mxu0 0
        %2427 = vmatprep.subr.bf16.mxu0 0
        %2428 = vmatpush1.bf16.msra.mxu0 0
        %2429 = vmatprep.subr.bf16.mxu0 0
        %2430 = vmatpush1.bf16.msra.mxu0 0
        %2431 = vmatprep.subr.bf16.mxu0 0
        %2432 = vmatpush1.bf16.msra.mxu0 0
        %2433 = vmatprep.subr.bf16.mxu0 0
        %2434 = vmatpush1.bf16.msra.mxu0 0
        %2435 = vmatprep.subr.bf16.mxu0 0
        %2436 = vmatpush1.bf16.msra.mxu0 0
        %2437 = vmatprep.subr.bf16.mxu0 0
        %2438 = vmatpush1.bf16.msra.mxu0 0
        %2439 = vmatprep.subr.bf16.mxu0 0
        %2440 = vmatpush1.bf16.msra.mxu0 0
        %2441 = vmatprep.subr.bf16.mxu0 0
        %2442 = vmatpush1.bf16.msra.mxu0 0
        %2443 = vmatprep.subr.bf16.mxu0 0
        %2444 = vmatpush1.bf16.msra.mxu0 0
        %2445 = vmatprep.subr.bf16.mxu0 0
        %2446 = vmatpush1.bf16.msra.mxu0 0
        %2447 = vmatprep.subr.bf16.mxu0 0
        %2448 = vmatpush1.bf16.msra.mxu0 0
        %2449 = vmatprep.mubr.bf16.mxu0 0
        %2450 = vmatmul.mubr.bf16.gmra.mrb[0].mxu0 %v2415
        %v2451 = vpop.f32.mrb[0].mxu0
        %v2452 = vadd.f32 0.0, %v2451
        %v2453 = vpop.f32.mrb[0].mxu0
        %v2454 = vpop.f32.mrb[0].mxu0
        %v2455 = vadd.f32 0.0, %v2454
        %v2456 = vpop.f32.mrb[0].mxu0
        %2457 = vdwg.mxu0
        %v2458 = vrcp.pop %v2405
        %v2459 = vrcp.pop %v2408
        %v2460 = vmul.f32 %v2452, %v2458
        %v2461 = vmul.f32 %v2455, %v2459
        %v2462 = vpack.c.bf16 %v2461, %v2460
        %2464 = vrot.lane.b32.xlu0 %v2462, 64
        %v2465 = vpop.permute.xlu0 %2464
        %2467 = vst.msk [vmem:[#allocation2 + $0x20] sm:$0xff] %vm1482, %v2465
        %v2469 = vsel %vm1235, %v1226, 0
        %v2472 = vsel %vm1235, %v1227, 0
        %2474 = vmatprep.subr.bf16.mxu0 0
        %2475 = vmatpush1.bf16.xpose.msra.mxu0 %v2472
        %2476 = vmatprep.subr.bf16.mxu0 0
        %2477 = vmatpush1.bf16.xpose.msra.mxu0 0
        %2478 = vmatprep.subr.bf16.mxu0 0
        %2479 = vmatpush1.bf16.xpose.msra.mxu0 0
        %2480 = vmatprep.subr.bf16.mxu0 0
        %2481 = vmatpush1.bf16.xpose.msra.mxu0 0
        %2482 = vmatprep.subr.bf16.mxu0 0
        %2483 = vmatpush1.bf16.xpose.msra.mxu0 0
        %2484 = vmatprep.subr.bf16.mxu0 0
        %2485 = vmatpush1.bf16.xpose.msra.mxu0 0
        %2486 = vmatprep.subr.bf16.mxu0 0
        %2487 = vmatpush1.bf16.xpose.msra.mxu0 0
        %2488 = vmatprep.subr.bf16.mxu0 0
        %2489 = vmatpush1.bf16.xpose.msra.mxu0 0
        %2490 = vmatprep.subr.bf16.mxu0 0
        %2491 = vmatpush1.bf16.xpose.msra.mxu0 0
        %2492 = vmatprep.subr.bf16.mxu0 0
        %2493 = vmatpush1.bf16.xpose.msra.mxu0 0
        %2494 = vmatprep.subr.bf16.mxu0 0
        %2495 = vmatpush1.bf16.xpose.msra.mxu0 0
        %2496 = vmatprep.subr.bf16.mxu0 0
        %2497 = vmatpush1.bf16.xpose.msra.mxu0 0
        %2498 = vmatprep.subr.bf16.mxu0 0
        %2499 = vmatpush1.bf16.xpose.msra.mxu0 0
        %2500 = vmatprep.subr.bf16.mxu0 0
        %2501 = vmatpush1.bf16.xpose.msra.mxu0 0
        %2502 = vmatprep.subr.bf16.mxu0 0
        %2503 = vmatpush1.bf16.xpose.msra.mxu0 0
        %2504 = vmatprep.subr.bf16.mxu0 0
        %2505 = vmatpush1.bf16.xpose.msra.mxu0 0
        %2506 = vmatprep.mubr.bf16.mxu0 0
        %2507 = vmatmul.mubr.bf16.gmra.mrb[0].mxu0 %v2469
        %v2508 = vpop.f32.mrb[0].mxu0
        %v2509 = vadd.f32 0.0, %v2508
        %v2510 = vpop.f32.mrb[0].mxu0
        %v2511 = vpop.f32.mrb[0].mxu0
        %v2512 = vadd.f32 0.0, %v2511
        %v2513 = vpop.f32.mrb[0].mxu0
        %2514 = vdwg.mxu0
        %v2515 = vsel %vm1283, %v2509, -inf
        %2516 = vmax.xlane.f32.xlu0 %v2515
        %v2517 = vpop.xlane.xlu0 %2516
        %v2518 = vsel %vm1283, %v2512, -inf
        %2519 = vmax.xlane.f32.xlu0 %v2518
        %v2520 = vpop.xlane.xlu0 %2519
        %v2521 = vsub.f32 %v2509, %v2517
        %v2522 = vsub.f32 %v2512, %v2520
        %v2523 = vmul.f32 %v2521, 1.442695
        %v2524 = vpow.pop %v2523
        %v2525 = vmul.f32 %v2522, 1.442695
        %v2526 = vpow.pop %v2525
        %v2527 = vsel %vm1283, %v2524, 0.0
        %2528 = vadd.xlane.f32.xlu0 %v2527
        %v2529 = vpop.xlane.xlu0 %2528
        %v2530 = vsel %vm1283, %v2526, 0.0
        %2531 = vadd.xlane.f32.xlu0 %v2530
        %v2532 = vpop.xlane.xlu0 %2531
        %v2533 = vpack.c.bf16 %v2526, %v2524
        %v2535 = vsel %vm1283, %v2533, 0
        %2537 = vmatprep.subr.bf16.mxu0 0
        %2538 = vmatpush1.bf16.msra.mxu0 %v1228
        %2539 = vmatprep.subr.bf16.mxu0 0
        %2540 = vmatpush1.bf16.msra.mxu0 0
        %2541 = vmatprep.subr.bf16.mxu0 0
        %2542 = vmatpush1.bf16.msra.mxu0 0
        %2543 = vmatprep.subr.bf16.mxu0 0
        %2544 = vmatpush1.bf16.msra.mxu0 0
        %2545 = vmatprep.subr.bf16.mxu0 0
        %2546 = vmatpush1.bf16.msra.mxu0 0
        %2547 = vmatprep.subr.bf16.mxu0 0
        %2548 = vmatpush1.bf16.msra.mxu0 0
        %2549 = vmatprep.subr.bf16.mxu0 0
        %2550 = vmatpush1.bf16.msra.mxu0 0
        %2551 = vmatprep.subr.bf16.mxu0 0
        %2552 = vmatpush1.bf16.msra.mxu0 0
        %2553 = vmatprep.subr.bf16.mxu0 0
        %2554 = vmatpush1.bf16.msra.mxu0 0
        %2555 = vmatprep.subr.bf16.mxu0 0
        %2556 = vmatpush1.bf16.msra.mxu0 0
        %2557 = vmatprep.subr.bf16.mxu0 0
        %2558 = vmatpush1.bf16.msra.mxu0 0
        %2559 = vmatprep.subr.bf16.mxu0 0
        %2560 = vmatpush1.bf16.msra.mxu0 0
        %2561 = vmatprep.subr.bf16.mxu0 0
        %2562 = vmatpush1.bf16.msra.mxu0 0
        %2563 = vmatprep.subr.bf16.mxu0 0
        %2564 = vmatpush1.bf16.msra.mxu0 0
        %2565 = vmatprep.subr.bf16.mxu0 0
        %2566 = vmatpush1.bf16.msra.mxu0 0
        %2567 = vmatprep.subr.bf16.mxu0 0
        %2568 = vmatpush1.bf16.msra.mxu0 0
        %2569 = vmatprep.mubr.bf16.mxu0 0
        %2570 = vmatmul.mubr.bf16.gmra.mrb[0].mxu0 %v2535
        %v2571 = vpop.f32.mrb[0].mxu0
        %v2572 = vadd.f32 0.0, %v2571
        %v2573 = vpop.f32.mrb[0].mxu0
        %v2574 = vpop.f32.mrb[0].mxu0
        %v2575 = vadd.f32 0.0, %v2574
        %v2576 = vpop.f32.mrb[0].mxu0
        %2577 = vdwg.mxu0
        %v2578 = vrcp.pop %v2529
        %v2579 = vrcp.pop %v2532
        %v2580 = vmul.f32 %v2572, %v2578
        %v2581 = vmul.f32 %v2575, %v2579
        %v2582 = vpack.c.bf16 %v2581, %v2580
        %2583 = vst.msk [vmem:[#allocation2 + $0x28] sm:$0xff] %vm1235, %v2582
        %2585 = vrot.lane.b32.xlu0 %v1226, 64
        %v2586 = vpop.permute.xlu0 %2585
        %2588 = vrot.lane.b32.xlu0 %v1227, 64
        %v2589 = vpop.permute.xlu0 %2588
        %v2591 = vsel %vm1235, %v2586, 0
        %v2594 = vsel %vm1235, %v2589, 0
        %2596 = vmatprep.subr.bf16.mxu0 0
        %2597 = vmatpush1.bf16.xpose.msra.mxu0 %v2594
        %2598 = vmatprep.subr.bf16.mxu0 0
        %2599 = vmatpush1.bf16.xpose.msra.mxu0 0
        %2600 = vmatprep.subr.bf16.mxu0 0
        %2601 = vmatpush1.bf16.xpose.msra.mxu0 0
        %2602 = vmatprep.subr.bf16.mxu0 0
        %2603 = vmatpush1.bf16.xpose.msra.mxu0 0
        %2604 = vmatprep.subr.bf16.mxu0 0
        %2605 = vmatpush1.bf16.xpose.msra.mxu0 0
        %2606 = vmatprep.subr.bf16.mxu0 0
        %2607 = vmatpush1.bf16.xpose.msra.mxu0 0
        %2608 = vmatprep.subr.bf16.mxu0 0
        %2609 = vmatpush1.bf16.xpose.msra.mxu0 0
        %2610 = vmatprep.subr.bf16.mxu0 0
        %2611 = vmatpush1.bf16.xpose.msra.mxu0 0
        %2612 = vmatprep.subr.bf16.mxu0 0
        %2613 = vmatpush1.bf16.xpose.msra.mxu0 0
        %2614 = vmatprep.subr.bf16.mxu0 0
        %2615 = vmatpush1.bf16.xpose.msra.mxu0 0
        %2616 = vmatprep.subr.bf16.mxu0 0
        %2617 = vmatpush1.bf16.xpose.msra.mxu0 0
        %2618 = vmatprep.subr.bf16.mxu0 0
        %2619 = vmatpush1.bf16.xpose.msra.mxu0 0
        %2620 = vmatprep.subr.bf16.mxu0 0
        %2621 = vmatpush1.bf16.xpose.msra.mxu0 0
        %2622 = vmatprep.subr.bf16.mxu0 0
        %2623 = vmatpush1.bf16.xpose.msra.mxu0 0
        %2624 = vmatprep.subr.bf16.mxu0 0
        %2625 = vmatpush1.bf16.xpose.msra.mxu0 0
        %2626 = vmatprep.subr.bf16.mxu0 0
        %2627 = vmatpush1.bf16.xpose.msra.mxu0 0
        %2628 = vmatprep.mubr.bf16.mxu0 0
        %2629 = vmatmul.mubr.bf16.gmra.mrb[0].mxu0 %v2591
        %v2630 = vpop.f32.mrb[0].mxu0
        %v2631 = vadd.f32 0.0, %v2630
        %v2632 = vpop.f32.mrb[0].mxu0
        %v2633 = vpop.f32.mrb[0].mxu0
        %v2634 = vadd.f32 0.0, %v2633
        %v2635 = vpop.f32.mrb[0].mxu0
        %2636 = vdwg.mxu0
        %v2637 = vsel %vm1283, %v2631, -inf
        %2638 = vmax.xlane.f32.xlu0 %v2637
        %v2639 = vpop.xlane.xlu0 %2638
        %v2640 = vsel %vm1283, %v2634, -inf
        %2641 = vmax.xlane.f32.xlu0 %v2640
        %v2642 = vpop.xlane.xlu0 %2641
        %v2643 = vsub.f32 %v2631, %v2639
        %v2644 = vsub.f32 %v2634, %v2642
        %v2645 = vmul.f32 %v2643, 1.442695
        %v2646 = vpow.pop %v2645
        %v2647 = vmul.f32 %v2644, 1.442695
        %v2648 = vpow.pop %v2647
        %v2649 = vsel %vm1283, %v2646, 0.0
        %2650 = vadd.xlane.f32.xlu0 %v2649
        %v2651 = vpop.xlane.xlu0 %2650
        %v2652 = vsel %vm1283, %v2648, 0.0
        %2653 = vadd.xlane.f32.xlu0 %v2652
        %v2654 = vpop.xlane.xlu0 %2653
        %v2655 = vpack.c.bf16 %v2648, %v2646
        %2657 = vrot.lane.b32.xlu0 %v1228, 64
        %v2658 = vpop.permute.xlu0 %2657
        %v2661 = vsel %vm1283, %v2655, 0
        %2663 = vmatprep.subr.bf16.mxu0 0
        %2664 = vmatpush1.bf16.msra.mxu0 %v2658
        %2665 = vmatprep.subr.bf16.mxu0 0
        %2666 = vmatpush1.bf16.msra.mxu0 0
        %2667 = vmatprep.subr.bf16.mxu0 0
        %2668 = vmatpush1.bf16.msra.mxu0 0
        %2669 = vmatprep.subr.bf16.mxu0 0
        %2670 = vmatpush1.bf16.msra.mxu0 0
        %2671 = vmatprep.subr.bf16.mxu0 0
        %2672 = vmatpush1.bf16.msra.mxu0 0
        %2673 = vmatprep.subr.bf16.mxu0 0
        %2674 = vmatpush1.bf16.msra.mxu0 0
        %2675 = vmatprep.subr.bf16.mxu0 0
        %2676 = vmatpush1.bf16.msra.mxu0 0
        %2677 = vmatprep.subr.bf16.mxu0 0
        %2678 = vmatpush1.bf16.msra.mxu0 0
        %2679 = vmatprep.subr.bf16.mxu0 0
        %2680 = vmatpush1.bf16.msra.mxu0 0
        %2681 = vmatprep.subr.bf16.mxu0 0
        %2682 = vmatpush1.bf16.msra.mxu0 0
        %2683 = vmatprep.subr.bf16.mxu0 0
        %2684 = vmatpush1.bf16.msra.mxu0 0
        %2685 = vmatprep.subr.bf16.mxu0 0
        %2686 = vmatpush1.bf16.msra.mxu0 0
        %2687 = vmatprep.subr.bf16.mxu0 0
        %2688 = vmatpush1.bf16.msra.mxu0 0
        %2689 = vmatprep.subr.bf16.mxu0 0
        %2690 = vmatpush1.bf16.msra.mxu0 0
        %2691 = vmatprep.subr.bf16.mxu0 0
        %2692 = vmatpush1.bf16.msra.mxu0 0
        %2693 = vmatprep.subr.bf16.mxu0 0
        %2694 = vmatpush1.bf16.msra.mxu0 0
        %2695 = vmatprep.mubr.bf16.mxu0 0
        %2696 = vmatmul.mubr.bf16.gmra.mrb[0].mxu0 %v2661
        %v2697 = vpop.f32.mrb[0].mxu0
        %v2698 = vadd.f32 0.0, %v2697
        %v2699 = vpop.f32.mrb[0].mxu0
        %v2700 = vpop.f32.mrb[0].mxu0
        %v2701 = vadd.f32 0.0, %v2700
        %v2702 = vpop.f32.mrb[0].mxu0
        %2703 = vdwg.mxu0
        %v2704 = vrcp.pop %v2651
        %v2705 = vrcp.pop %v2654
        %v2706 = vmul.f32 %v2698, %v2704
        %v2707 = vmul.f32 %v2701, %v2705
        %v2708 = vpack.c.bf16 %v2707, %v2706
        %2710 = vrot.lane.b32.xlu0 %v2708, 64
        %v2711 = vpop.permute.xlu0 %2710
        %2713 = vst.msk [vmem:[#allocation2 + $0x28] sm:$0xff] %vm1482, %v2711
        %v2715 = vsel %vm1235, %v1229, 0
        %v2718 = vsel %vm1235, %v1230, 0
        %2720 = vmatprep.subr.bf16.mxu0 0
        %2721 = vmatpush1.bf16.xpose.msra.mxu0 %v2718
        %2722 = vmatprep.subr.bf16.mxu0 0
        %2723 = vmatpush1.bf16.xpose.msra.mxu0 0
        %2724 = vmatprep.subr.bf16.mxu0 0
        %2725 = vmatpush1.bf16.xpose.msra.mxu0 0
        %2726 = vmatprep.subr.bf16.mxu0 0
        %2727 = vmatpush1.bf16.xpose.msra.mxu0 0
        %2728 = vmatprep.subr.bf16.mxu0 0
        %2729 = vmatpush1.bf16.xpose.msra.mxu0 0
        %2730 = vmatprep.subr.bf16.mxu0 0
        %2731 = vmatpush1.bf16.xpose.msra.mxu0 0
        %2732 = vmatprep.subr.bf16.mxu0 0
        %2733 = vmatpush1.bf16.xpose.msra.mxu0 0
        %2734 = vmatprep.subr.bf16.mxu0 0
        %2735 = vmatpush1.bf16.xpose.msra.mxu0 0
        %2736 = vmatprep.subr.bf16.mxu0 0
        %2737 = vmatpush1.bf16.xpose.msra.mxu0 0
        %2738 = vmatprep.subr.bf16.mxu0 0
        %2739 = vmatpush1.bf16.xpose.msra.mxu0 0
        %2740 = vmatprep.subr.bf16.mxu0 0
        %2741 = vmatpush1.bf16.xpose.msra.mxu0 0
        %2742 = vmatprep.subr.bf16.mxu0 0
        %2743 = vmatpush1.bf16.xpose.msra.mxu0 0
        %2744 = vmatprep.subr.bf16.mxu0 0
        %2745 = vmatpush1.bf16.xpose.msra.mxu0 0
        %2746 = vmatprep.subr.bf16.mxu0 0
        %2747 = vmatpush1.bf16.xpose.msra.mxu0 0
        %2748 = vmatprep.subr.bf16.mxu0 0
        %2749 = vmatpush1.bf16.xpose.msra.mxu0 0
        %2750 = vmatprep.subr.bf16.mxu0 0
        %2751 = vmatpush1.bf16.xpose.msra.mxu0 0
        %2752 = vmatprep.mubr.bf16.mxu0 0
        %2753 = vmatmul.mubr.bf16.gmra.mrb[0].mxu0 %v2715
        %v2754 = vpop.f32.mrb[0].mxu0
        %v2755 = vadd.f32 0.0, %v2754
        %v2756 = vpop.f32.mrb[0].mxu0
        %v2757 = vpop.f32.mrb[0].mxu0
        %v2758 = vadd.f32 0.0, %v2757
        %v2759 = vpop.f32.mrb[0].mxu0
        %2760 = vdwg.mxu0
        %v2761 = vsel %vm1283, %v2755, -inf
        %2762 = vmax.xlane.f32.xlu0 %v2761
        %v2763 = vpop.xlane.xlu0 %2762
        %v2764 = vsel %vm1283, %v2758, -inf
        %2765 = vmax.xlane.f32.xlu0 %v2764
        %v2766 = vpop.xlane.xlu0 %2765
        %v2767 = vsub.f32 %v2755, %v2763
        %v2768 = vsub.f32 %v2758, %v2766
        %v2769 = vmul.f32 %v2767, 1.442695
        %v2770 = vpow.pop %v2769
        %v2771 = vmul.f32 %v2768, 1.442695
        %v2772 = vpow.pop %v2771
        %v2773 = vsel %vm1283, %v2770, 0.0
        %2774 = vadd.xlane.f32.xlu0 %v2773
        %v2775 = vpop.xlane.xlu0 %2774
        %v2776 = vsel %vm1283, %v2772, 0.0
        %2777 = vadd.xlane.f32.xlu0 %v2776
        %v2778 = vpop.xlane.xlu0 %2777
        %v2779 = vpack.c.bf16 %v2772, %v2770
        %v2781 = vsel %vm1283, %v2779, 0
        %2783 = vmatprep.subr.bf16.mxu0 0
        %2784 = vmatpush1.bf16.msra.mxu0 %v1231
        %2785 = vmatprep.subr.bf16.mxu0 0
        %2786 = vmatpush1.bf16.msra.mxu0 0
        %2787 = vmatprep.subr.bf16.mxu0 0
        %2788 = vmatpush1.bf16.msra.mxu0 0
        %2789 = vmatprep.subr.bf16.mxu0 0
        %2790 = vmatpush1.bf16.msra.mxu0 0
        %2791 = vmatprep.subr.bf16.mxu0 0
        %2792 = vmatpush1.bf16.msra.mxu0 0
        %2793 = vmatprep.subr.bf16.mxu0 0
        %2794 = vmatpush1.bf16.msra.mxu0 0
        %2795 = vmatprep.subr.bf16.mxu0 0
        %2796 = vmatpush1.bf16.msra.mxu0 0
        %2797 = vmatprep.subr.bf16.mxu0 0
        %2798 = vmatpush1.bf16.msra.mxu0 0
        %2799 = vmatprep.subr.bf16.mxu0 0
        %2800 = vmatpush1.bf16.msra.mxu0 0
        %2801 = vmatprep.subr.bf16.mxu0 0
        %2802 = vmatpush1.bf16.msra.mxu0 0
        %2803 = vmatprep.subr.bf16.mxu0 0
        %2804 = vmatpush1.bf16.msra.mxu0 0
        %2805 = vmatprep.subr.bf16.mxu0 0
        %2806 = vmatpush1.bf16.msra.mxu0 0
        %2807 = vmatprep.subr.bf16.mxu0 0
        %2808 = vmatpush1.bf16.msra.mxu0 0
        %2809 = vmatprep.subr.bf16.mxu0 0
        %2810 = vmatpush1.bf16.msra.mxu0 0
        %2811 = vmatprep.subr.bf16.mxu0 0
        %2812 = vmatpush1.bf16.msra.mxu0 0
        %2813 = vmatprep.subr.bf16.mxu0 0
        %2814 = vmatpush1.bf16.msra.mxu0 0
        %2815 = vmatprep.mubr.bf16.mxu0 0
        %2816 = vmatmul.mubr.bf16.gmra.mrb[0].mxu0 %v2781
        %v2817 = vpop.f32.mrb[0].mxu0
        %v2818 = vadd.f32 0.0, %v2817
        %v2819 = vpop.f32.mrb[0].mxu0
        %v2820 = vpop.f32.mrb[0].mxu0
        %v2821 = vadd.f32 0.0, %v2820
        %v2822 = vpop.f32.mrb[0].mxu0
        %2823 = vdwg.mxu0
        %v2824 = vrcp.pop %v2775
        %v2825 = vrcp.pop %v2778
        %v2826 = vmul.f32 %v2818, %v2824
        %v2827 = vmul.f32 %v2821, %v2825
        %v2828 = vpack.c.bf16 %v2827, %v2826
        %2829 = vst.msk [vmem:[#allocation2 + $0x30] sm:$0xff] %vm1235, %v2828
        %2831 = vrot.lane.b32.xlu0 %v1229, 64
        %v2832 = vpop.permute.xlu0 %2831
        %2834 = vrot.lane.b32.xlu0 %v1230, 64
        %v2835 = vpop.permute.xlu0 %2834
        %v2837 = vsel %vm1235, %v2832, 0
        %v2840 = vsel %vm1235, %v2835, 0
        %2842 = vmatprep.subr.bf16.mxu0 0
        %2843 = vmatpush1.bf16.xpose.msra.mxu0 %v2840
        %2844 = vmatprep.subr.bf16.mxu0 0
        %2845 = vmatpush1.bf16.xpose.msra.mxu0 0
        %2846 = vmatprep.subr.bf16.mxu0 0
        %2847 = vmatpush1.bf16.xpose.msra.mxu0 0
        %2848 = vmatprep.subr.bf16.mxu0 0
        %2849 = vmatpush1.bf16.xpose.msra.mxu0 0
        %2850 = vmatprep.subr.bf16.mxu0 0
        %2851 = vmatpush1.bf16.xpose.msra.mxu0 0
        %2852 = vmatprep.subr.bf16.mxu0 0
        %2853 = vmatpush1.bf16.xpose.msra.mxu0 0
        %2854 = vmatprep.subr.bf16.mxu0 0
        %2855 = vmatpush1.bf16.xpose.msra.mxu0 0
        %2856 = vmatprep.subr.bf16.mxu0 0
        %2857 = vmatpush1.bf16.xpose.msra.mxu0 0
        %2858 = vmatprep.subr.bf16.mxu0 0
        %2859 = vmatpush1.bf16.xpose.msra.mxu0 0
        %2860 = vmatprep.subr.bf16.mxu0 0
        %2861 = vmatpush1.bf16.xpose.msra.mxu0 0
        %2862 = vmatprep.subr.bf16.mxu0 0
        %2863 = vmatpush1.bf16.xpose.msra.mxu0 0
        %2864 = vmatprep.subr.bf16.mxu0 0
        %2865 = vmatpush1.bf16.xpose.msra.mxu0 0
        %2866 = vmatprep.subr.bf16.mxu0 0
        %2867 = vmatpush1.bf16.xpose.msra.mxu0 0
        %2868 = vmatprep.subr.bf16.mxu0 0
        %2869 = vmatpush1.bf16.xpose.msra.mxu0 0
        %2870 = vmatprep.subr.bf16.mxu0 0
        %2871 = vmatpush1.bf16.xpose.msra.mxu0 0
        %2872 = vmatprep.subr.bf16.mxu0 0
        %2873 = vmatpush1.bf16.xpose.msra.mxu0 0
        %2874 = vmatprep.mubr.bf16.mxu0 0
        %2875 = vmatmul.mubr.bf16.gmra.mrb[0].mxu0 %v2837
        %v2876 = vpop.f32.mrb[0].mxu0
        %v2877 = vadd.f32 0.0, %v2876
        %v2878 = vpop.f32.mrb[0].mxu0
        %v2879 = vpop.f32.mrb[0].mxu0
        %v2880 = vadd.f32 0.0, %v2879
        %v2881 = vpop.f32.mrb[0].mxu0
        %2882 = vdwg.mxu0
        %v2883 = vsel %vm1283, %v2877, -inf
        %2884 = vmax.xlane.f32.xlu0 %v2883
        %v2885 = vpop.xlane.xlu0 %2884
        %v2886 = vsel %vm1283, %v2880, -inf
        %2887 = vmax.xlane.f32.xlu0 %v2886
        %v2888 = vpop.xlane.xlu0 %2887
        %v2889 = vsub.f32 %v2877, %v2885
        %v2890 = vsub.f32 %v2880, %v2888
        %v2891 = vmul.f32 %v2889, 1.442695
        %v2892 = vpow.pop %v2891
        %v2893 = vmul.f32 %v2890, 1.442695
        %v2894 = vpow.pop %v2893
        %v2895 = vsel %vm1283, %v2892, 0.0
        %2896 = vadd.xlane.f32.xlu0 %v2895
        %v2897 = vpop.xlane.xlu0 %2896
        %v2898 = vsel %vm1283, %v2894, 0.0
        %2899 = vadd.xlane.f32.xlu0 %v2898
        %v2900 = vpop.xlane.xlu0 %2899
        %v2901 = vpack.c.bf16 %v2894, %v2892
        %2903 = vrot.lane.b32.xlu0 %v1231, 64
        %v2904 = vpop.permute.xlu0 %2903
        %v2907 = vsel %vm1283, %v2901, 0
        %2909 = vmatprep.subr.bf16.mxu0 0
        %2910 = vmatpush1.bf16.msra.mxu0 %v2904
        %2911 = vmatprep.subr.bf16.mxu0 0
        %2912 = vmatpush1.bf16.msra.mxu0 0
        %2913 = vmatprep.subr.bf16.mxu0 0
        %2914 = vmatpush1.bf16.msra.mxu0 0
        %2915 = vmatprep.subr.bf16.mxu0 0
        %2916 = vmatpush1.bf16.msra.mxu0 0
        %2917 = vmatprep.subr.bf16.mxu0 0
        %2918 = vmatpush1.bf16.msra.mxu0 0
        %2919 = vmatprep.subr.bf16.mxu0 0
        %2920 = vmatpush1.bf16.msra.mxu0 0
        %2921 = vmatprep.subr.bf16.mxu0 0
        %2922 = vmatpush1.bf16.msra.mxu0 0
        %2923 = vmatprep.subr.bf16.mxu0 0
        %2924 = vmatpush1.bf16.msra.mxu0 0
        %2925 = vmatprep.subr.bf16.mxu0 0
        %2926 = vmatpush1.bf16.msra.mxu0 0
        %2927 = vmatprep.subr.bf16.mxu0 0
        %2928 = vmatpush1.bf16.msra.mxu0 0
        %2929 = vmatprep.subr.bf16.mxu0 0
        %2930 = vmatpush1.bf16.msra.mxu0 0
        %2931 = vmatprep.subr.bf16.mxu0 0
        %2932 = vmatpush1.bf16.msra.mxu0 0
        %2933 = vmatprep.subr.bf16.mxu0 0
        %2934 = vmatpush1.bf16.msra.mxu0 0
        %2935 = vmatprep.subr.bf16.mxu0 0
        %2936 = vmatpush1.bf16.msra.mxu0 0
        %2937 = vmatprep.subr.bf16.mxu0 0
        %2938 = vmatpush1.bf16.msra.mxu0 0
        %2939 = vmatprep.subr.bf16.mxu0 0
        %2940 = vmatpush1.bf16.msra.mxu0 0
        %2941 = vmatprep.mubr.bf16.mxu0 0
        %2942 = vmatmul.mubr.bf16.gmra.mrb[0].mxu0 %v2907
        %v2943 = vpop.f32.mrb[0].mxu0
        %v2944 = vadd.f32 0.0, %v2943
        %v2945 = vpop.f32.mrb[0].mxu0
        %v2946 = vpop.f32.mrb[0].mxu0
        %v2947 = vadd.f32 0.0, %v2946
        %v2948 = vpop.f32.mrb[0].mxu0
        %2949 = vdwg.mxu0
        %v2950 = vrcp.pop %v2897
        %v2951 = vrcp.pop %v2900
        %v2952 = vmul.f32 %v2944, %v2950
        %v2953 = vmul.f32 %v2947, %v2951
        %v2954 = vpack.c.bf16 %v2953, %v2952
        %2956 = vrot.lane.b32.xlu0 %v2954, 64
        %v2957 = vpop.permute.xlu0 %2956
        %2959 = vst.msk [vmem:[#allocation2 + $0x30] sm:$0xff] %vm1482, %v2957
        %v2961 = vsel %vm1235, %v1232, 0
        %v2964 = vsel %vm1235, %v1233, 0
        %2966 = vmatprep.subr.bf16.mxu0 0
        %2967 = vmatpush1.bf16.xpose.msra.mxu0 %v2964
        %2968 = vmatprep.subr.bf16.mxu0 0
        %2969 = vmatpush1.bf16.xpose.msra.mxu0 0
        %2970 = vmatprep.subr.bf16.mxu0 0
        %2971 = vmatpush1.bf16.xpose.msra.mxu0 0
        %2972 = vmatprep.subr.bf16.mxu0 0
        %2973 = vmatpush1.bf16.xpose.msra.mxu0 0
        %2974 = vmatprep.subr.bf16.mxu0 0
        %2975 = vmatpush1.bf16.xpose.msra.mxu0 0
        %2976 = vmatprep.subr.bf16.mxu0 0
        %2977 = vmatpush1.bf16.xpose.msra.mxu0 0
        %2978 = vmatprep.subr.bf16.mxu0 0
        %2979 = vmatpush1.bf16.xpose.msra.mxu0 0
        %2980 = vmatprep.subr.bf16.mxu0 0
        %2981 = vmatpush1.bf16.xpose.msra.mxu0 0
        %2982 = vmatprep.subr.bf16.mxu0 0
        %2983 = vmatpush1.bf16.xpose.msra.mxu0 0
        %2984 = vmatprep.subr.bf16.mxu0 0
        %2985 = vmatpush1.bf16.xpose.msra.mxu0 0
        %2986 = vmatprep.subr.bf16.mxu0 0
        %2987 = vmatpush1.bf16.xpose.msra.mxu0 0
        %2988 = vmatprep.subr.bf16.mxu0 0
        %2989 = vmatpush1.bf16.xpose.msra.mxu0 0
        %2990 = vmatprep.subr.bf16.mxu0 0
        %2991 = vmatpush1.bf16.xpose.msra.mxu0 0
        %2992 = vmatprep.subr.bf16.mxu0 0
        %2993 = vmatpush1.bf16.xpose.msra.mxu0 0
        %2994 = vmatprep.subr.bf16.mxu0 0
        %2995 = vmatpush1.bf16.xpose.msra.mxu0 0
        %2996 = vmatprep.subr.bf16.mxu0 0
        %2997 = vmatpush1.bf16.xpose.msra.mxu0 0
        %2998 = vmatprep.mubr.bf16.mxu0 0
        %2999 = vmatmul.mubr.bf16.gmra.mrb[0].mxu0 %v2961
        %v3000 = vpop.f32.mrb[0].mxu0
        %v3001 = vadd.f32 0.0, %v3000
        %v3002 = vpop.f32.mrb[0].mxu0
        %v3003 = vpop.f32.mrb[0].mxu0
        %v3004 = vadd.f32 0.0, %v3003
        %v3005 = vpop.f32.mrb[0].mxu0
        %3006 = vdwg.mxu0
        %v3007 = vsel %vm1283, %v3001, -inf
        %3008 = vmax.xlane.f32.xlu0 %v3007
        %v3009 = vpop.xlane.xlu0 %3008
        %v3010 = vsel %vm1283, %v3004, -inf
        %3011 = vmax.xlane.f32.xlu0 %v3010
        %v3012 = vpop.xlane.xlu0 %3011
        %v3013 = vsub.f32 %v3001, %v3009
        %v3014 = vsub.f32 %v3004, %v3012
        %v3015 = vmul.f32 %v3013, 1.442695
        %v3016 = vpow.pop %v3015
        %v3017 = vmul.f32 %v3014, 1.442695
        %v3018 = vpow.pop %v3017
        %v3019 = vsel %vm1283, %v3016, 0.0
        %3020 = vadd.xlane.f32.xlu0 %v3019
        %v3021 = vpop.xlane.xlu0 %3020
        %v3022 = vsel %vm1283, %v3018, 0.0
        %3023 = vadd.xlane.f32.xlu0 %v3022
        %v3024 = vpop.xlane.xlu0 %3023
        %v3025 = vpack.c.bf16 %v3018, %v3016
        %v3027 = vsel %vm1283, %v3025, 0
        %3029 = vmatprep.subr.bf16.mxu0 0
        %3030 = vmatpush1.bf16.msra.mxu0 %v1234
        %3031 = vmatprep.subr.bf16.mxu0 0
        %3032 = vmatpush1.bf16.msra.mxu0 0
        %3033 = vmatprep.subr.bf16.mxu0 0
        %3034 = vmatpush1.bf16.msra.mxu0 0
        %3035 = vmatprep.subr.bf16.mxu0 0
        %3036 = vmatpush1.bf16.msra.mxu0 0
        %3037 = vmatprep.subr.bf16.mxu0 0
        %3038 = vmatpush1.bf16.msra.mxu0 0
        %3039 = vmatprep.subr.bf16.mxu0 0
        %3040 = vmatpush1.bf16.msra.mxu0 0
        %3041 = vmatprep.subr.bf16.mxu0 0
        %3042 = vmatpush1.bf16.msra.mxu0 0
        %3043 = vmatprep.subr.bf16.mxu0 0
        %3044 = vmatpush1.bf16.msra.mxu0 0
        %3045 = vmatprep.subr.bf16.mxu0 0
        %3046 = vmatpush1.bf16.msra.mxu0 0
        %3047 = vmatprep.subr.bf16.mxu0 0
        %3048 = vmatpush1.bf16.msra.mxu0 0
        %3049 = vmatprep.subr.bf16.mxu0 0
        %3050 = vmatpush1.bf16.msra.mxu0 0
        %3051 = vmatprep.subr.bf16.mxu0 0
        %3052 = vmatpush1.bf16.msra.mxu0 0
        %3053 = vmatprep.subr.bf16.mxu0 0
        %3054 = vmatpush1.bf16.msra.mxu0 0
        %3055 = vmatprep.subr.bf16.mxu0 0
        %3056 = vmatpush1.bf16.msra.mxu0 0
        %3057 = vmatprep.subr.bf16.mxu0 0
        %3058 = vmatpush1.bf16.msra.mxu0 0
        %3059 = vmatprep.subr.bf16.mxu0 0
        %3060 = vmatpush1.bf16.msra.mxu0 0
        %3061 = vmatprep.mubr.bf16.mxu0 0
        %3062 = vmatmul.mubr.bf16.gmra.mrb[0].mxu0 %v3027
        %v3063 = vpop.f32.mrb[0].mxu0
        %v3064 = vadd.f32 0.0, %v3063
        %v3065 = vpop.f32.mrb[0].mxu0
        %v3066 = vpop.f32.mrb[0].mxu0
        %v3067 = vadd.f32 0.0, %v3066
        %v3068 = vpop.f32.mrb[0].mxu0
        %3069 = vdwg.mxu0
        %v3070 = vrcp.pop %v3021
        %v3071 = vrcp.pop %v3024
        %v3072 = vmul.f32 %v3064, %v3070
        %v3073 = vmul.f32 %v3067, %v3071
        %v3074 = vpack.c.bf16 %v3073, %v3072
        %3075 = vst.msk [vmem:[#allocation2 + $0x38] sm:$0xff] %vm1235, %v3074
        %3077 = vrot.lane.b32.xlu0 %v1232, 64
        %v3078 = vpop.permute.xlu0 %3077
        %3080 = vrot.lane.b32.xlu0 %v1233, 64
        %v3081 = vpop.permute.xlu0 %3080
        %v3083 = vsel %vm1235, %v3078, 0
        %v3086 = vsel %vm1235, %v3081, 0
        %3088 = vmatprep.subr.bf16.mxu0 0
        %3089 = vmatpush1.bf16.xpose.msra.mxu0 %v3086
        %3090 = vmatprep.subr.bf16.mxu0 0
        %3091 = vmatpush1.bf16.xpose.msra.mxu0 0
        %3092 = vmatprep.subr.bf16.mxu0 0
        %3093 = vmatpush1.bf16.xpose.msra.mxu0 0
        %3094 = vmatprep.subr.bf16.mxu0 0
        %3095 = vmatpush1.bf16.xpose.msra.mxu0 0
        %3096 = vmatprep.subr.bf16.mxu0 0
        %3097 = vmatpush1.bf16.xpose.msra.mxu0 0
        %3098 = vmatprep.subr.bf16.mxu0 0
        %3099 = vmatpush1.bf16.xpose.msra.mxu0 0
        %3100 = vmatprep.subr.bf16.mxu0 0
        %3101 = vmatpush1.bf16.xpose.msra.mxu0 0
        %3102 = vmatprep.subr.bf16.mxu0 0
        %3103 = vmatpush1.bf16.xpose.msra.mxu0 0
        %3104 = vmatprep.subr.bf16.mxu0 0
        %3105 = vmatpush1.bf16.xpose.msra.mxu0 0
        %3106 = vmatprep.subr.bf16.mxu0 0
        %3107 = vmatpush1.bf16.xpose.msra.mxu0 0
        %3108 = vmatprep.subr.bf16.mxu0 0
        %3109 = vmatpush1.bf16.xpose.msra.mxu0 0
        %3110 = vmatprep.subr.bf16.mxu0 0
        %3111 = vmatpush1.bf16.xpose.msra.mxu0 0
        %3112 = vmatprep.subr.bf16.mxu0 0
        %3113 = vmatpush1.bf16.xpose.msra.mxu0 0
        %3114 = vmatprep.subr.bf16.mxu0 0
        %3115 = vmatpush1.bf16.xpose.msra.mxu0 0
        %3116 = vmatprep.subr.bf16.mxu0 0
        %3117 = vmatpush1.bf16.xpose.msra.mxu0 0
        %3118 = vmatprep.subr.bf16.mxu0 0
        %3119 = vmatpush1.bf16.xpose.msra.mxu0 0
        %3120 = vmatprep.mubr.bf16.mxu0 0
        %3121 = vmatmul.mubr.bf16.gmra.mrb[0].mxu0 %v3083
        %v3122 = vpop.f32.mrb[0].mxu0
        %v3123 = vadd.f32 0.0, %v3122
        %v3124 = vpop.f32.mrb[0].mxu0
        %v3125 = vpop.f32.mrb[0].mxu0
        %v3126 = vadd.f32 0.0, %v3125
        %v3127 = vpop.f32.mrb[0].mxu0
        %3128 = vdwg.mxu0
        %v3129 = vsel %vm1283, %v3123, -inf
        %3130 = vmax.xlane.f32.xlu0 %v3129
        %v3131 = vpop.xlane.xlu0 %3130
        %v3132 = vsel %vm1283, %v3126, -inf
        %3133 = vmax.xlane.f32.xlu0 %v3132
        %v3134 = vpop.xlane.xlu0 %3133
        %v3135 = vsub.f32 %v3123, %v3131
        %v3136 = vsub.f32 %v3126, %v3134
        %v3137 = vmul.f32 %v3135, 1.442695
        %v3138 = vpow.pop %v3137
        %v3139 = vmul.f32 %v3136, 1.442695
        %v3140 = vpow.pop %v3139
        %v3141 = vsel %vm1283, %v3138, 0.0
        %3142 = vadd.xlane.f32.xlu0 %v3141
        %v3143 = vpop.xlane.xlu0 %3142
        %v3144 = vsel %vm1283, %v3140, 0.0
        %3145 = vadd.xlane.f32.xlu0 %v3144
        %v3146 = vpop.xlane.xlu0 %3145
        %v3147 = vpack.c.bf16 %v3140, %v3138
        %3149 = vrot.lane.b32.xlu0 %v1234, 64
        %v3150 = vpop.permute.xlu0 %3149
        %v3153 = vsel %vm1283, %v3147, 0
        %3155 = vmatprep.subr.bf16.mxu0 0
        %3156 = vmatpush1.bf16.msra.mxu0 %v3150
        %3157 = vmatprep.subr.bf16.mxu0 0
        %3158 = vmatpush1.bf16.msra.mxu0 0
        %3159 = vmatprep.subr.bf16.mxu0 0
        %3160 = vmatpush1.bf16.msra.mxu0 0
        %3161 = vmatprep.subr.bf16.mxu0 0
        %3162 = vmatpush1.bf16.msra.mxu0 0
        %3163 = vmatprep.subr.bf16.mxu0 0
        %3164 = vmatpush1.bf16.msra.mxu0 0
        %3165 = vmatprep.subr.bf16.mxu0 0
        %3166 = vmatpush1.bf16.msra.mxu0 0
        %3167 = vmatprep.subr.bf16.mxu0 0
        %3168 = vmatpush1.bf16.msra.mxu0 0
        %3169 = vmatprep.subr.bf16.mxu0 0
        %3170 = vmatpush1.bf16.msra.mxu0 0
        %3171 = vmatprep.subr.bf16.mxu0 0
        %3172 = vmatpush1.bf16.msra.mxu0 0
        %3173 = vmatprep.subr.bf16.mxu0 0
        %3174 = vmatpush1.bf16.msra.mxu0 0
        %3175 = vmatprep.subr.bf16.mxu0 0
        %3176 = vmatpush1.bf16.msra.mxu0 0
        %3177 = vmatprep.subr.bf16.mxu0 0
        %3178 = vmatpush1.bf16.msra.mxu0 0
        %3179 = vmatprep.subr.bf16.mxu0 0
        %3180 = vmatpush1.bf16.msra.mxu0 0
        %3181 = vmatprep.subr.bf16.mxu0 0
        %3182 = vmatpush1.bf16.msra.mxu0 0
        %3183 = vmatprep.subr.bf16.mxu0 0
        %3184 = vmatpush1.bf16.msra.mxu0 0
        %3185 = vmatprep.subr.bf16.mxu0 0
        %3186 = vmatpush1.bf16.msra.mxu0 0
        %3187 = vmatprep.mubr.bf16.mxu0 0
        %3188 = vmatmul.mubr.bf16.gmra.mrb[0].mxu0 %v3153
        %v3189 = vpop.f32.mrb[0].mxu0
        %v3190 = vadd.f32 0.0, %v3189
        %v3191 = vpop.f32.mrb[0].mxu0
        %v3192 = vpop.f32.mrb[0].mxu0
        %v3193 = vadd.f32 0.0, %v3192
        %v3194 = vpop.f32.mrb[0].mxu0
        %3195 = vdwg.mxu0
        %v3196 = vrcp.pop %v3143
        %v3197 = vrcp.pop %v3146
        %v3198 = vmul.f32 %v3190, %v3196
        %v3199 = vmul.f32 %v3193, %v3197
        %v3200 = vpack.c.bf16 %v3199, %v3198
        %3202 = vrot.lane.b32.xlu0 %v3200, 64
        %v3203 = vpop.permute.xlu0 %3202
        %3205 = vst.msk [vmem:[#allocation2 + $0x38] sm:$0xff] %vm1482, %v3203
        %v3206 = vld [vmem:[#allocation2] sm:$0xff]
        %v3207 = vld [vmem:[#allocation2 + $0x8] sm:$0xff]
        %v3208 = vld [vmem:[#allocation2 + $0x10] sm:$0xff]
        %v3209 = vld [vmem:[#allocation2 + $0x18] sm:$0xff]
        %v3210 = vld [vmem:[#allocation2 + $0x20] sm:$0xff]
        %v3211 = vld [vmem:[#allocation2 + $0x28] sm:$0xff]
        %v3212 = vld [vmem:[#allocation2 + $0x30] sm:$0xff]
        %v3213 = vld [vmem:[#allocation2 + $0x38] sm:$0xff]
        %v3214 = vld [vmem:[#allocation11] sm:$0xf]
        %v3215 = vld [vmem:[#allocation11 + $0x4] sm:$0xf]
        %v3216 = vld [vmem:[#allocation11 + $0x8] sm:$0xf]
        %v3217 = vld [vmem:[#allocation11 + $0xc] sm:$0xf]
        %v3218 = vld [vmem:[#allocation11 + $0x10] sm:$0xf]
        %v3219 = vld [vmem:[#allocation11 + $0x14] sm:$0xf]
        %v3220 = vld [vmem:[#allocation11 + $0x18] sm:$0xf]
        %v3221 = vld [vmem:[#allocation11 + $0x1c] sm:$0xf]
        %v3222 = vld [vmem:[#allocation11 + $0x20] sm:$0xf]
        %v3223 = vld [vmem:[#allocation11 + $0x24] sm:$0xf]
        %v3224 = vld [vmem:[#allocation11 + $0x28] sm:$0xf]
        %v3225 = vld [vmem:[#allocation11 + $0x2c] sm:$0xf]
        %v3226 = vld [vmem:[#allocation11 + $0x30] sm:$0xf]
        %v3227 = vld [vmem:[#allocation11 + $0x34] sm:$0xf]
        %v3228 = vld [vmem:[#allocation11 + $0x38] sm:$0xf]
        %v3229 = vld [vmem:[#allocation11 + $0x3c] sm:$0xf]
        %v3246 = vunpack.c.l.b16 %v3214
        %v3247 = vunpack.c.l.b16 %v3215
        %v3248 = vunpack.c.l.b16 %v3216
        %v3249 = vunpack.c.l.b16 %v3217
        %v3250 = vunpack.c.l.b16 %v3218
        %v3251 = vunpack.c.l.b16 %v3219
        %v3252 = vunpack.c.l.b16 %v3220
        %v3253 = vunpack.c.l.b16 %v3221
        %v3254 = vunpack.c.l.b16 %v3222
        %v3255 = vunpack.c.l.b16 %v3223
        %v3256 = vunpack.c.l.b16 %v3224
        %v3257 = vunpack.c.l.b16 %v3225
        %v3258 = vunpack.c.l.b16 %v3226
        %v3259 = vunpack.c.l.b16 %v3227
        %v3260 = vunpack.c.l.b16 %v3228
        %v3261 = vunpack.c.l.b16 %v3229
        %v3262 = vpack.c.b16 %v3247, %v3246
        %v3263 = vpack.c.b16 %v3249, %v3248
        %v3264 = vpack.c.b16 %v3251, %v3250
        %v3265 = vpack.c.b16 %v3253, %v3252
        %v3266 = vpack.c.b16 %v3255, %v3254
        %v3267 = vpack.c.b16 %v3257, %v3256
        %v3268 = vpack.c.b16 %v3259, %v3258
        %v3269 = vpack.c.b16 %v3261, %v3260
        %3278 = vmatprep.subr.bf16.mxu0 0
        %3279 = vmatpush1.bf16.msra.mxu0 %v3262
        %3280 = vmatprep.subr.bf16.mxu0 0
        %3281 = vmatpush1.bf16.msra.mxu0 %v3263
        %3282 = vmatprep.subr.bf16.mxu0 0
        %3283 = vmatpush1.bf16.msra.mxu0 %v3264
        %3284 = vmatprep.subr.bf16.mxu0 0
        %3285 = vmatpush1.bf16.msra.mxu0 %v3265
        %3286 = vmatprep.subr.bf16.mxu0 0
        %3287 = vmatpush1.bf16.msra.mxu0 %v3266
        %3288 = vmatprep.subr.bf16.mxu0 0
        %3289 = vmatpush1.bf16.msra.mxu0 %v3267
        %3290 = vmatprep.subr.bf16.mxu0 0
        %3291 = vmatpush1.bf16.msra.mxu0 %v3268
        %3292 = vmatprep.subr.bf16.mxu0 0
        %3293 = vmatpush1.bf16.msra.mxu0 %v3269
        %3294 = vmatprep.subr.bf16.mxu0 0
        %3295 = vmatpush1.bf16.msra.mxu0 0
        %3296 = vmatprep.subr.bf16.mxu0 0
        %3297 = vmatpush1.bf16.msra.mxu0 0
        %3298 = vmatprep.subr.bf16.mxu0 0
        %3299 = vmatpush1.bf16.msra.mxu0 0
        %3300 = vmatprep.subr.bf16.mxu0 0
        %3301 = vmatpush1.bf16.msra.mxu0 0
        %3302 = vmatprep.subr.bf16.mxu0 0
        %3303 = vmatpush1.bf16.msra.mxu0 0
        %3304 = vmatprep.subr.bf16.mxu0 0
        %3305 = vmatpush1.bf16.msra.mxu0 0
        %3306 = vmatprep.subr.bf16.mxu0 0
        %3307 = vmatpush1.bf16.msra.mxu0 0
        %3308 = vmatprep.subr.bf16.mxu0 0
        %3309 = vmatpush1.bf16.msra.mxu0 0
        %3310 = vmatprep.mubr.bf16.mxu0 0
        %3311 = vmatmul.mubr.bf16.gmra.mrb[0].mxu0 %v3206
        %v3312 = vpop.f32.mrb[0].mxu0
        %v3313 = vadd.f32 0.0, %v3312
        %v3314 = vpop.f32.mrb[0].mxu0
        %v3315 = vpop.f32.mrb[0].mxu0
        %v3316 = vadd.f32 0.0, %v3315
        %v3317 = vpop.f32.mrb[0].mxu0
        %3318 = vmatprep.mubr.bf16.mxu0 0
        %3319 = vmatmul.mubr.bf16.gmra.mrb[0].mxu0 %v3207
        %v3320 = vpop.f32.mrb[0].mxu0
        %v3321 = vadd.f32 0.0, %v3320
        %v3322 = vpop.f32.mrb[0].mxu0
        %v3323 = vpop.f32.mrb[0].mxu0
        %v3324 = vadd.f32 0.0, %v3323
        %v3325 = vpop.f32.mrb[0].mxu0
        %3326 = vmatprep.mubr.bf16.mxu0 0
        %3327 = vmatmul.mubr.bf16.gmra.mrb[0].mxu0 %v3208
        %v3328 = vpop.f32.mrb[0].mxu0
        %v3329 = vadd.f32 0.0, %v3328
        %v3330 = vpop.f32.mrb[0].mxu0
        %v3331 = vpop.f32.mrb[0].mxu0
        %v3332 = vadd.f32 0.0, %v3331
        %v3333 = vpop.f32.mrb[0].mxu0
        %3334 = vmatprep.mubr.bf16.mxu0 0
        %3335 = vmatmul.mubr.bf16.gmra.mrb[0].mxu0 %v3209
        %v3336 = vpop.f32.mrb[0].mxu0
        %v3337 = vadd.f32 0.0, %v3336
        %v3338 = vpop.f32.mrb[0].mxu0
        %v3339 = vpop.f32.mrb[0].mxu0
        %v3340 = vadd.f32 0.0, %v3339
        %v3341 = vpop.f32.mrb[0].mxu0
        %3342 = vmatprep.mubr.bf16.mxu0 0
        %3343 = vmatmul.mubr.bf16.gmra.mrb[0].mxu0 %v3210
        %v3344 = vpop.f32.mrb[0].mxu0
        %v3345 = vadd.f32 0.0, %v3344
        %v3346 = vpop.f32.mrb[0].mxu0
        %v3347 = vpop.f32.mrb[0].mxu0
        %v3348 = vadd.f32 0.0, %v3347
        %v3349 = vpop.f32.mrb[0].mxu0
        %3350 = vmatprep.mubr.bf16.mxu0 0
        %3351 = vmatmul.mubr.bf16.gmra.mrb[0].mxu0 %v3211
        %v3352 = vpop.f32.mrb[0].mxu0
        %v3353 = vadd.f32 0.0, %v3352
        %v3354 = vpop.f32.mrb[0].mxu0
        %v3355 = vpop.f32.mrb[0].mxu0
        %v3356 = vadd.f32 0.0, %v3355
        %v3357 = vpop.f32.mrb[0].mxu0
        %3358 = vmatprep.mubr.bf16.mxu0 0
        %3359 = vmatmul.mubr.bf16.gmra.mrb[0].mxu0 %v3212
        %v3360 = vpop.f32.mrb[0].mxu0
        %v3361 = vadd.f32 0.0, %v3360
        %v3362 = vpop.f32.mrb[0].mxu0
        %v3363 = vpop.f32.mrb[0].mxu0
        %v3364 = vadd.f32 0.0, %v3363
        %v3365 = vpop.f32.mrb[0].mxu0
        %3366 = vmatprep.mubr.bf16.mxu0 0
        %3367 = vmatmul.mubr.bf16.gmra.mrb[0].mxu0 %v3213
        %v3368 = vpop.f32.mrb[0].mxu0
        %v3369 = vadd.f32 0.0, %v3368
        %v3370 = vpop.f32.mrb[0].mxu0
        %v3371 = vpop.f32.mrb[0].mxu0
        %v3372 = vadd.f32 0.0, %v3371
        %v3373 = vpop.f32.mrb[0].mxu0
        %3374 = vdwg.mxu0
        %v3375 = vadd.f32 %v545, %v3313
        %v3376 = vadd.f32 %v546, %v3316
        %v3377 = vadd.f32 %v547, %v3321
        %v3378 = vadd.f32 %v548, %v3324
        %v3379 = vadd.f32 %v549, %v3329
        %v3380 = vadd.f32 %v550, %v3332
        %v3381 = vadd.f32 %v551, %v3337
        %v3382 = vadd.f32 %v552, %v3340
        %v3383 = vadd.f32 %v553, %v3345
        %v3384 = vadd.f32 %v554, %v3348
        %v3385 = vadd.f32 %v555, %v3353
        %v3386 = vadd.f32 %v556, %v3356
        %v3387 = vadd.f32 %v557, %v3361
        %v3388 = vadd.f32 %v558, %v3364
        %v3389 = vadd.f32 %v559, %v3369
        %v3390 = vadd.f32 %v560, %v3372
        %v3391 = vld [vmem:[%s6] sm:$0x1]
        %v3393 = vlaneseq
        %v3394 = vshrl.u32 %v3393, 7
        %v3395 = vsub.s32 0, %v3394
        %v3396 = vrot.slane %v3391, %v3395
        %v3398 = vadd.f32 %v3375, %v3396
        %v3399 = vadd.f32 %v3376, %v3396
        %v3400 = vadd.f32 %v3377, %v3396
        %v3401 = vadd.f32 %v3378, %v3396
        %v3402 = vadd.f32 %v3379, %v3396
        %v3403 = vadd.f32 %v3380, %v3396
        %v3404 = vadd.f32 %v3381, %v3396
        %v3405 = vadd.f32 %v3382, %v3396
        %v3406 = vadd.f32 %v3383, %v3396
        %v3407 = vadd.f32 %v3384, %v3396
        %v3408 = vadd.f32 %v3385, %v3396
        %v3409 = vadd.f32 %v3386, %v3396
        %v3410 = vadd.f32 %v3387, %v3396
        %v3411 = vadd.f32 %v3388, %v3396
        %v3412 = vadd.f32 %v3389, %v3396
        %v3413 = vadd.f32 %v3390, %v3396
        %3414 = vadd.xlane.f32.xlu0 %v3398
        %v3415 = vpop.xlane.xlu0 %3414
        %3416 = vadd.xlane.f32.xlu0 %v3399
        %v3417 = vpop.xlane.xlu0 %3416
        %3418 = vadd.xlane.f32.xlu0 %v3400
        %v3419 = vpop.xlane.xlu0 %3418
        %3420 = vadd.xlane.f32.xlu0 %v3401
        %v3421 = vpop.xlane.xlu0 %3420
        %3422 = vadd.xlane.f32.xlu0 %v3402
        %v3423 = vpop.xlane.xlu0 %3422
        %3424 = vadd.xlane.f32.xlu0 %v3403
        %v3425 = vpop.xlane.xlu0 %3424
        %3426 = vadd.xlane.f32.xlu0 %v3404
        %v3427 = vpop.xlane.xlu0 %3426
        %3428 = vadd.xlane.f32.xlu0 %v3405
        %v3429 = vpop.xlane.xlu0 %3428
        %3430 = vadd.xlane.f32.xlu0 %v3406
        %v3431 = vpop.xlane.xlu0 %3430
        %3432 = vadd.xlane.f32.xlu0 %v3407
        %v3433 = vpop.xlane.xlu0 %3432
        %3434 = vadd.xlane.f32.xlu0 %v3408
        %v3435 = vpop.xlane.xlu0 %3434
        %3436 = vadd.xlane.f32.xlu0 %v3409
        %v3437 = vpop.xlane.xlu0 %3436
        %3438 = vadd.xlane.f32.xlu0 %v3410
        %v3439 = vpop.xlane.xlu0 %3438
        %3440 = vadd.xlane.f32.xlu0 %v3411
        %v3441 = vpop.xlane.xlu0 %3440
        %3442 = vadd.xlane.f32.xlu0 %v3412
        %v3443 = vpop.xlane.xlu0 %3442
        %3444 = vadd.xlane.f32.xlu0 %v3413
        %v3445 = vpop.xlane.xlu0 %3444
        %v3446 = vmul.f32 %v3415, %v593
        %v3447 = vmul.f32 %v3417, %v593
        %v3448 = vmul.f32 %v3419, %v593
        %v3449 = vmul.f32 %v3421, %v593
        %v3450 = vmul.f32 %v3423, %v593
        %v3451 = vmul.f32 %v3425, %v593
        %v3452 = vmul.f32 %v3427, %v593
        %v3453 = vmul.f32 %v3429, %v593
        %v3454 = vmul.f32 %v3431, %v593
        %v3455 = vmul.f32 %v3433, %v593
        %v3456 = vmul.f32 %v3435, %v593
        %v3457 = vmul.f32 %v3437, %v593
        %v3458 = vmul.f32 %v3439, %v593
        %v3459 = vmul.f32 %v3441, %v593
        %v3460 = vmul.f32 %v3443, %v593
        %v3461 = vmul.f32 %v3445, %v593
        %v3462 = vmul.f32 %v3398, %v3398
        %v3463 = vmul.f32 %v3399, %v3399
        %v3464 = vmul.f32 %v3400, %v3400
        %v3465 = vmul.f32 %v3401, %v3401
        %v3466 = vmul.f32 %v3402, %v3402
        %v3467 = vmul.f32 %v3403, %v3403
        %v3468 = vmul.f32 %v3404, %v3404
        %v3469 = vmul.f32 %v3405, %v3405
        %v3470 = vmul.f32 %v3406, %v3406
        %v3471 = vmul.f32 %v3407, %v3407
        %v3472 = vmul.f32 %v3408, %v3408
        %v3473 = vmul.f32 %v3409, %v3409
        %v3474 = vmul.f32 %v3410, %v3410
        %v3475 = vmul.f32 %v3411, %v3411
        %v3476 = vmul.f32 %v3412, %v3412
        %v3477 = vmul.f32 %v3413, %v3413
        %3478 = vadd.xlane.f32.xlu0 %v3462
        %v3479 = vpop.xlane.xlu0 %3478
        %3480 = vadd.xlane.f32.xlu0 %v3463
        %v3481 = vpop.xlane.xlu0 %3480
        %3482 = vadd.xlane.f32.xlu0 %v3464
        %v3483 = vpop.xlane.xlu0 %3482
        %3484 = vadd.xlane.f32.xlu0 %v3465
        %v3485 = vpop.xlane.xlu0 %3484
        %3486 = vadd.xlane.f32.xlu0 %v3466
        %v3487 = vpop.xlane.xlu0 %3486
        %3488 = vadd.xlane.f32.xlu0 %v3467
        %v3489 = vpop.xlane.xlu0 %3488
        %3490 = vadd.xlane.f32.xlu0 %v3468
        %v3491 = vpop.xlane.xlu0 %3490
        %3492 = vadd.xlane.f32.xlu0 %v3469
        %v3493 = vpop.xlane.xlu0 %3492
        %3494 = vadd.xlane.f32.xlu0 %v3470
        %v3495 = vpop.xlane.xlu0 %3494
        %3496 = vadd.xlane.f32.xlu0 %v3471
        %v3497 = vpop.xlane.xlu0 %3496
        %3498 = vadd.xlane.f32.xlu0 %v3472
        %v3499 = vpop.xlane.xlu0 %3498
        %3500 = vadd.xlane.f32.xlu0 %v3473
        %v3501 = vpop.xlane.xlu0 %3500
        %3502 = vadd.xlane.f32.xlu0 %v3474
        %v3503 = vpop.xlane.xlu0 %3502
        %3504 = vadd.xlane.f32.xlu0 %v3475
        %v3505 = vpop.xlane.xlu0 %3504
        %3506 = vadd.xlane.f32.xlu0 %v3476
        %v3507 = vpop.xlane.xlu0 %3506
        %3508 = vadd.xlane.f32.xlu0 %v3477
        %v3509 = vpop.xlane.xlu0 %3508
        %v3510 = vmul.f32 %v3479, %v593
        %v3511 = vmul.f32 %v3481, %v593
        %v3512 = vmul.f32 %v3483, %v593
        %v3513 = vmul.f32 %v3485, %v593
        %v3514 = vmul.f32 %v3487, %v593
        %v3515 = vmul.f32 %v3489, %v593
        %v3516 = vmul.f32 %v3491, %v593
        %v3517 = vmul.f32 %v3493, %v593
        %v3518 = vmul.f32 %v3495, %v593
        %v3519 = vmul.f32 %v3497, %v593
        %v3520 = vmul.f32 %v3499, %v593
        %v3521 = vmul.f32 %v3501, %v593
        %v3522 = vmul.f32 %v3503, %v593
        %v3523 = vmul.f32 %v3505, %v593
        %v3524 = vmul.f32 %v3507, %v593
        %v3525 = vmul.f32 %v3509, %v593
        %v3526 = vmul.f32 %v3446, %v3446
        %v3527 = vmul.f32 %v3447, %v3447
        %v3528 = vmul.f32 %v3448, %v3448
        %v3529 = vmul.f32 %v3449, %v3449
        %v3530 = vmul.f32 %v3450, %v3450
        %v3531 = vmul.f32 %v3451, %v3451
        %v3532 = vmul.f32 %v3452, %v3452
        %v3533 = vmul.f32 %v3453, %v3453
        %v3534 = vmul.f32 %v3454, %v3454
        %v3535 = vmul.f32 %v3455, %v3455
        %v3536 = vmul.f32 %v3456, %v3456
        %v3537 = vmul.f32 %v3457, %v3457
        %v3538 = vmul.f32 %v3458, %v3458
        %v3539 = vmul.f32 %v3459, %v3459
        %v3540 = vmul.f32 %v3460, %v3460
        %v3541 = vmul.f32 %v3461, %v3461
        %v3542 = vsub.f32 %v3510, %v3526
        %v3543 = vsub.f32 %v3511, %v3527
        %v3544 = vsub.f32 %v3512, %v3528
        %v3545 = vsub.f32 %v3513, %v3529
        %v3546 = vsub.f32 %v3514, %v3530
        %v3547 = vsub.f32 %v3515, %v3531
        %v3548 = vsub.f32 %v3516, %v3532
        %v3549 = vsub.f32 %v3517, %v3533
        %v3550 = vsub.f32 %v3518, %v3534
        %v3551 = vsub.f32 %v3519, %v3535
        %v3552 = vsub.f32 %v3520, %v3536
        %v3553 = vsub.f32 %v3521, %v3537
        %v3554 = vsub.f32 %v3522, %v3538
        %v3555 = vsub.f32 %v3523, %v3539
        %v3556 = vsub.f32 %v3524, %v3540
        %v3557 = vsub.f32 %v3525, %v3541
        %v3558 = vsub.f32 %v3398, %v3446
        %v3559 = vsub.f32 %v3399, %v3447
        %v3560 = vsub.f32 %v3400, %v3448
        %v3561 = vsub.f32 %v3401, %v3449
        %v3562 = vsub.f32 %v3402, %v3450
        %v3563 = vsub.f32 %v3403, %v3451
        %v3564 = vsub.f32 %v3404, %v3452
        %v3565 = vsub.f32 %v3405, %v3453
        %v3566 = vsub.f32 %v3406, %v3454
        %v3567 = vsub.f32 %v3407, %v3455
        %v3568 = vsub.f32 %v3408, %v3456
        %v3569 = vsub.f32 %v3409, %v3457
        %v3570 = vsub.f32 %v3410, %v3458
        %v3571 = vsub.f32 %v3411, %v3459
        %v3572 = vsub.f32 %v3412, %v3460
        %v3573 = vsub.f32 %v3413, %v3461
        %v3574 = vadd.f32 %v3542, 1e-05
        %v3575 = vadd.f32 %v3543, 1e-05
        %v3576 = vadd.f32 %v3544, 1e-05
        %v3577 = vadd.f32 %v3545, 1e-05
        %v3578 = vadd.f32 %v3546, 1e-05
        %v3579 = vadd.f32 %v3547, 1e-05
        %v3580 = vadd.f32 %v3548, 1e-05
        %v3581 = vadd.f32 %v3549, 1e-05
        %v3582 = vadd.f32 %v3550, 1e-05
        %v3583 = vadd.f32 %v3551, 1e-05
        %v3584 = vadd.f32 %v3552, 1e-05
        %v3585 = vadd.f32 %v3553, 1e-05
        %v3586 = vadd.f32 %v3554, 1e-05
        %v3587 = vadd.f32 %v3555, 1e-05
        %v3588 = vadd.f32 %v3556, 1e-05
        %v3589 = vadd.f32 %v3557, 1e-05
        %v3590 = vrsqrt.pop %v3574
        %v3591 = vrsqrt.pop %v3575
        %v3592 = vrsqrt.pop %v3576
        %v3593 = vrsqrt.pop %v3577
        %v3594 = vrsqrt.pop %v3578
        %v3595 = vrsqrt.pop %v3579
        %v3596 = vrsqrt.pop %v3580
        %v3597 = vrsqrt.pop %v3581
        %v3598 = vrsqrt.pop %v3582
        %v3599 = vrsqrt.pop %v3583
        %v3600 = vrsqrt.pop %v3584
        %v3601 = vrsqrt.pop %v3585
        %v3602 = vrsqrt.pop %v3586
        %v3603 = vrsqrt.pop %v3587
        %v3604 = vrsqrt.pop %v3588
        %v3605 = vrsqrt.pop %v3589
        %v3606 = vmul.f32 %v3558, %v3590
        %v3607 = vmul.f32 %v3559, %v3591
        %v3608 = vmul.f32 %v3560, %v3592
        %v3609 = vmul.f32 %v3561, %v3593
        %v3610 = vmul.f32 %v3562, %v3594
        %v3611 = vmul.f32 %v3563, %v3595
        %v3612 = vmul.f32 %v3564, %v3596
        %v3613 = vmul.f32 %v3565, %v3597
        %v3614 = vmul.f32 %v3566, %v3598
        %v3615 = vmul.f32 %v3567, %v3599
        %v3616 = vmul.f32 %v3568, %v3600
        %v3617 = vmul.f32 %v3569, %v3601
        %v3618 = vmul.f32 %v3570, %v3602
        %v3619 = vmul.f32 %v3571, %v3603
        %v3620 = vmul.f32 %v3572, %v3604
        %v3621 = vmul.f32 %v3573, %v3605
        %v3622 = vld [vmem:[%s7] sm:$0x1]
        %v3624 = vlaneseq
        %v3625 = vshrl.u32 %v3624, 7
        %v3626 = vsub.s32 0, %v3625
        %v3627 = vrot.slane %v3622, %v3626
        %v3629 = vmul.f32 %v3606, %v3627
        %v3630 = vmul.f32 %v3607, %v3627
        %v3631 = vmul.f32 %v3608, %v3627
        %v3632 = vmul.f32 %v3609, %v3627
        %v3633 = vmul.f32 %v3610, %v3627
        %v3634 = vmul.f32 %v3611, %v3627
        %v3635 = vmul.f32 %v3612, %v3627
        %v3636 = vmul.f32 %v3613, %v3627
        %v3637 = vmul.f32 %v3614, %v3627
        %v3638 = vmul.f32 %v3615, %v3627
        %v3639 = vmul.f32 %v3616, %v3627
        %v3640 = vmul.f32 %v3617, %v3627
        %v3641 = vmul.f32 %v3618, %v3627
        %v3642 = vmul.f32 %v3619, %v3627
        %v3643 = vmul.f32 %v3620, %v3627
        %v3644 = vmul.f32 %v3621, %v3627
        %v3645 = vld [vmem:[%s8] sm:$0x1]
        %v3647 = vlaneseq
        %v3648 = vshrl.u32 %v3647, 7
        %v3649 = vsub.s32 0, %v3648
        %v3650 = vrot.slane %v3645, %v3649
        %v3652 = vadd.f32 %v3629, %v3650
        %v3653 = vadd.f32 %v3630, %v3650
        %v3654 = vadd.f32 %v3631, %v3650
        %v3655 = vadd.f32 %v3632, %v3650
        %v3656 = vadd.f32 %v3633, %v3650
        %v3657 = vadd.f32 %v3634, %v3650
        %v3658 = vadd.f32 %v3635, %v3650
        %v3659 = vadd.f32 %v3636, %v3650
        %v3660 = vadd.f32 %v3637, %v3650
        %v3661 = vadd.f32 %v3638, %v3650
        %v3662 = vadd.f32 %v3639, %v3650
        %v3663 = vadd.f32 %v3640, %v3650
        %v3664 = vadd.f32 %v3641, %v3650
        %v3665 = vadd.f32 %v3642, %v3650
        %v3666 = vadd.f32 %v3643, %v3650
        %v3667 = vadd.f32 %v3644, %v3650
        %v3668 = vpack.c.bf16 %v3653, %v3652
        %v3669 = vpack.c.bf16 %v3655, %v3654
        %v3670 = vpack.c.bf16 %v3657, %v3656
        %v3671 = vpack.c.bf16 %v3659, %v3658
        %v3672 = vpack.c.bf16 %v3661, %v3660
        %v3673 = vpack.c.bf16 %v3663, %v3662
        %v3674 = vpack.c.bf16 %v3665, %v3664
        %v3675 = vpack.c.bf16 %v3667, %v3666
        %v3676 = vld [vmem:[#allocation12] sm:$0xff]
        %v3677 = vld [vmem:[#allocation12 + $0x8] sm:$0xff]
        %v3678 = vld [vmem:[#allocation12 + $0x10] sm:$0xff]
        %v3679 = vld [vmem:[#allocation12 + $0x18] sm:$0xff]
        %v3680 = vld [vmem:[#allocation12 + $0x20] sm:$0xff]
        %v3681 = vld [vmem:[#allocation12 + $0x28] sm:$0xff]
        %v3682 = vld [vmem:[#allocation12 + $0x30] sm:$0xff]
        %v3683 = vld [vmem:[#allocation12 + $0x38] sm:$0xff]
        %v3684 = vld [vmem:[#allocation12 + $0x40] sm:$0xff]
        %v3685 = vld [vmem:[#allocation12 + $0x48] sm:$0xff]
        %v3686 = vld [vmem:[#allocation12 + $0x50] sm:$0xff]
        %v3687 = vld [vmem:[#allocation12 + $0x58] sm:$0xff]
        %v3688 = vld [vmem:[#allocation12 + $0x60] sm:$0xff]
        %v3689 = vld [vmem:[#allocation12 + $0x68] sm:$0xff]
        %v3690 = vld [vmem:[#allocation12 + $0x70] sm:$0xff]
        %v3691 = vld [vmem:[#allocation12 + $0x78] sm:$0xff]
        %v3692 = vld [vmem:[#allocation12 + $0x80] sm:$0xff]
        %v3693 = vld [vmem:[#allocation12 + $0x88] sm:$0xff]
        %v3694 = vld [vmem:[#allocation12 + $0x90] sm:$0xff]
        %v3695 = vld [vmem:[#allocation12 + $0x98] sm:$0xff]
        %v3696 = vld [vmem:[#allocation12 + $0xa0] sm:$0xff]
        %v3697 = vld [vmem:[#allocation12 + $0xa8] sm:$0xff]
        %v3698 = vld [vmem:[#allocation12 + $0xb0] sm:$0xff]
        %v3699 = vld [vmem:[#allocation12 + $0xb8] sm:$0xff]
        %v3700 = vld [vmem:[#allocation12 + $0xc0] sm:$0xff]
        %v3701 = vld [vmem:[#allocation12 + $0xc8] sm:$0xff]
        %v3702 = vld [vmem:[#allocation12 + $0xd0] sm:$0xff]
        %v3703 = vld [vmem:[#allocation12 + $0xd8] sm:$0xff]
        %v3704 = vld [vmem:[#allocation12 + $0xe0] sm:$0xff]
        %v3705 = vld [vmem:[#allocation12 + $0xe8] sm:$0xff]
        %v3706 = vld [vmem:[#allocation12 + $0xf0] sm:$0xff]
        %v3707 = vld [vmem:[#allocation12 + $0xf8] sm:$0xff]
        %v3708 = vld [vmem:[%s10] sm:$0xf]
        %v3710 = vlaneseq
        %v3711 = vshrl.u32 %v3710, 7
        %v3712 = vsub.s32 0, %v3711
        %v3713 = vrot.slane %v3708, %v3712
        %v3714 = vlaneseq
        %v3715 = vshrl.u32 %v3714, 7
        %v3716 = vsub.s32 1, %v3715
        %v3717 = vrot.slane %v3708, %v3716
        %v3718 = vlaneseq
        %v3719 = vshrl.u32 %v3718, 7
        %v3720 = vsub.s32 2, %v3719
        %v3721 = vrot.slane %v3708, %v3720
        %v3722 = vlaneseq
        %v3723 = vshrl.u32 %v3722, 7
        %v3724 = vsub.s32 3, %v3723
        %v3725 = vrot.slane %v3708, %v3724
        %v3762 = vunpack.c.l.b16 %v3676
        %v3763 = vunpack.c.h.b16 %v3676
        %v3764 = vunpack.c.l.b16 %v3677
        %v3765 = vunpack.c.h.b16 %v3677
        %v3766 = vunpack.c.l.b16 %v3678
        %v3767 = vunpack.c.h.b16 %v3678
        %v3768 = vunpack.c.l.b16 %v3679
        %v3769 = vunpack.c.h.b16 %v3679
        %v3770 = vunpack.c.l.b16 %v3680
        %v3771 = vunpack.c.h.b16 %v3680
        %v3772 = vunpack.c.l.b16 %v3681
        %v3773 = vunpack.c.h.b16 %v3681
        %v3774 = vunpack.c.l.b16 %v3682
        %v3775 = vunpack.c.h.b16 %v3682
        %v3776 = vunpack.c.l.b16 %v3683
        %v3777 = vunpack.c.h.b16 %v3683
        %v3778 = vunpack.c.l.b16 %v3684
        %v3779 = vunpack.c.h.b16 %v3684
        %v3780 = vunpack.c.l.b16 %v3685
        %v3781 = vunpack.c.h.b16 %v3685
        %v3782 = vunpack.c.l.b16 %v3686
        %v3783 = vunpack.c.h.b16 %v3686
        %v3784 = vunpack.c.l.b16 %v3687
        %v3785 = vunpack.c.h.b16 %v3687
        %v3786 = vunpack.c.l.b16 %v3688
        %v3787 = vunpack.c.h.b16 %v3688
        %v3788 = vunpack.c.l.b16 %v3689
        %v3789 = vunpack.c.h.b16 %v3689
        %v3790 = vunpack.c.l.b16 %v3690
        %v3791 = vunpack.c.h.b16 %v3690
        %v3792 = vunpack.c.l.b16 %v3691
        %v3793 = vunpack.c.h.b16 %v3691
        %v3794 = vunpack.c.l.b16 %v3692
        %v3795 = vunpack.c.h.b16 %v3692
        %v3796 = vunpack.c.l.b16 %v3693
        %v3797 = vunpack.c.h.b16 %v3693
        %v3798 = vunpack.c.l.b16 %v3694
        %v3799 = vunpack.c.h.b16 %v3694
        %v3800 = vunpack.c.l.b16 %v3695
        %v3801 = vunpack.c.h.b16 %v3695
        %v3802 = vunpack.c.l.b16 %v3696
        %v3803 = vunpack.c.h.b16 %v3696
        %v3804 = vunpack.c.l.b16 %v3697
        %v3805 = vunpack.c.h.b16 %v3697
        %v3806 = vunpack.c.l.b16 %v3698
        %v3807 = vunpack.c.h.b16 %v3698
        %v3808 = vunpack.c.l.b16 %v3699
        %v3809 = vunpack.c.h.b16 %v3699
        %v3810 = vunpack.c.l.b16 %v3700
        %v3811 = vunpack.c.h.b16 %v3700
        %v3812 = vunpack.c.l.b16 %v3701
        %v3813 = vunpack.c.h.b16 %v3701
        %v3814 = vunpack.c.l.b16 %v3702
        %v3815 = vunpack.c.h.b16 %v3702
        %v3816 = vunpack.c.l.b16 %v3703
        %v3817 = vunpack.c.h.b16 %v3703
        %v3818 = vunpack.c.l.b16 %v3704
        %v3819 = vunpack.c.h.b16 %v3704
        %v3820 = vunpack.c.l.b16 %v3705
        %v3821 = vunpack.c.h.b16 %v3705
        %v3822 = vunpack.c.l.b16 %v3706
        %v3823 = vunpack.c.h.b16 %v3706
        %v3824 = vunpack.c.l.b16 %v3707
        %v3825 = vunpack.c.h.b16 %v3707
        %v3826 = vpack.c.b16 %v3766, %v3762
        %v3827 = vpack.c.b16 %v3767, %v3763
        %v3828 = vpack.c.b16 %v3768, %v3764
        %v3829 = vpack.c.b16 %v3769, %v3765
        %v3830 = vpack.c.b16 %v3774, %v3770
        %v3831 = vpack.c.b16 %v3775, %v3771
        %v3832 = vpack.c.b16 %v3776, %v3772
        %v3833 = vpack.c.b16 %v3777, %v3773
        %v3834 = vpack.c.b16 %v3782, %v3778
        %v3835 = vpack.c.b16 %v3783, %v3779
        %v3836 = vpack.c.b16 %v3784, %v3780
        %v3837 = vpack.c.b16 %v3785, %v3781
        %v3838 = vpack.c.b16 %v3790, %v3786
        %v3839 = vpack.c.b16 %v3791, %v3787
        %v3840 = vpack.c.b16 %v3792, %v3788
        %v3841 = vpack.c.b16 %v3793, %v3789
        %v3842 = vpack.c.b16 %v3798, %v3794
        %v3843 = vpack.c.b16 %v3799, %v3795
        %v3844 = vpack.c.b16 %v3800, %v3796
        %v3845 = vpack.c.b16 %v3801, %v3797
        %v3846 = vpack.c.b16 %v3806, %v3802
        %v3847 = vpack.c.b16 %v3807, %v3803
        %v3848 = vpack.c.b16 %v3808, %v3804
        %v3849 = vpack.c.b16 %v3809, %v3805
        %v3850 = vpack.c.b16 %v3814, %v3810
        %v3851 = vpack.c.b16 %v3815, %v3811
        %v3852 = vpack.c.b16 %v3816, %v3812
        %v3853 = vpack.c.b16 %v3817, %v3813
        %v3854 = vpack.c.b16 %v3822, %v3818
        %v3855 = vpack.c.b16 %v3823, %v3819
        %v3856 = vpack.c.b16 %v3824, %v3820
        %v3857 = vpack.c.b16 %v3825, %v3821
        %3890 = vmatprep.subr.bf16.mxu0 %v3827
        %3891 = vmatpush1.bf16.msra.mxu0 %v3826
        %3892 = vmatprep.subr.bf16.mxu0 %v3831
        %3893 = vmatpush1.bf16.msra.mxu0 %v3830
        %3894 = vmatprep.subr.bf16.mxu0 %v3835
        %3895 = vmatpush1.bf16.msra.mxu0 %v3834
        %3896 = vmatprep.subr.bf16.mxu0 %v3839
        %3897 = vmatpush1.bf16.msra.mxu0 %v3838
        %3898 = vmatprep.subr.bf16.mxu0 %v3843
        %3899 = vmatpush1.bf16.msra.mxu0 %v3842
        %3900 = vmatprep.subr.bf16.mxu0 %v3847
        %3901 = vmatpush1.bf16.msra.mxu0 %v3846
        %3902 = vmatprep.subr.bf16.mxu0 %v3851
        %3903 = vmatpush1.bf16.msra.mxu0 %v3850
        %3904 = vmatprep.subr.bf16.mxu0 %v3855
        %3905 = vmatpush1.bf16.msra.mxu0 %v3854
        %3906 = vmatprep.subr.bf16.mxu0 0
        %3907 = vmatpush1.bf16.msra.mxu0 0
        %3908 = vmatprep.subr.bf16.mxu0 0
        %3909 = vmatpush1.bf16.msra.mxu0 0
        %3910 = vmatprep.subr.bf16.mxu0 0
        %3911 = vmatpush1.bf16.msra.mxu0 0
        %3912 = vmatprep.subr.bf16.mxu0 0
        %3913 = vmatpush1.bf16.msra.mxu0 0
        %3914 = vmatprep.subr.bf16.mxu0 0
        %3915 = vmatpush1.bf16.msra.mxu0 0
        %3916 = vmatprep.subr.bf16.mxu0 0
        %3917 = vmatpush1.bf16.msra.mxu0 0
        %3918 = vmatprep.subr.bf16.mxu0 0
        %3919 = vmatpush1.bf16.msra.mxu0 0
        %3920 = vmatprep.subr.bf16.mxu0 0
        %3921 = vmatpush1.bf16.msra.mxu0 0
        %3922 = vmatprep.mubr.bf16.mxu0 0
        %3923 = vmatmul.mubr.bf16.gmra.mrb[0].mxu0 %v3668
        %v3924 = vpop.f32.mrb[0].mxu0
        %v3925 = vadd.f32 %v3713, %v3924
        %v3926 = vpop.f32.mrb[0].mxu0
        %v3927 = vadd.f32 %v3717, %v3926
        %v3928 = vpop.f32.mrb[0].mxu0
        %v3929 = vadd.f32 %v3713, %v3928
        %v3930 = vpop.f32.mrb[0].mxu0
        %v3931 = vadd.f32 %v3717, %v3930
        %3932 = vmatprep.mubr.bf16.mxu0 0
        %3933 = vmatmul.mubr.bf16.gmra.mrb[0].mxu0 %v3669
        %v3934 = vpop.f32.mrb[0].mxu0
        %v3935 = vadd.f32 %v3713, %v3934
        %v3936 = vpop.f32.mrb[0].mxu0
        %v3937 = vadd.f32 %v3717, %v3936
        %v3938 = vpop.f32.mrb[0].mxu0
        %v3939 = vadd.f32 %v3713, %v3938
        %v3940 = vpop.f32.mrb[0].mxu0
        %v3941 = vadd.f32 %v3717, %v3940
        %3942 = vmatprep.mubr.bf16.mxu0 0
        %3943 = vmatmul.mubr.bf16.gmra.mrb[0].mxu0 %v3670
        %v3944 = vpop.f32.mrb[0].mxu0
        %v3945 = vadd.f32 %v3713, %v3944
        %v3946 = vpop.f32.mrb[0].mxu0
        %v3947 = vadd.f32 %v3717, %v3946
        %v3948 = vpop.f32.mrb[0].mxu0
        %v3949 = vadd.f32 %v3713, %v3948
        %v3950 = vpop.f32.mrb[0].mxu0
        %v3951 = vadd.f32 %v3717, %v3950
        %3952 = vmatprep.mubr.bf16.mxu0 0
        %3953 = vmatmul.mubr.bf16.gmra.mrb[0].mxu0 %v3671
        %v3954 = vpop.f32.mrb[0].mxu0
        %v3955 = vadd.f32 %v3713, %v3954
        %v3956 = vpop.f32.mrb[0].mxu0
        %v3957 = vadd.f32 %v3717, %v3956
        %v3958 = vpop.f32.mrb[0].mxu0
        %v3959 = vadd.f32 %v3713, %v3958
        %v3960 = vpop.f32.mrb[0].mxu0
        %v3961 = vadd.f32 %v3717, %v3960
        %3962 = vmatprep.mubr.bf16.mxu0 0
        %3963 = vmatmul.mubr.bf16.gmra.mrb[0].mxu0 %v3672
        %v3964 = vpop.f32.mrb[0].mxu0
        %v3965 = vadd.f32 %v3713, %v3964
        %v3966 = vpop.f32.mrb[0].mxu0
        %v3967 = vadd.f32 %v3717, %v3966
        %v3968 = vpop.f32.mrb[0].mxu0
        %v3969 = vadd.f32 %v3713, %v3968
        %v3970 = vpop.f32.mrb[0].mxu0
        %v3971 = vadd.f32 %v3717, %v3970
        %3972 = vmatprep.mubr.bf16.mxu0 0
        %3973 = vmatmul.mubr.bf16.gmra.mrb[0].mxu0 %v3673
        %v3974 = vpop.f32.mrb[0].mxu0
        %v3975 = vadd.f32 %v3713, %v3974
        %v3976 = vpop.f32.mrb[0].mxu0
        %v3977 = vadd.f32 %v3717, %v3976
        %v3978 = vpop.f32.mrb[0].mxu0
        %v3979 = vadd.f32 %v3713, %v3978
        %v3980 = vpop.f32.mrb[0].mxu0
        %v3981 = vadd.f32 %v3717, %v3980
        %3982 = vmatprep.mubr.bf16.mxu0 0
        %3983 = vmatmul.mubr.bf16.gmra.mrb[0].mxu0 %v3674
        %v3984 = vpop.f32.mrb[0].mxu0
        %v3985 = vadd.f32 %v3713, %v3984
        %v3986 = vpop.f32.mrb[0].mxu0
        %v3987 = vadd.f32 %v3717, %v3986
        %v3988 = vpop.f32.mrb[0].mxu0
        %v3989 = vadd.f32 %v3713, %v3988
        %v3990 = vpop.f32.mrb[0].mxu0
        %v3991 = vadd.f32 %v3717, %v3990
        %3992 = vmatprep.mubr.bf16.mxu0 0
        %3993 = vmatmul.mubr.bf16.gmra.mrb[0].mxu0 %v3675
        %v3994 = vpop.f32.mrb[0].mxu0
        %v3995 = vadd.f32 %v3713, %v3994
        %v3996 = vpop.f32.mrb[0].mxu0
        %v3997 = vadd.f32 %v3717, %v3996
        %v3998 = vpop.f32.mrb[0].mxu0
        %v3999 = vadd.f32 %v3713, %v3998
        %v4000 = vpop.f32.mrb[0].mxu0
        %v4001 = vadd.f32 %v3717, %v4000
        %4002 = vdwg.mxu0
        %4003 = vmatprep.subr.bf16.mxu0 %v3829
        %4004 = vmatpush1.bf16.msra.mxu0 %v3828
        %4005 = vmatprep.subr.bf16.mxu0 %v3833
        %4006 = vmatpush1.bf16.msra.mxu0 %v3832
        %4007 = vmatprep.subr.bf16.mxu0 %v3837
        %4008 = vmatpush1.bf16.msra.mxu0 %v3836
        %4009 = vmatprep.subr.bf16.mxu0 %v3841
        %4010 = vmatpush1.bf16.msra.mxu0 %v3840
        %4011 = vmatprep.subr.bf16.mxu0 %v3845
        %4012 = vmatpush1.bf16.msra.mxu0 %v3844
        %4013 = vmatprep.subr.bf16.mxu0 %v3849
        %4014 = vmatpush1.bf16.msra.mxu0 %v3848
        %4015 = vmatprep.subr.bf16.mxu0 %v3853
        %4016 = vmatpush1.bf16.msra.mxu0 %v3852
        %4017 = vmatprep.subr.bf16.mxu0 %v3857
        %4018 = vmatpush1.bf16.msra.mxu0 %v3856
        %4019 = vmatprep.subr.bf16.mxu0 0
        %4020 = vmatpush1.bf16.msra.mxu0 0
        %4021 = vmatprep.subr.bf16.mxu0 0
        %4022 = vmatpush1.bf16.msra.mxu0 0
        %4023 = vmatprep.subr.bf16.mxu0 0
        %4024 = vmatpush1.bf16.msra.mxu0 0
        %4025 = vmatprep.subr.bf16.mxu0 0
        %4026 = vmatpush1.bf16.msra.mxu0 0
        %4027 = vmatprep.subr.bf16.mxu0 0
        %4028 = vmatpush1.bf16.msra.mxu0 0
        %4029 = vmatprep.subr.bf16.mxu0 0
        %4030 = vmatpush1.bf16.msra.mxu0 0
        %4031 = vmatprep.subr.bf16.mxu0 0
        %4032 = vmatpush1.bf16.msra.mxu0 0
        %4033 = vmatprep.subr.bf16.mxu0 0
        %4034 = vmatpush1.bf16.msra.mxu0 0
        %4035 = vmatprep.mubr.bf16.mxu0 0
        %4036 = vmatmul.mubr.bf16.gmra.mrb[0].mxu0 %v3668
        %v4037 = vpop.f32.mrb[0].mxu0
        %v4038 = vadd.f32 %v3721, %v4037
        %v4039 = vpop.f32.mrb[0].mxu0
        %v4040 = vadd.f32 %v3725, %v4039
        %v4041 = vpop.f32.mrb[0].mxu0
        %v4042 = vadd.f32 %v3721, %v4041
        %v4043 = vpop.f32.mrb[0].mxu0
        %v4044 = vadd.f32 %v3725, %v4043
        %4045 = vmatprep.mubr.bf16.mxu0 0
        %4046 = vmatmul.mubr.bf16.gmra.mrb[0].mxu0 %v3669
        %v4047 = vpop.f32.mrb[0].mxu0
        %v4048 = vadd.f32 %v3721, %v4047
        %v4049 = vpop.f32.mrb[0].mxu0
        %v4050 = vadd.f32 %v3725, %v4049
        %v4051 = vpop.f32.mrb[0].mxu0
        %v4052 = vadd.f32 %v3721, %v4051
        %v4053 = vpop.f32.mrb[0].mxu0
        %v4054 = vadd.f32 %v3725, %v4053
        %4055 = vmatprep.mubr.bf16.mxu0 0
        %4056 = vmatmul.mubr.bf16.gmra.mrb[0].mxu0 %v3670
        %v4057 = vpop.f32.mrb[0].mxu0
        %v4058 = vadd.f32 %v3721, %v4057
        %v4059 = vpop.f32.mrb[0].mxu0
        %v4060 = vadd.f32 %v3725, %v4059
        %v4061 = vpop.f32.mrb[0].mxu0
        %v4062 = vadd.f32 %v3721, %v4061
        %v4063 = vpop.f32.mrb[0].mxu0
        %v4064 = vadd.f32 %v3725, %v4063
        %4065 = vmatprep.mubr.bf16.mxu0 0
        %4066 = vmatmul.mubr.bf16.gmra.mrb[0].mxu0 %v3671
        %v4067 = vpop.f32.mrb[0].mxu0
        %v4068 = vadd.f32 %v3721, %v4067
        %v4069 = vpop.f32.mrb[0].mxu0
        %v4070 = vadd.f32 %v3725, %v4069
        %v4071 = vpop.f32.mrb[0].mxu0
        %v4072 = vadd.f32 %v3721, %v4071
        %v4073 = vpop.f32.mrb[0].mxu0
        %v4074 = vadd.f32 %v3725, %v4073
        %4075 = vmatprep.mubr.bf16.mxu0 0
        %4076 = vmatmul.mubr.bf16.gmra.mrb[0].mxu0 %v3672
        %v4077 = vpop.f32.mrb[0].mxu0
        %v4078 = vadd.f32 %v3721, %v4077
        %v4079 = vpop.f32.mrb[0].mxu0
        %v4080 = vadd.f32 %v3725, %v4079
        %v4081 = vpop.f32.mrb[0].mxu0
        %v4082 = vadd.f32 %v3721, %v4081
        %v4083 = vpop.f32.mrb[0].mxu0
        %v4084 = vadd.f32 %v3725, %v4083
        %4085 = vmatprep.mubr.bf16.mxu0 0
        %4086 = vmatmul.mubr.bf16.gmra.mrb[0].mxu0 %v3673
        %v4087 = vpop.f32.mrb[0].mxu0
        %v4088 = vadd.f32 %v3721, %v4087
        %v4089 = vpop.f32.mrb[0].mxu0
        %v4090 = vadd.f32 %v3725, %v4089
        %v4091 = vpop.f32.mrb[0].mxu0
        %v4092 = vadd.f32 %v3721, %v4091
        %v4093 = vpop.f32.mrb[0].mxu0
        %v4094 = vadd.f32 %v3725, %v4093
        %4095 = vmatprep.mubr.bf16.mxu0 0
        %4096 = vmatmul.mubr.bf16.gmra.mrb[0].mxu0 %v3674
        %v4097 = vpop.f32.mrb[0].mxu0
        %v4098 = vadd.f32 %v3721, %v4097
        %v4099 = vpop.f32.mrb[0].mxu0
        %v4100 = vadd.f32 %v3725, %v4099
        %v4101 = vpop.f32.mrb[0].mxu0
        %v4102 = vadd.f32 %v3721, %v4101
        %v4103 = vpop.f32.mrb[0].mxu0
        %v4104 = vadd.f32 %v3725, %v4103
        %4105 = vmatprep.mubr.bf16.mxu0 0
        %4106 = vmatmul.mubr.bf16.gmra.mrb[0].mxu0 %v3675
        %v4107 = vpop.f32.mrb[0].mxu0
        %v4108 = vadd.f32 %v3721, %v4107
        %v4109 = vpop.f32.mrb[0].mxu0
        %v4110 = vadd.f32 %v3725, %v4109
        %v4111 = vpop.f32.mrb[0].mxu0
        %v4112 = vadd.f32 %v3721, %v4111
        %v4113 = vpop.f32.mrb[0].mxu0
        %v4114 = vadd.f32 %v3725, %v4113
        %4115 = vdwg.mxu0
        %v4116 = vmul.f32 %v3925, 0.5
        %v4117 = vmul.f32 %v3927, 0.5
        %v4118 = vmul.f32 %v4038, 0.5
        %v4119 = vmul.f32 %v4040, 0.5
        %v4120 = vmul.f32 %v3929, 0.5
        %v4121 = vmul.f32 %v3931, 0.5
        %v4122 = vmul.f32 %v4042, 0.5
        %v4123 = vmul.f32 %v4044, 0.5
        %v4124 = vmul.f32 %v3935, 0.5
        %v4125 = vmul.f32 %v3937, 0.5
        %v4126 = vmul.f32 %v4048, 0.5
        %v4127 = vmul.f32 %v4050, 0.5
        %v4128 = vmul.f32 %v3939, 0.5
        %v4129 = vmul.f32 %v3941, 0.5
        %v4130 = vmul.f32 %v4052, 0.5
        %v4131 = vmul.f32 %v4054, 0.5
        %v4132 = vmul.f32 %v3945, 0.5
        %v4133 = vmul.f32 %v3947, 0.5
        %v4134 = vmul.f32 %v4058, 0.5
        %v4135 = vmul.f32 %v4060, 0.5
        %v4136 = vmul.f32 %v3949, 0.5
        %v4137 = vmul.f32 %v3951, 0.5
        %v4138 = vmul.f32 %v4062, 0.5
        %v4139 = vmul.f32 %v4064, 0.5
        %v4140 = vmul.f32 %v3955, 0.5
        %v4141 = vmul.f32 %v3957, 0.5
        %v4142 = vmul.f32 %v4068, 0.5
        %v4143 = vmul.f32 %v4070, 0.5
        %v4144 = vmul.f32 %v3959, 0.5
        %v4145 = vmul.f32 %v3961, 0.5
        %v4146 = vmul.f32 %v4072, 0.5
        %v4147 = vmul.f32 %v4074, 0.5
        %v4148 = vmul.f32 %v3965, 0.5
        %v4149 = vmul.f32 %v3967, 0.5
        %v4150 = vmul.f32 %v4078, 0.5
        %v4151 = vmul.f32 %v4080, 0.5
        %v4152 = vmul.f32 %v3969, 0.5
        %v4153 = vmul.f32 %v3971, 0.5
        %v4154 = vmul.f32 %v4082, 0.5
        %v4155 = vmul.f32 %v4084, 0.5
        %v4156 = vmul.f32 %v3975, 0.5
        %v4157 = vmul.f32 %v3977, 0.5
        %v4158 = vmul.f32 %v4088, 0.5
        %v4159 = vmul.f32 %v4090, 0.5
        %v4160 = vmul.f32 %v3979, 0.5
        %v4161 = vmul.f32 %v3981, 0.5
        %v4162 = vmul.f32 %v4092, 0.5
        %v4163 = vmul.f32 %v4094, 0.5
        %v4164 = vmul.f32 %v3985, 0.5
        %v4165 = vmul.f32 %v3987, 0.5
        %v4166 = vmul.f32 %v4098, 0.5
        %v4167 = vmul.f32 %v4100, 0.5
        %v4168 = vmul.f32 %v3989, 0.5
        %v4169 = vmul.f32 %v3991, 0.5
        %v4170 = vmul.f32 %v4102, 0.5
        %v4171 = vmul.f32 %v4104, 0.5
        %v4172 = vmul.f32 %v3995, 0.5
        %v4173 = vmul.f32 %v3997, 0.5
        %v4174 = vmul.f32 %v4108, 0.5
        %v4175 = vmul.f32 %v4110, 0.5
        %v4176 = vmul.f32 %v3999, 0.5
        %v4177 = vmul.f32 %v4001, 0.5
        %v4178 = vmul.f32 %v4112, 0.5
        %v4179 = vmul.f32 %v4114, 0.5
        %v4180 = vmul.f32 %v3925, 0.70710677
        %v4181 = vmul.f32 %v3927, 0.70710677
        %v4182 = vmul.f32 %v4038, 0.70710677
        %v4183 = vmul.f32 %v4040, 0.70710677
        %v4184 = vmul.f32 %v3929, 0.70710677
        %v4185 = vmul.f32 %v3931, 0.70710677
        %v4186 = vmul.f32 %v4042, 0.70710677
        %v4187 = vmul.f32 %v4044, 0.70710677
        %v4188 = vmul.f32 %v3935, 0.70710677
        %v4189 = vmul.f32 %v3937, 0.70710677
        %v4190 = vmul.f32 %v4048, 0.70710677
        %v4191 = vmul.f32 %v4050, 0.70710677
        %v4192 = vmul.f32 %v3939, 0.70710677
        %v4193 = vmul.f32 %v3941, 0.70710677
        %v4194 = vmul.f32 %v4052, 0.70710677
        %v4195 = vmul.f32 %v4054, 0.70710677
        %v4196 = vmul.f32 %v3945, 0.70710677
        %v4197 = vmul.f32 %v3947, 0.70710677
        %v4198 = vmul.f32 %v4058, 0.70710677
        %v4199 = vmul.f32 %v4060, 0.70710677
        %v4200 = vmul.f32 %v3949, 0.70710677
        %v4201 = vmul.f32 %v3951, 0.70710677
        %v4202 = vmul.f32 %v4062, 0.70710677
        %v4203 = vmul.f32 %v4064, 0.70710677
        %v4204 = vmul.f32 %v3955, 0.70710677
        %v4205 = vmul.f32 %v3957, 0.70710677
        %v4206 = vmul.f32 %v4068, 0.70710677
        %v4207 = vmul.f32 %v4070, 0.70710677
        %v4208 = vmul.f32 %v3959, 0.70710677
        %v4209 = vmul.f32 %v3961, 0.70710677
        %v4210 = vmul.f32 %v4072, 0.70710677
        %v4211 = vmul.f32 %v4074, 0.70710677
        %v4212 = vmul.f32 %v3965, 0.70710677
        %v4213 = vmul.f32 %v3967, 0.70710677
        %v4214 = vmul.f32 %v4078, 0.70710677
        %v4215 = vmul.f32 %v4080, 0.70710677
        %v4216 = vmul.f32 %v3969, 0.70710677
        %v4217 = vmul.f32 %v3971, 0.70710677
        %v4218 = vmul.f32 %v4082, 0.70710677
        %v4219 = vmul.f32 %v4084, 0.70710677
        %v4220 = vmul.f32 %v3975, 0.70710677
        %v4221 = vmul.f32 %v3977, 0.70710677
        %v4222 = vmul.f32 %v4088, 0.70710677
        %v4223 = vmul.f32 %v4090, 0.70710677
        %v4224 = vmul.f32 %v3979, 0.70710677
        %v4225 = vmul.f32 %v3981, 0.70710677
        %v4226 = vmul.f32 %v4092, 0.70710677
        %v4227 = vmul.f32 %v4094, 0.70710677
        %v4228 = vmul.f32 %v3985, 0.70710677
        %v4229 = vmul.f32 %v3987, 0.70710677
        %v4230 = vmul.f32 %v4098, 0.70710677
        %v4231 = vmul.f32 %v4100, 0.70710677
        %v4232 = vmul.f32 %v3989, 0.70710677
        %v4233 = vmul.f32 %v3991, 0.70710677
        %v4234 = vmul.f32 %v4102, 0.70710677
        %v4235 = vmul.f32 %v4104, 0.70710677
        %v4236 = vmul.f32 %v3995, 0.70710677
        %v4237 = vmul.f32 %v3997, 0.70710677
        %v4238 = vmul.f32 %v4108, 0.70710677
        %v4239 = vmul.f32 %v4110, 0.70710677
        %v4240 = vmul.f32 %v3999, 0.70710677
        %v4241 = vmul.f32 %v4001, 0.70710677
        %v4242 = vmul.f32 %v4112, 0.70710677
        %v4243 = vmul.f32 %v4114, 0.70710677
        %v4244 = verf.f32.pop %v4180
        %v4245 = verf.f32.pop %v4181
        %v4246 = verf.f32.pop %v4182
        %v4247 = verf.f32.pop %v4183
        %v4248 = verf.f32.pop %v4184
        %v4249 = verf.f32.pop %v4185
        %v4250 = verf.f32.pop %v4186
        %v4251 = verf.f32.pop %v4187
        %v4252 = verf.f32.pop %v4188
        %v4253 = verf.f32.pop %v4189
        %v4254 = verf.f32.pop %v4190
        %v4255 = verf.f32.pop %v4191
        %v4256 = verf.f32.pop %v4192
        %v4257 = verf.f32.pop %v4193
        %v4258 = verf.f32.pop %v4194
        %v4259 = verf.f32.pop %v4195
        %v4260 = verf.f32.pop %v4196
        %v4261 = verf.f32.pop %v4197
        %v4262 = verf.f32.pop %v4198
        %v4263 = verf.f32.pop %v4199
        %v4264 = verf.f32.pop %v4200
        %v4265 = verf.f32.pop %v4201
        %v4266 = verf.f32.pop %v4202
        %v4267 = verf.f32.pop %v4203
        %v4268 = verf.f32.pop %v4204
        %v4269 = verf.f32.pop %v4205
        %v4270 = verf.f32.pop %v4206
        %v4271 = verf.f32.pop %v4207
        %v4272 = verf.f32.pop %v4208
        %v4273 = verf.f32.pop %v4209
        %v4274 = verf.f32.pop %v4210
        %v4275 = verf.f32.pop %v4211
        %v4276 = verf.f32.pop %v4212
        %v4277 = verf.f32.pop %v4213
        %v4278 = verf.f32.pop %v4214
        %v4279 = verf.f32.pop %v4215
        %v4280 = verf.f32.pop %v4216
        %v4281 = verf.f32.pop %v4217
        %v4282 = verf.f32.pop %v4218
        %v4283 = verf.f32.pop %v4219
        %v4284 = verf.f32.pop %v4220
        %v4285 = verf.f32.pop %v4221
        %v4286 = verf.f32.pop %v4222
        %v4287 = verf.f32.pop %v4223
        %v4288 = verf.f32.pop %v4224
        %v4289 = verf.f32.pop %v4225
        %v4290 = verf.f32.pop %v4226
        %v4291 = verf.f32.pop %v4227
        %v4292 = verf.f32.pop %v4228
        %v4293 = verf.f32.pop %v4229
        %v4294 = verf.f32.pop %v4230
        %v4295 = verf.f32.pop %v4231
        %v4296 = verf.f32.pop %v4232
        %v4297 = verf.f32.pop %v4233
        %v4298 = verf.f32.pop %v4234
        %v4299 = verf.f32.pop %v4235
        %v4300 = verf.f32.pop %v4236
        %v4301 = verf.f32.pop %v4237
        %v4302 = verf.f32.pop %v4238
        %v4303 = verf.f32.pop %v4239
        %v4304 = verf.f32.pop %v4240
        %v4305 = verf.f32.pop %v4241
        %v4306 = verf.f32.pop %v4242
        %v4307 = verf.f32.pop %v4243
        %v4308 = vadd.f32 %v4244, 1.0
        %v4309 = vadd.f32 %v4245, 1.0
        %v4310 = vadd.f32 %v4246, 1.0
        %v4311 = vadd.f32 %v4247, 1.0
        %v4312 = vadd.f32 %v4248, 1.0
        %v4313 = vadd.f32 %v4249, 1.0
        %v4314 = vadd.f32 %v4250, 1.0
        %v4315 = vadd.f32 %v4251, 1.0
        %v4316 = vadd.f32 %v4252, 1.0
        %v4317 = vadd.f32 %v4253, 1.0
        %v4318 = vadd.f32 %v4254, 1.0
        %v4319 = vadd.f32 %v4255, 1.0
        %v4320 = vadd.f32 %v4256, 1.0
        %v4321 = vadd.f32 %v4257, 1.0
        %v4322 = vadd.f32 %v4258, 1.0
        %v4323 = vadd.f32 %v4259, 1.0
        %v4324 = vadd.f32 %v4260, 1.0
        %v4325 = vadd.f32 %v4261, 1.0
        %v4326 = vadd.f32 %v4262, 1.0
        %v4327 = vadd.f32 %v4263, 1.0
        %v4328 = vadd.f32 %v4264, 1.0
        %v4329 = vadd.f32 %v4265, 1.0
        %v4330 = vadd.f32 %v4266, 1.0
        %v4331 = vadd.f32 %v4267, 1.0
        %v4332 = vadd.f32 %v4268, 1.0
        %v4333 = vadd.f32 %v4269, 1.0
        %v4334 = vadd.f32 %v4270, 1.0
        %v4335 = vadd.f32 %v4271, 1.0
        %v4336 = vadd.f32 %v4272, 1.0
        %v4337 = vadd.f32 %v4273, 1.0
        %v4338 = vadd.f32 %v4274, 1.0
        %v4339 = vadd.f32 %v4275, 1.0
        %v4340 = vadd.f32 %v4276, 1.0
        %v4341 = vadd.f32 %v4277, 1.0
        %v4342 = vadd.f32 %v4278, 1.0
        %v4343 = vadd.f32 %v4279, 1.0
        %v4344 = vadd.f32 %v4280, 1.0
        %v4345 = vadd.f32 %v4281, 1.0
        %v4346 = vadd.f32 %v4282, 1.0
        %v4347 = vadd.f32 %v4283, 1.0
        %v4348 = vadd.f32 %v4284, 1.0
        %v4349 = vadd.f32 %v4285, 1.0
        %v4350 = vadd.f32 %v4286, 1.0
        %v4351 = vadd.f32 %v4287, 1.0
        %v4352 = vadd.f32 %v4288, 1.0
        %v4353 = vadd.f32 %v4289, 1.0
        %v4354 = vadd.f32 %v4290, 1.0
        %v4355 = vadd.f32 %v4291, 1.0
        %v4356 = vadd.f32 %v4292, 1.0
        %v4357 = vadd.f32 %v4293, 1.0
        %v4358 = vadd.f32 %v4294, 1.0
        %v4359 = vadd.f32 %v4295, 1.0
        %v4360 = vadd.f32 %v4296, 1.0
        %v4361 = vadd.f32 %v4297, 1.0
        %v4362 = vadd.f32 %v4298, 1.0
        %v4363 = vadd.f32 %v4299, 1.0
        %v4364 = vadd.f32 %v4300, 1.0
        %v4365 = vadd.f32 %v4301, 1.0
        %v4366 = vadd.f32 %v4302, 1.0
        %v4367 = vadd.f32 %v4303, 1.0
        %v4368 = vadd.f32 %v4304, 1.0
        %v4369 = vadd.f32 %v4305, 1.0
        %v4370 = vadd.f32 %v4306, 1.0
        %v4371 = vadd.f32 %v4307, 1.0
        %v4372 = vmul.f32 %v4116, %v4308
        %v4373 = vmul.f32 %v4117, %v4309
        %v4374 = vmul.f32 %v4118, %v4310
        %v4375 = vmul.f32 %v4119, %v4311
        %v4376 = vmul.f32 %v4120, %v4312
        %v4377 = vmul.f32 %v4121, %v4313
        %v4378 = vmul.f32 %v4122, %v4314
        %v4379 = vmul.f32 %v4123, %v4315
        %v4380 = vmul.f32 %v4124, %v4316
        %v4381 = vmul.f32 %v4125, %v4317
        %v4382 = vmul.f32 %v4126, %v4318
        %v4383 = vmul.f32 %v4127, %v4319
        %v4384 = vmul.f32 %v4128, %v4320
        %v4385 = vmul.f32 %v4129, %v4321
        %v4386 = vmul.f32 %v4130, %v4322
        %v4387 = vmul.f32 %v4131, %v4323
        %v4388 = vmul.f32 %v4132, %v4324
        %v4389 = vmul.f32 %v4133, %v4325
        %v4390 = vmul.f32 %v4134, %v4326
        %v4391 = vmul.f32 %v4135, %v4327
        %v4392 = vmul.f32 %v4136, %v4328
        %v4393 = vmul.f32 %v4137, %v4329
        %v4394 = vmul.f32 %v4138, %v4330
        %v4395 = vmul.f32 %v4139, %v4331
        %v4396 = vmul.f32 %v4140, %v4332
        %v4397 = vmul.f32 %v4141, %v4333
        %v4398 = vmul.f32 %v4142, %v4334
        %v4399 = vmul.f32 %v4143, %v4335
        %v4400 = vmul.f32 %v4144, %v4336
        %v4401 = vmul.f32 %v4145, %v4337
        %v4402 = vmul.f32 %v4146, %v4338
        %v4403 = vmul.f32 %v4147, %v4339
        %v4404 = vmul.f32 %v4148, %v4340
        %v4405 = vmul.f32 %v4149, %v4341
        %v4406 = vmul.f32 %v4150, %v4342
        %v4407 = vmul.f32 %v4151, %v4343
        %v4408 = vmul.f32 %v4152, %v4344
        %v4409 = vmul.f32 %v4153, %v4345
        %v4410 = vmul.f32 %v4154, %v4346
        %v4411 = vmul.f32 %v4155, %v4347
        %v4412 = vmul.f32 %v4156, %v4348
        %v4413 = vmul.f32 %v4157, %v4349
        %v4414 = vmul.f32 %v4158, %v4350
        %v4415 = vmul.f32 %v4159, %v4351
        %v4416 = vmul.f32 %v4160, %v4352
        %v4417 = vmul.f32 %v4161, %v4353
        %v4418 = vmul.f32 %v4162, %v4354
        %v4419 = vmul.f32 %v4163, %v4355
        %v4420 = vmul.f32 %v4164, %v4356
        %v4421 = vmul.f32 %v4165, %v4357
        %v4422 = vmul.f32 %v4166, %v4358
        %v4423 = vmul.f32 %v4167, %v4359
        %v4424 = vmul.f32 %v4168, %v4360
        %v4425 = vmul.f32 %v4169, %v4361
        %v4426 = vmul.f32 %v4170, %v4362
        %v4427 = vmul.f32 %v4171, %v4363
        %v4428 = vmul.f32 %v4172, %v4364
        %v4429 = vmul.f32 %v4173, %v4365
        %v4430 = vmul.f32 %v4174, %v4366
        %v4431 = vmul.f32 %v4175, %v4367
        %v4432 = vmul.f32 %v4176, %v4368
        %v4433 = vmul.f32 %v4177, %v4369
        %v4434 = vmul.f32 %v4178, %v4370
        %v4435 = vmul.f32 %v4179, %v4371
        %v4436 = vpack.c.bf16 %v4376, %v4372
        %v4437 = vpack.c.bf16 %v4377, %v4373
        %v4438 = vpack.c.bf16 %v4378, %v4374
        %v4439 = vpack.c.bf16 %v4379, %v4375
        %v4440 = vpack.c.bf16 %v4384, %v4380
        %v4441 = vpack.c.bf16 %v4385, %v4381
        %v4442 = vpack.c.bf16 %v4386, %v4382
        %v4443 = vpack.c.bf16 %v4387, %v4383
        %v4444 = vpack.c.bf16 %v4392, %v4388
        %v4445 = vpack.c.bf16 %v4393, %v4389
        %v4446 = vpack.c.bf16 %v4394, %v4390
        %v4447 = vpack.c.bf16 %v4395, %v4391
        %v4448 = vpack.c.bf16 %v4400, %v4396
        %v4449 = vpack.c.bf16 %v4401, %v4397
        %v4450 = vpack.c.bf16 %v4402, %v4398
        %v4451 = vpack.c.bf16 %v4403, %v4399
        %v4452 = vpack.c.bf16 %v4408, %v4404
        %v4453 = vpack.c.bf16 %v4409, %v4405
        %v4454 = vpack.c.bf16 %v4410, %v4406
        %v4455 = vpack.c.bf16 %v4411, %v4407
        %v4456 = vpack.c.bf16 %v4416, %v4412
        %v4457 = vpack.c.bf16 %v4417, %v4413
        %v4458 = vpack.c.bf16 %v4418, %v4414
        %v4459 = vpack.c.bf16 %v4419, %v4415
        %v4460 = vpack.c.bf16 %v4424, %v4420
        %v4461 = vpack.c.bf16 %v4425, %v4421
        %v4462 = vpack.c.bf16 %v4426, %v4422
        %v4463 = vpack.c.bf16 %v4427, %v4423
        %v4464 = vpack.c.bf16 %v4432, %v4428
        %v4465 = vpack.c.bf16 %v4433, %v4429
        %v4466 = vpack.c.bf16 %v4434, %v4430
        %v4467 = vpack.c.bf16 %v4435, %v4431
        %v4468 = vld [vmem:[#allocation14] sm:$0xf]
        %v4469 = vld [vmem:[#allocation14 + $0x4] sm:$0xf]
        %v4470 = vld [vmem:[#allocation14 + $0x8] sm:$0xf]
        %v4471 = vld [vmem:[#allocation14 + $0xc] sm:$0xf]
        %v4472 = vld [vmem:[#allocation14 + $0x10] sm:$0xf]
        %v4473 = vld [vmem:[#allocation14 + $0x14] sm:$0xf]
        %v4474 = vld [vmem:[#allocation14 + $0x18] sm:$0xf]
        %v4475 = vld [vmem:[#allocation14 + $0x1c] sm:$0xf]
        %v4476 = vld [vmem:[#allocation14 + $0x20] sm:$0xf]
        %v4477 = vld [vmem:[#allocation14 + $0x24] sm:$0xf]
        %v4478 = vld [vmem:[#allocation14 + $0x28] sm:$0xf]
        %v4479 = vld [vmem:[#allocation14 + $0x2c] sm:$0xf]
        %v4480 = vld [vmem:[#allocation14 + $0x30] sm:$0xf]
        %v4481 = vld [vmem:[#allocation14 + $0x34] sm:$0xf]
        %v4482 = vld [vmem:[#allocation14 + $0x38] sm:$0xf]
        %v4483 = vld [vmem:[#allocation14 + $0x3c] sm:$0xf]
        %v4484 = vld [vmem:[#allocation14 + $0x40] sm:$0xf]
        %v4485 = vld [vmem:[#allocation14 + $0x44] sm:$0xf]
        %v4486 = vld [vmem:[#allocation14 + $0x48] sm:$0xf]
        %v4487 = vld [vmem:[#allocation14 + $0x4c] sm:$0xf]
        %v4488 = vld [vmem:[#allocation14 + $0x50] sm:$0xf]
        %v4489 = vld [vmem:[#allocation14 + $0x54] sm:$0xf]
        %v4490 = vld [vmem:[#allocation14 + $0x58] sm:$0xf]
        %v4491 = vld [vmem:[#allocation14 + $0x5c] sm:$0xf]
        %v4492 = vld [vmem:[#allocation14 + $0x60] sm:$0xf]
        %v4493 = vld [vmem:[#allocation14 + $0x64] sm:$0xf]
        %v4494 = vld [vmem:[#allocation14 + $0x68] sm:$0xf]
        %v4495 = vld [vmem:[#allocation14 + $0x6c] sm:$0xf]
        %v4496 = vld [vmem:[#allocation14 + $0x70] sm:$0xf]
        %v4497 = vld [vmem:[#allocation14 + $0x74] sm:$0xf]
        %v4498 = vld [vmem:[#allocation14 + $0x78] sm:$0xf]
        %v4499 = vld [vmem:[#allocation14 + $0x7c] sm:$0xf]
        %v4500 = vld [vmem:[#allocation14 + $0x80] sm:$0xf]
        %v4501 = vld [vmem:[#allocation14 + $0x84] sm:$0xf]
        %v4502 = vld [vmem:[#allocation14 + $0x88] sm:$0xf]
        %v4503 = vld [vmem:[#allocation14 + $0x8c] sm:$0xf]
        %v4504 = vld [vmem:[#allocation14 + $0x90] sm:$0xf]
        %v4505 = vld [vmem:[#allocation14 + $0x94] sm:$0xf]
        %v4506 = vld [vmem:[#allocation14 + $0x98] sm:$0xf]
        %v4507 = vld [vmem:[#allocation14 + $0x9c] sm:$0xf]
        %v4508 = vld [vmem:[#allocation14 + $0xa0] sm:$0xf]
        %v4509 = vld [vmem:[#allocation14 + $0xa4] sm:$0xf]
        %v4510 = vld [vmem:[#allocation14 + $0xa8] sm:$0xf]
        %v4511 = vld [vmem:[#allocation14 + $0xac] sm:$0xf]
        %v4512 = vld [vmem:[#allocation14 + $0xb0] sm:$0xf]
        %v4513 = vld [vmem:[#allocation14 + $0xb4] sm:$0xf]
        %v4514 = vld [vmem:[#allocation14 + $0xb8] sm:$0xf]
        %v4515 = vld [vmem:[#allocation14 + $0xbc] sm:$0xf]
        %v4516 = vld [vmem:[#allocation14 + $0xc0] sm:$0xf]
        %v4517 = vld [vmem:[#allocation14 + $0xc4] sm:$0xf]
        %v4518 = vld [vmem:[#allocation14 + $0xc8] sm:$0xf]
        %v4519 = vld [vmem:[#allocation14 + $0xcc] sm:$0xf]
        %v4520 = vld [vmem:[#allocation14 + $0xd0] sm:$0xf]
        %v4521 = vld [vmem:[#allocation14 + $0xd4] sm:$0xf]
        %v4522 = vld [vmem:[#allocation14 + $0xd8] sm:$0xf]
        %v4523 = vld [vmem:[#allocation14 + $0xdc] sm:$0xf]
        %v4524 = vld [vmem:[#allocation14 + $0xe0] sm:$0xf]
        %v4525 = vld [vmem:[#allocation14 + $0xe4] sm:$0xf]
        %v4526 = vld [vmem:[#allocation14 + $0xe8] sm:$0xf]
        %v4527 = vld [vmem:[#allocation14 + $0xec] sm:$0xf]
        %v4528 = vld [vmem:[#allocation14 + $0xf0] sm:$0xf]
        %v4529 = vld [vmem:[#allocation14 + $0xf4] sm:$0xf]
        %v4530 = vld [vmem:[#allocation14 + $0xf8] sm:$0xf]
        %v4531 = vld [vmem:[#allocation14 + $0xfc] sm:$0xf]
        %v4532 = vld [vmem:[%s12] sm:$0x1]
        %v4534 = vlaneseq
        %v4535 = vshrl.u32 %v4534, 7
        %v4536 = vsub.s32 0, %v4535
        %v4537 = vrot.slane %v4532, %v4536
        %v4603 = vunpack.c.l.b16 %v4468
        %v4604 = vunpack.c.l.b16 %v4469
        %v4605 = vunpack.c.l.b16 %v4470
        %v4606 = vunpack.c.l.b16 %v4471
        %v4607 = vunpack.c.l.b16 %v4472
        %v4608 = vunpack.c.l.b16 %v4473
        %v4609 = vunpack.c.l.b16 %v4474
        %v4610 = vunpack.c.l.b16 %v4475
        %v4611 = vunpack.c.l.b16 %v4476
        %v4612 = vunpack.c.l.b16 %v4477
        %v4613 = vunpack.c.l.b16 %v4478
        %v4614 = vunpack.c.l.b16 %v4479
        %v4615 = vunpack.c.l.b16 %v4480
        %v4616 = vunpack.c.l.b16 %v4481
        %v4617 = vunpack.c.l.b16 %v4482
        %v4618 = vunpack.c.l.b16 %v4483
        %v4619 = vunpack.c.l.b16 %v4484
        %v4620 = vunpack.c.l.b16 %v4485
        %v4621 = vunpack.c.l.b16 %v4486
        %v4622 = vunpack.c.l.b16 %v4487
        %v4623 = vunpack.c.l.b16 %v4488
        %v4624 = vunpack.c.l.b16 %v4489
        %v4625 = vunpack.c.l.b16 %v4490
        %v4626 = vunpack.c.l.b16 %v4491
        %v4627 = vunpack.c.l.b16 %v4492
        %v4628 = vunpack.c.l.b16 %v4493
        %v4629 = vunpack.c.l.b16 %v4494
        %v4630 = vunpack.c.l.b16 %v4495
        %v4631 = vunpack.c.l.b16 %v4496
        %v4632 = vunpack.c.l.b16 %v4497
        %v4633 = vunpack.c.l.b16 %v4498
        %v4634 = vunpack.c.l.b16 %v4499
        %v4635 = vunpack.c.l.b16 %v4500
        %v4636 = vunpack.c.l.b16 %v4501
        %v4637 = vunpack.c.l.b16 %v4502
        %v4638 = vunpack.c.l.b16 %v4503
        %v4639 = vunpack.c.l.b16 %v4504
        %v4640 = vunpack.c.l.b16 %v4505
        %v4641 = vunpack.c.l.b16 %v4506
        %v4642 = vunpack.c.l.b16 %v4507
        %v4643 = vunpack.c.l.b16 %v4508
        %v4644 = vunpack.c.l.b16 %v4509
        %v4645 = vunpack.c.l.b16 %v4510
        %v4646 = vunpack.c.l.b16 %v4511
        %v4647 = vunpack.c.l.b16 %v4512
        %v4648 = vunpack.c.l.b16 %v4513
        %v4649 = vunpack.c.l.b16 %v4514
        %v4650 = vunpack.c.l.b16 %v4515
        %v4651 = vunpack.c.l.b16 %v4516
        %v4652 = vunpack.c.l.b16 %v4517
        %v4653 = vunpack.c.l.b16 %v4518
        %v4654 = vunpack.c.l.b16 %v4519
        %v4655 = vunpack.c.l.b16 %v4520
        %v4656 = vunpack.c.l.b16 %v4521
        %v4657 = vunpack.c.l.b16 %v4522
        %v4658 = vunpack.c.l.b16 %v4523
        %v4659 = vunpack.c.l.b16 %v4524
        %v4660 = vunpack.c.l.b16 %v4525
        %v4661 = vunpack.c.l.b16 %v4526
        %v4662 = vunpack.c.l.b16 %v4527
        %v4663 = vunpack.c.l.b16 %v4528
        %v4664 = vunpack.c.l.b16 %v4529
        %v4665 = vunpack.c.l.b16 %v4530
        %v4666 = vunpack.c.l.b16 %v4531
        %v4667 = vpack.c.b16 %v4604, %v4603
        %v4668 = vpack.c.b16 %v4606, %v4605
        %v4669 = vpack.c.b16 %v4608, %v4607
        %v4670 = vpack.c.b16 %v4610, %v4609
        %v4671 = vpack.c.b16 %v4612, %v4611
        %v4672 = vpack.c.b16 %v4614, %v4613
        %v4673 = vpack.c.b16 %v4616, %v4615
        %v4674 = vpack.c.b16 %v4618, %v4617
        %v4675 = vpack.c.b16 %v4620, %v4619
        %v4676 = vpack.c.b16 %v4622, %v4621
        %v4677 = vpack.c.b16 %v4624, %v4623
        %v4678 = vpack.c.b16 %v4626, %v4625
        %v4679 = vpack.c.b16 %v4628, %v4627
        %v4680 = vpack.c.b16 %v4630, %v4629
        %v4681 = vpack.c.b16 %v4632, %v4631
        %v4682 = vpack.c.b16 %v4634, %v4633
        %v4683 = vpack.c.b16 %v4636, %v4635
        %v4684 = vpack.c.b16 %v4638, %v4637
        %v4685 = vpack.c.b16 %v4640, %v4639
        %v4686 = vpack.c.b16 %v4642, %v4641
        %v4687 = vpack.c.b16 %v4644, %v4643
        %v4688 = vpack.c.b16 %v4646, %v4645
        %v4689 = vpack.c.b16 %v4648, %v4647
        %v4690 = vpack.c.b16 %v4650, %v4649
        %v4691 = vpack.c.b16 %v4652, %v4651
        %v4692 = vpack.c.b16 %v4654, %v4653
        %v4693 = vpack.c.b16 %v4656, %v4655
        %v4694 = vpack.c.b16 %v4658, %v4657
        %v4695 = vpack.c.b16 %v4660, %v4659
        %v4696 = vpack.c.b16 %v4662, %v4661
        %v4697 = vpack.c.b16 %v4664, %v4663
        %v4698 = vpack.c.b16 %v4666, %v4665
        %4731 = vmatprep.subr.bf16.mxu0 0
        %4732 = vmatpush1.bf16.msra.mxu0 %v4667
        %4733 = vmatprep.subr.bf16.mxu0 0
        %4734 = vmatpush1.bf16.msra.mxu0 %v4668
        %4735 = vmatprep.subr.bf16.mxu0 0
        %4736 = vmatpush1.bf16.msra.mxu0 %v4669
        %4737 = vmatprep.subr.bf16.mxu0 0
        %4738 = vmatpush1.bf16.msra.mxu0 %v4670
        %4739 = vmatprep.subr.bf16.mxu0 0
        %4740 = vmatpush1.bf16.msra.mxu0 %v4671
        %4741 = vmatprep.subr.bf16.mxu0 0
        %4742 = vmatpush1.bf16.msra.mxu0 %v4672
        %4743 = vmatprep.subr.bf16.mxu0 0
        %4744 = vmatpush1.bf16.msra.mxu0 %v4673
        %4745 = vmatprep.subr.bf16.mxu0 0
        %4746 = vmatpush1.bf16.msra.mxu0 %v4674
        %4747 = vmatprep.subr.bf16.mxu0 0
        %4748 = vmatpush1.bf16.msra.mxu0 %v4675
        %4749 = vmatprep.subr.bf16.mxu0 0
        %4750 = vmatpush1.bf16.msra.mxu0 %v4676
        %4751 = vmatprep.subr.bf16.mxu0 0
        %4752 = vmatpush1.bf16.msra.mxu0 %v4677
        %4753 = vmatprep.subr.bf16.mxu0 0
        %4754 = vmatpush1.bf16.msra.mxu0 %v4678
        %4755 = vmatprep.subr.bf16.mxu0 0
        %4756 = vmatpush1.bf16.msra.mxu0 %v4679
        %4757 = vmatprep.subr.bf16.mxu0 0
        %4758 = vmatpush1.bf16.msra.mxu0 %v4680
        %4759 = vmatprep.subr.bf16.mxu0 0
        %4760 = vmatpush1.bf16.msra.mxu0 %v4681
        %4761 = vmatprep.subr.bf16.mxu0 0
        %4762 = vmatpush1.bf16.msra.mxu0 %v4682
        %4763 = vmatprep.mubr.bf16.mxu0 %v4437
        %4764 = vmatmul.mubr.bf16.gmra.mrb[0].mxu0 %v4436
        %v4765 = vpop.f32.mrb[0].mxu0
        %v4766 = vadd.f32 %v4537, %v4765
        %v4767 = vpop.f32.mrb[0].mxu0
        %v4768 = vpop.f32.mrb[0].mxu0
        %v4769 = vadd.f32 %v4537, %v4768
        %v4770 = vpop.f32.mrb[0].mxu0
        %4771 = vmatprep.mubr.bf16.mxu0 %v4441
        %4772 = vmatmul.mubr.bf16.gmra.mrb[0].mxu0 %v4440
        %v4773 = vpop.f32.mrb[0].mxu0
        %v4774 = vadd.f32 %v4537, %v4773
        %v4775 = vpop.f32.mrb[0].mxu0
        %v4776 = vpop.f32.mrb[0].mxu0
        %v4777 = vadd.f32 %v4537, %v4776
        %v4778 = vpop.f32.mrb[0].mxu0
        %4779 = vmatprep.mubr.bf16.mxu0 %v4445
        %4780 = vmatmul.mubr.bf16.gmra.mrb[0].mxu0 %v4444
        %v4781 = vpop.f32.mrb[0].mxu0
        %v4782 = vadd.f32 %v4537, %v4781
        %v4783 = vpop.f32.mrb[0].mxu0
        %v4784 = vpop.f32.mrb[0].mxu0
        %v4785 = vadd.f32 %v4537, %v4784
        %v4786 = vpop.f32.mrb[0].mxu0
        %4787 = vmatprep.mubr.bf16.mxu0 %v4449
        %4788 = vmatmul.mubr.bf16.gmra.mrb[0].mxu0 %v4448
        %v4789 = vpop.f32.mrb[0].mxu0
        %v4790 = vadd.f32 %v4537, %v4789
        %v4791 = vpop.f32.mrb[0].mxu0
        %v4792 = vpop.f32.mrb[0].mxu0
        %v4793 = vadd.f32 %v4537, %v4792
        %v4794 = vpop.f32.mrb[0].mxu0
        %4795 = vmatprep.mubr.bf16.mxu0 %v4453
        %4796 = vmatmul.mubr.bf16.gmra.mrb[0].mxu0 %v4452
        %v4797 = vpop.f32.mrb[0].mxu0
        %v4798 = vadd.f32 %v4537, %v4797
        %v4799 = vpop.f32.mrb[0].mxu0
        %v4800 = vpop.f32.mrb[0].mxu0
        %v4801 = vadd.f32 %v4537, %v4800
        %v4802 = vpop.f32.mrb[0].mxu0
        %4803 = vmatprep.mubr.bf16.mxu0 %v4457
        %4804 = vmatmul.mubr.bf16.gmra.mrb[0].mxu0 %v4456
        %v4805 = vpop.f32.mrb[0].mxu0
        %v4806 = vadd.f32 %v4537, %v4805
        %v4807 = vpop.f32.mrb[0].mxu0
        %v4808 = vpop.f32.mrb[0].mxu0
        %v4809 = vadd.f32 %v4537, %v4808
        %v4810 = vpop.f32.mrb[0].mxu0
        %4811 = vmatprep.mubr.bf16.mxu0 %v4461
        %4812 = vmatmul.mubr.bf16.gmra.mrb[0].mxu0 %v4460
        %v4813 = vpop.f32.mrb[0].mxu0
        %v4814 = vadd.f32 %v4537, %v4813
        %v4815 = vpop.f32.mrb[0].mxu0
        %v4816 = vpop.f32.mrb[0].mxu0
        %v4817 = vadd.f32 %v4537, %v4816
        %v4818 = vpop.f32.mrb[0].mxu0
        %4819 = vmatprep.mubr.bf16.mxu0 %v4465
        %4820 = vmatmul.mubr.bf16.gmra.mrb[0].mxu0 %v4464
        %v4821 = vpop.f32.mrb[0].mxu0
        %v4822 = vadd.f32 %v4537, %v4821
        %v4823 = vpop.f32.mrb[0].mxu0
        %v4824 = vpop.f32.mrb[0].mxu0
        %v4825 = vadd.f32 %v4537, %v4824
        %v4826 = vpop.f32.mrb[0].mxu0
        %4827 = vdwg.mxu0
        %4828 = vmatprep.subr.bf16.mxu0 0
        %4829 = vmatpush1.bf16.msra.mxu0 %v4683
        %4830 = vmatprep.subr.bf16.mxu0 0
        %4831 = vmatpush1.bf16.msra.mxu0 %v4684
        %4832 = vmatprep.subr.bf16.mxu0 0
        %4833 = vmatpush1.bf16.msra.mxu0 %v4685
        %4834 = vmatprep.subr.bf16.mxu0 0
        %4835 = vmatpush1.bf16.msra.mxu0 %v4686
        %4836 = vmatprep.subr.bf16.mxu0 0
        %4837 = vmatpush1.bf16.msra.mxu0 %v4687
        %4838 = vmatprep.subr.bf16.mxu0 0
        %4839 = vmatpush1.bf16.msra.mxu0 %v4688
        %4840 = vmatprep.subr.bf16.mxu0 0
        %4841 = vmatpush1.bf16.msra.mxu0 %v4689
        %4842 = vmatprep.subr.bf16.mxu0 0
        %4843 = vmatpush1.bf16.msra.mxu0 %v4690
        %4844 = vmatprep.subr.bf16.mxu0 0
        %4845 = vmatpush1.bf16.msra.mxu0 %v4691
        %4846 = vmatprep.subr.bf16.mxu0 0
        %4847 = vmatpush1.bf16.msra.mxu0 %v4692
        %4848 = vmatprep.subr.bf16.mxu0 0
        %4849 = vmatpush1.bf16.msra.mxu0 %v4693
        %4850 = vmatprep.subr.bf16.mxu0 0
        %4851 = vmatpush1.bf16.msra.mxu0 %v4694
        %4852 = vmatprep.subr.bf16.mxu0 0
        %4853 = vmatpush1.bf16.msra.mxu0 %v4695
        %4854 = vmatprep.subr.bf16.mxu0 0
        %4855 = vmatpush1.bf16.msra.mxu0 %v4696
        %4856 = vmatprep.subr.bf16.mxu0 0
        %4857 = vmatpush1.bf16.msra.mxu0 %v4697
        %4858 = vmatprep.subr.bf16.mxu0 0
        %4859 = vmatpush1.bf16.msra.mxu0 %v4698
        %4860 = vmatprep.mubr.bf16.mxu0 %v4439
        %4861 = vmatmul.mubr.bf16.gmra.mrb[0].mxu0 %v4438
        %v4862 = vpop.f32.mrb[0].mxu0
        %v4863 = vadd.f32 %v4766, %v4862
        %v4864 = vpop.f32.mrb[0].mxu0
        %v4865 = vpop.f32.mrb[0].mxu0
        %v4866 = vadd.f32 %v4769, %v4865
        %v4867 = vpop.f32.mrb[0].mxu0
        %4868 = vmatprep.mubr.bf16.mxu0 %v4443
        %4869 = vmatmul.mubr.bf16.gmra.mrb[0].mxu0 %v4442
        %v4870 = vpop.f32.mrb[0].mxu0
        %v4871 = vadd.f32 %v4774, %v4870
        %v4872 = vpop.f32.mrb[0].mxu0
        %v4873 = vpop.f32.mrb[0].mxu0
        %v4874 = vadd.f32 %v4777, %v4873
        %v4875 = vpop.f32.mrb[0].mxu0
        %4876 = vmatprep.mubr.bf16.mxu0 %v4447
        %4877 = vmatmul.mubr.bf16.gmra.mrb[0].mxu0 %v4446
        %v4878 = vpop.f32.mrb[0].mxu0
        %v4879 = vadd.f32 %v4782, %v4878
        %v4880 = vpop.f32.mrb[0].mxu0
        %v4881 = vpop.f32.mrb[0].mxu0
        %v4882 = vadd.f32 %v4785, %v4881
        %v4883 = vpop.f32.mrb[0].mxu0
        %4884 = vmatprep.mubr.bf16.mxu0 %v4451
        %4885 = vmatmul.mubr.bf16.gmra.mrb[0].mxu0 %v4450
        %v4886 = vpop.f32.mrb[0].mxu0
        %v4887 = vadd.f32 %v4790, %v4886
        %v4888 = vpop.f32.mrb[0].mxu0
        %v4889 = vpop.f32.mrb[0].mxu0
        %v4890 = vadd.f32 %v4793, %v4889
        %v4891 = vpop.f32.mrb[0].mxu0
        %4892 = vmatprep.mubr.bf16.mxu0 %v4455
        %4893 = vmatmul.mubr.bf16.gmra.mrb[0].mxu0 %v4454
        %v4894 = vpop.f32.mrb[0].mxu0
        %v4895 = vadd.f32 %v4798, %v4894
        %v4896 = vpop.f32.mrb[0].mxu0
        %v4897 = vpop.f32.mrb[0].mxu0
        %v4898 = vadd.f32 %v4801, %v4897
        %v4899 = vpop.f32.mrb[0].mxu0
        %4900 = vmatprep.mubr.bf16.mxu0 %v4459
        %4901 = vmatmul.mubr.bf16.gmra.mrb[0].mxu0 %v4458
        %v4902 = vpop.f32.mrb[0].mxu0
        %v4903 = vadd.f32 %v4806, %v4902
        %v4904 = vpop.f32.mrb[0].mxu0
        %v4905 = vpop.f32.mrb[0].mxu0
        %v4906 = vadd.f32 %v4809, %v4905
        %v4907 = vpop.f32.mrb[0].mxu0
        %4908 = vmatprep.mubr.bf16.mxu0 %v4463
        %4909 = vmatmul.mubr.bf16.gmra.mrb[0].mxu0 %v4462
        %v4910 = vpop.f32.mrb[0].mxu0
        %v4911 = vadd.f32 %v4814, %v4910
        %v4912 = vpop.f32.mrb[0].mxu0
        %v4913 = vpop.f32.mrb[0].mxu0
        %v4914 = vadd.f32 %v4817, %v4913
        %v4915 = vpop.f32.mrb[0].mxu0
        %4916 = vmatprep.mubr.bf16.mxu0 %v4467
        %4917 = vmatmul.mubr.bf16.gmra.mrb[0].mxu0 %v4466
        %v4918 = vpop.f32.mrb[0].mxu0
        %v4919 = vadd.f32 %v4822, %v4918
        %v4920 = vpop.f32.mrb[0].mxu0
        %v4921 = vpop.f32.mrb[0].mxu0
        %v4922 = vadd.f32 %v4825, %v4921
        %v4923 = vpop.f32.mrb[0].mxu0
        %4924 = vdwg.mxu0
        %v4925 = vadd.f32 %v3398, %v4863
        %v4926 = vadd.f32 %v3399, %v4866
        %v4927 = vadd.f32 %v3400, %v4871
        %v4928 = vadd.f32 %v3401, %v4874
        %v4929 = vadd.f32 %v3402, %v4879
        %v4930 = vadd.f32 %v3403, %v4882
        %v4931 = vadd.f32 %v3404, %v4887
        %v4932 = vadd.f32 %v3405, %v4890
        %v4933 = vadd.f32 %v3406, %v4895
        %v4934 = vadd.f32 %v3407, %v4898
        %v4935 = vadd.f32 %v3408, %v4903
        %v4936 = vadd.f32 %v3409, %v4906
        %v4937 = vadd.f32 %v3410, %v4911
        %v4938 = vadd.f32 %v3411, %v4914
        %v4939 = vadd.f32 %v3412, %v4919
        %v4940 = vadd.f32 %v3413, %v4922
        %4941 = vst [vmem:[%s541] sm:$0xff] %v4925
        %4942 = vst [vmem:[%s541 + $0x8] sm:$0xff] %v4926
        %4943 = vst [vmem:[%s541 + $0x10] sm:$0xff] %v4927
        %4944 = vst [vmem:[%s541 + $0x18] sm:$0xff] %v4928
        %4945 = vst [vmem:[%s541 + $0x20] sm:$0xff] %v4929
        %4946 = vst [vmem:[%s541 + $0x28] sm:$0xff] %v4930
        %4947 = vst [vmem:[%s541 + $0x30] sm:$0xff] %v4931
        %4948 = vst [vmem:[%s541 + $0x38] sm:$0xff] %v4932
        %4949 = vst [vmem:[%s541 + $0x40] sm:$0xff] %v4933
        %4950 = vst [vmem:[%s541 + $0x48] sm:$0xff] %v4934
        %4951 = vst [vmem:[%s541 + $0x50] sm:$0xff] %v4935
        %4952 = vst [vmem:[%s541 + $0x58] sm:$0xff] %v4936
        %4953 = vst [vmem:[%s541 + $0x60] sm:$0xff] %v4937
        %4954 = vst [vmem:[%s541 + $0x68] sm:$0xff] %v4938
        %4955 = vst [vmem:[%s541 + $0x70] sm:$0xff] %v4939
        %4956 = vst [vmem:[%s541 + $0x78] sm:$0xff] %v4940
        %s4957 = sand.u32 %s319, 1
        %s4958 = scalar_lea.sflag [#allocation5], %s4957
        %s4959 = sand.u32 %s319, 1
        %s4960 = smul.addr %s4959, 128
        %s4961 = scalar_lea.vmem [#allocation15], %s4960
        // Predicated region
        $region101: #{tpu_custom_call.1} parent=71 // pred_check
          %p4962 = pneg %p329
        $region102: #{tpu_custom_call.1} parent=71 // pred_check_branch
          %4964 = sbr.rel (%p4962) target = $region104
        $region103: #{tpu_custom_call.1} parent=71 // pred_region
          %s4965 = smul.u32 16, %s33
          %s4967 = ssub.s32 2048, 2048
          %4968 = vsyncadd %s4958, %s4967
          %s4969 = smul.addr %s4965, 128
          %s4970 = scalar_lea.hbm %s13, %s4969
          %s4971 = sshll.u32 %s4961, 4
          %s4972 = int_to_ptr.vmem [resolvable:$true] %s4971
          %4977 = dma.vmem_to_hbm [thread:$0]  %s4972, 2048, %s4970, %s4958, 128, 128, 8
        $region104: #{tpu_custom_call.1} parent=71 // pred_fallthru
          _
      $region72: #{tpu_custom_call.1} parent=5 // pred_fallthru
        _
      %p4978 = scmp.le.s32.totalorder 2, %s28
      // Predicated region
      $region105: #{tpu_custom_call.1} parent=5 // pred_check
        %p4979 = pneg %p4978
      $region106: #{tpu_custom_call.1} parent=5 // pred_check_branch
        %4981 = sbr.rel (%p4979) target = $region108
      $region107: #{tpu_custom_call.1} parent=5 // pred_region
        %s4982 = ssub.s32 %s28, 2
        // Predicated region
        $region109: #{tpu_custom_call.1} parent=107 // pred_check
          %p4983 = pneg %p335
        $region110: #{tpu_custom_call.1} parent=107 // pred_check_branch
          %4985 = sbr.rel (%p4983) target = $region112
        $region111: #{tpu_custom_call.1} parent=107 // pred_region
          %s4986 = sand.u32 %s320, 1
          %s4987 = scalar_lea.sflag [#allocation5], %s4986
          %s4988 = sand.u32 %s320, 1
          %s4989 = smul.addr %s4988, 128
          %s4990 = scalar_lea.vmem [#allocation15], %s4989
          %4991 = dma.done %s4987, 2048
        $region112: #{tpu_custom_call.1} parent=107 // pred_fallthru
          _
      $region108: #{tpu_custom_call.1} parent=5 // pred_fallthru
        _
    $region6: #{tpu_custom_call.1} parent=1 // loop_footer
      %s32 = sadd.s32 1, %s28
    $region7: #{tpu_custom_call.1} parent=1 // loop_footer_branch
      %27 = sbr.rel target = $region3
    $region8: #{tpu_custom_call.1} parent=1 // loop_exit
      _
    %4992 = vsyncpa [#allocation4], 1
    %s4993 = scalar_lea.sflag [#allocation4], 1
    %4994 = vsyncpa %s4993, 1
    %4995 = vsyncpa [#allocation7], 1
    %4996 = vsyncpa [#allocation10], 1
    %4997 = vsyncpa [#allocation13], 1
    %4998 = vsyncpa [#allocation5], 1
    %s4999 = scalar_lea.sflag [#allocation5], 1
    %5000 = vsyncpa %s4999, 1

</llo_original>
